<compile_context>
chip_gen: v5e
topology: v5e:2x2
jax: 0.10.0
libtpu: 0.0.40
codegen_flags: <defaults>
</compile_context>

<pallas_src>
import functools

import jax
import jax.numpy as jnp
from jax.experimental import pallas as pl
from jax.experimental.pallas import tpu as pltpu


# ----------------------------- helpers --------------------------------------
def _round_up(x, m):
    return ((x + m - 1) // m) * m


def _cdiv(a, b):
    return (a + b - 1) // b


def _num_batch_chunks():
    # v7x has 2 TensorCores per chip: split the independent batch recurrences
    # across them.  Single-TC chips (v5e/v6e) keep one big chunk (extra chunks
    # only add ~600-cycle grid-step overhead there).
    try:
        kind = jax.devices()[0].device_kind.lower()
    except Exception:
        return 1
    return 2 if "v7" in kind else 1


def _pad_gate_weight(w, in_pad, Hp, dtype):
    # (in_dim, 4*H) -> gate-blocked, padded (in_pad, 4*Hp):
    # [W_i | 0 | W_f | 0 | W_g | 0 | W_o | 0], each block Hp lanes wide, so the
    # i/f/g/o slices inside the kernel are lane-aligned.
    in_dim, four_h = w.shape
    H = four_h // 4
    w = w.reshape(in_dim, 4, H)
    w = jnp.pad(w, ((0, in_pad - in_dim), (0, 0), (0, Hp - H)))
    return w.reshape(in_pad, 4 * Hp).astype(dtype)


def _pad_gate_bias(b, Hp):
    H = b.shape[1] // 4
    b = b.reshape(1, 4, H)
    b = jnp.pad(b, ((0, 0), (0, 0), (0, Hp - H)))
    return b.reshape(1, 4 * Hp)


# ----------------------- fused LSTM + decoder kernel ------------------------
def _lstm_decoder_kernel(emb_ref, h0_ref, c0_ref, w_ih_ref, w_hh_ref, b_ref,
                         w_dec_ref, b_dec_ref,
                         logits_ref, hT_ref, cT_ref,
                         h_scr, c_scr, hall_scr,
                         *, hidden_size, time_chunk, seq_len, mask_tail):
    # Grid = (batch_chunk [parallel], time_chunk [serial], vocab_tile [serial]).
    # The h/c recurrence lives in VMEM scratch and REQUIRES the time axis to be
    # iterated in order with the vocab axis innermost; do not reorder the grid.
    t = pl.program_id(1)
    v = pl.program_id(2)
    Hp = hidden_size
    Tc = time_chunk
    _, Bc, Ep = emb_ref.shape

    @pl.when(jnp.logical_and(t == 0, v == 0))
    def _init():
        h_scr[...] = h0_ref[0]
        c_scr[...] = c0_ref[0]

    @pl.when(v == 0)
    def _recurrence():
        w_ih = w_ih_ref[...]                      # (Ep, 4*Hp)  gate-blocked
        w_hh = w_hh_ref[...]                      # (Hp, 4*Hp)
        bias = b_ref[...]                         # (1, 4*Hp)   f32
        wdtype = w_hh.dtype

        # Hoisted input projection: one (Tc*Bc, Ep) x (Ep, 4Hp) MXU matmul and
        # a single bias broadcast, instead of Tc skinny matmuls in the loop.
        x_all = emb_ref[...].reshape(Tc * Bc, Ep)
        gates_x = (jnp.dot(x_all, w_ih, preferred_element_type=jnp.float32)
                   + bias)                        # (Tc*Bc, 4*Hp) f32

        h = h_scr[...]                            # (Bc, Hp) f32 state
        c = c_scr[...]
        h_w = h.astype(wdtype)                    # cast once, reused below

        base = t * Tc
        # Short static unroll (Tc <= 8) keeps live ranges bounded; only the
        # recurrent matmul + gate elementwise math sit on the serial path.
        for i in range(Tc):
            gates = (gates_x[i * Bc:(i + 1) * Bc, :]
                     + jnp.dot(h_w, w_hh, preferred_element_type=jnp.float32))
            # sigmoid(x) == 0.5*(tanh(x/2)+1): one EUP push, no reciprocal.
            i_g = 0.5 * (jnp.tanh(0.5 * gates[:, 0 * Hp:1 * Hp]) + 1.0)
            f_g = 0.5 * (jnp.tanh(0.5 * gates[:, 1 * Hp:2 * Hp]) + 1.0)
            g_g = jnp.tanh(gates[:, 2 * Hp:3 * Hp])
            o_g = 0.5 * (jnp.tanh(0.5 * gates[:, 3 * Hp:4 * Hp]) + 1.0)
            c_new = f_g * c + i_g * g_g
            h_new = o_g * jnp.tanh(c_new)
            if mask_tail:                         # static: only if T was padded
                valid = (base + i) < seq_len
                c_new = jnp.where(valid, c_new, c)
                h_new = jnp.where(valid, h_new, h)
            h, c = h_new, c_new
            h_w = h.astype(wdtype)
            hall_scr[i] = h_w                     # decoder input, compute dtype

        h_scr[...] = h
        c_scr[...] = c

    @pl.when(jnp.logical_and(v == 0, t == pl.num_programs(1) - 1))
    def _finalize():
        hT_ref[0] = h_scr[...]
        cT_ref[0] = c_scr[...]

    # ---- fused decoder, hoisted out of the per-step loop: one MXU matmul with
    # M = Tc*Bc rows per (time chunk, vocab tile); lane-dense (Tc,Bc,Vt) store.
    Vt = w_dec_ref.shape[1]
    h_all = hall_scr[...].reshape(Tc * Bc, Hp)
    logits = (jnp.dot(h_all, w_dec_ref[...], preferred_element_type=jnp.float32)
              + b_dec_ref[...])                   # (Tc*Bc, Vt) f32
    logits_ref[...] = logits.reshape(Tc, Bc, Vt).astype(logits_ref.dtype)


def _vmem_limit_bytes(Tc, Bc, Ep, Hp, Vt, NV, compute_dtype, logits_dtype,
                      single_buffer_weights):
    wb = jnp.dtype(compute_dtype).itemsize
    ob = jnp.dtype(logits_dtype).itemsize
    wbuf = 1 if single_buffer_weights else 2
    dbuf = wbuf if NV == 1 else 2
    total = (
        wbuf * (Ep + Hp) * 4 * Hp * wb        # W_ih^T + W_hh^T (gate-blocked)
        + wbuf * 4 * Hp * 4                   # LSTM bias (f32)
        + dbuf * (Hp * Vt * wb + Vt * 4)      # W_dec tile + b_dec tile
        + 2 * Tc * Bc * Ep * wb               # emb block (double-buffered)
        + 2 * 2 * Bc * Hp * 4                 # h0 / c0 blocks
        + 2 * Tc * Bc * Vt * ob               # logits block (double-buffered)
        + 2 * 2 * Bc * Hp * 4                 # h_T / c_T blocks
        + 2 * Bc * Hp * 4                     # h / c state scratch (f32)
        + Tc * Bc * Hp * wb                   # h_all scratch
        + Tc * Bc * 4 * Hp * 4                # gates_x live temporary (f32)
    )
    # 25% + 2 MiB headroom for compiler temporaries; floor above the default
    # scoped limit (16 MiB v5e / 32 MiB v6e,v7x), cap below physical VMEM
    # (v7x: 64 MiB/TC — the vocab tiling keeps totals small there).
    return int(min(max(total * 1.25 + (2 << 20), 32 << 20), 96 << 20))


def lstm_decoder_pallas(emb, h0, c0, w_ih_t, w_hh_t, b_lstm, w_dec_t, b_dec,
                        *, time_chunk, batch_chunk, vocab_tile, seq_len,
                        compute_dtype):
    Tp, Bp, Ep = emb.shape
    Hp = h0.shape[-1]
    Vp = w_dec_t.shape[1]
    Tc, Bc, Vt = time_chunk, batch_chunk, vocab_tile
    NT = Tp // Tc
    NB = Bp // Bc
    NV = Vp // Vt
    mask_tail = (NT * Tc) != seq_len
    logits_dtype = compute_dtype     # bf16 path -> bf16 logits (half the writeback)

    kernel = functools.partial(
        _lstm_decoder_kernel, hidden_size=Hp, time_chunk=Tc,
        seq_len=seq_len, mask_tail=mask_tail)

    out_shapes = (
        jax.ShapeDtypeStruct((Tp, Bp, Vp), logits_dtype),   # logits
        jax.ShapeDtypeStruct((1, Bp, Hp), jnp.float32),     # h_T
        jax.ShapeDtypeStruct((1, Bp, Hp), jnp.float32),     # c_T
    )

    def build(single_buffer_weights):
        # Grid-invariant weights are fetched once; single-buffering halves their
        # VMEM footprint.  The W_dec vocab tile keeps 2 buffers when it actually
        # cycles (NV > 1) so its DMA hides behind the decoder matmul.
        w_mode = pl.Buffered(1) if single_buffer_weights else None
        d_mode = pl.Buffered(1) if (single_buffer_weights and NV == 1) else None
        in_specs = [
            pl.BlockSpec((Tc, Bc, Ep), lambda b, t, v: (t, b, 0)),        # emb
            pl.BlockSpec((1, Bc, Hp), lambda b, t, v: (0, b, 0)),         # h0
            pl.BlockSpec((1, Bc, Hp), lambda b, t, v: (0, b, 0)),         # c0
            pl.BlockSpec((Ep, 4 * Hp), lambda b, t, v: (0, 0),
                         pipeline_mode=w_mode),                           # W_ih^T
            pl.BlockSpec((Hp, 4 * Hp), lambda b, t, v: (0, 0),
                         pipeline_mode=w_mode),                           # W_hh^T
            pl.BlockSpec((1, 4 * Hp), lambda b, t, v: (0, 0),
                         pipeline_mode=w_mode),                           # b_ih+b_hh
            pl.BlockSpec((Hp, Vt), lambda b, t, v: (0, v),
                         pipeline_mode=d_mode),                           # W_dec^T tile
            pl.BlockSpec((1, Vt), lambda b, t, v: (0, v),
                         pipeline_mode=d_mode),                           # b_dec tile
        ]
        out_specs = [
            pl.BlockSpec((Tc, Bc, Vt), lambda b, t, v: (t, b, v)),        # logits
            pl.BlockSpec((1, Bc, Hp), lambda b, t, v: (0, b, 0)),         # h_T
            pl.BlockSpec((1, Bc, Hp), lambda b, t, v: (0, b, 0)),         # c_T
        ]
        grid_spec = pltpu.PrefetchScalarGridSpec(
            num_scalar_prefetch=0,
            grid=(NB, NT, NV),          # (parallel batch, serial time, serial vocab)
            in_specs=in_specs,
            out_specs=out_specs,
            scratch_shapes=[
                pltpu.VMEM((Bc, Hp), jnp.float32),        # h state (f32)
                pltpu.VMEM((Bc, Hp), jnp.float32),        # c state (f32)
                pltpu.VMEM((Tc, Bc, Hp), compute_dtype),  # h_t chunk (decoder input)
            ],
        )
        vmem_limit = _vmem_limit_bytes(Tc, Bc, Ep, Hp, Vt, NV, compute_dtype,
                                       logits_dtype, single_buffer_weights)
        return pl.pallas_call(
            kernel,
            out_shape=out_shapes,
            grid_spec=grid_spec,
            compiler_params=pltpu.CompilerParams(
                dimension_semantics=("parallel", "arbitrary", "arbitrary"),
                vmem_limit_bytes=vmem_limit),
        )

    args = (emb, h0, c0, w_ih_t, w_hh_t, b_lstm, w_dec_t, b_dec)
    try:
        out = build(single_buffer_weights=True)(*args)
        jax.block_until_ready(out)
        return out
    except Exception:
        # Fallback if this JAX build rejects pipeline_mode=pl.Buffered(1).
        return build(single_buffer_weights=False)(*args)


# ------------------------------ Full model -----------------------------------
def init_params(key, vocab_size, embed_size, hidden_size):
    ks = jax.random.split(key, 7)
    s = 0.1
    return {
        "embed": jax.random.normal(ks[0], (vocab_size, embed_size), jnp.float32) * s,
        # stored pre-transposed for the kernel (PyTorch weight_ih_l0^T etc.)
        "w_ih_t": jax.random.normal(ks[1], (embed_size, 4 * hidden_size), jnp.float32) * s,
        "w_hh_t": jax.random.normal(ks[2], (hidden_size, 4 * hidden_size), jnp.float32) * s,
        "b_lstm": (jax.random.normal(ks[3], (1, 4 * hidden_size), jnp.float32) * s
                   + jax.random.normal(ks[4], (1, 4 * hidden_size), jnp.float32) * s),
        "w_dec_t": jax.random.normal(ks[5], (hidden_size, vocab_size), jnp.float32) * s,
        "b_dec": jax.random.normal(ks[6], (1, vocab_size), jnp.float32) * s,
    }


def rnn_model_forward(params, text, hidden, *, compute_dtype=jnp.float32,
                      time_chunk=8, vocab_tile=2048, num_batch_chunks=None):
    h0, c0 = hidden                              # each (1, B, H)
    T, B = text.shape
    V, E = params["embed"].shape
    H = h0.shape[-1]

    # ---- pad sizes to TPU tiles (sublane 8 f32 / 16 bf16, lane 128) ----
    sub = 8 if compute_dtype == jnp.float32 else 16
    if num_batch_chunks is None:
        num_batch_chunks = _num_batch_chunks()
    Bc = min(max(_round_up(_cdiv(B, num_batch_chunks), sub), sub), 512)
    NB = _cdiv(B, Bc)
    Bp = NB * Bc
    Ep = _round_up(E, 128)
    Hp = _round_up(H, 128)
    Vt = min(_round_up(V, 128), _round_up(vocab_tile, 128))   # vocab tile (lanes)
    Vp = _round_up(V, Vt)
    Tc = max(1, min(time_chunk, T))              # capped unroll of the recurrence
    Tp = _round_up(T, Tc)                        # pad T; tail steps are masked

    # ---- pad / re-layout parameters (zero-filled; in production do once) ----
    embed_p = jnp.pad(params["embed"], ((0, 0), (0, Ep - E)))
    w_ih_p = _pad_gate_weight(params["w_ih_t"], Ep, Hp, compute_dtype)
    w_hh_p = _pad_gate_weight(params["w_hh_t"], Hp, Hp, compute_dtype)
    b_lstm_p = _pad_gate_bias(params["b_lstm"], Hp)
    w_dec_p = jnp.pad(params["w_dec_t"],
                      ((0, Hp - H), (0, Vp - V))).astype(compute_dtype)
    b_dec_p = jnp.pad(params["b_dec"], ((0, 0), (0, Vp - V)))

    # ---- embedding lookup (gather) stays in plain JAX ----
    # TODO(synk): the nn.Embedding gather itself is done outside the kernel.
    emb = jnp.take(embed_p, text, axis=0).astype(compute_dtype)   # (T, B, Ep)
    emb = jnp.pad(emb, ((0, Tp - T), (0, Bp - B), (0, 0)))        # (Tp, Bp, Ep)

    h0_p = jnp.pad(h0, ((0, 0), (0, Bp - B), (0, Hp - H)))
    c0_p = jnp.pad(c0, ((0, 0), (0, Bp - B), (0, Hp - H)))

    logits_p, hT_p, cT_p = lstm_decoder_pallas(
        emb, h0_p, c0_p, w_ih_p, w_hh_p, b_lstm_p, w_dec_p, b_dec_p,
        time_chunk=Tc, batch_chunk=Bc, vocab_tile=Vt, seq_len=T,
        compute_dtype=compute_dtype)

    out_vocab = logits_p[:T, :B, :V].astype(jnp.float32)
    hT = hT_p[:, :B, :H]
    cT = cT_p[:, :B, :H]
    return out_vocab, (hT, cT)


# ---------------------------- JAX reference ----------------------------------
def rnn_model_reference(params, text, hidden):
    h0, c0 = hidden
    emb = jnp.take(params["embed"], text, axis=0)
    H = h0.shape[-1]

    def step(carry, x_t):
        h, c = carry
        gates = x_t @ params["w_ih_t"] + h @ params["w_hh_t"] + params["b_lstm"]
        i = jax.nn.sigmoid(gates[:, 0 * H:1 * H])
        f = jax.nn.sigmoid(gates[:, 1 * H:2 * H])
        g = jnp.tanh(gates[:, 2 * H:3 * H])
        o = jax.nn.sigmoid(gates[:, 3 * H:4 * H])
        c_new = f * c + i * g
        h_new = o * jnp.tanh(c_new)
        return (h_new, c_new), h_new

    (hT, cT), out = jax.lax.scan(step, (h0[0], c0[0]), emb)
    T, B, _ = out.shape
    dec = out.reshape(T * B, H) @ params["w_dec_t"] + params["b_dec"]
    return dec.reshape(T, B, -1), (hT[None], cT[None])


if __name__ == "__main__":
    vocab_size, embed_size, hidden_size = 20, 16, 32
    seq_len, batch = 8, 2

    key = jax.random.PRNGKey(0)
    pkey, tkey = jax.random.split(key)
    params = init_params(pkey, vocab_size, embed_size, hidden_size)

    text = jax.random.randint(tkey, (seq_len, batch), 0, vocab_size, jnp.int32)
    hidden = (jnp.zeros((1, batch, hidden_size), jnp.float32),
              jnp.zeros((1, batch, hidden_size), jnp.float32))

    # f32 path (checked tightly against the pure-JAX reference)
    out_vocab, (hT, cT) = rnn_model_forward(params, text, hidden)
    jax.block_until_ready(out_vocab)
    jax.block_until_ready(hT)
    jax.block_until_ready(cT)

    ref_out, (ref_h, ref_c) = rnn_model_reference(params, text, hidden)
    assert out_vocab.shape == (seq_len, batch, vocab_size)
    assert hT.shape == (1, batch, hidden_size) and cT.shape == (1, batch, hidden_size)
    assert jnp.allclose(out_vocab, ref_out, atol=1e-4)
    assert jnp.allclose(hT, ref_h, atol=1e-4)
    assert jnp.allclose(cT, ref_c, atol=1e-4)

    # padded-T path (T not a multiple of the time chunk -> tail masking)
    out_v2, (h2, c2) = rnn_model_forward(params, text[:5], hidden, time_chunk=4)
    ref_out2, (ref_h2, ref_c2) = rnn_model_reference(params, text[:5], hidden)
    jax.block_until_ready(out_v2)
    assert out_v2.shape == (5, batch, vocab_size)
    assert jnp.allclose(out_v2, ref_out2, atol=1e-4)
    assert jnp.allclose(h2, ref_h2, atol=1e-4)
    assert jnp.allclose(c2, ref_c2, atol=1e-4)

    # bf16 weight/activation path (MXU + logits in bf16, f32 state) — smoke check
    out_bf16, (h_bf16, c_bf16) = rnn_model_forward(
        params, text, hidden, compute_dtype=jnp.bfloat16)
    jax.block_until_ready(out_bf16)
    assert out_bf16.shape == (seq_len, batch, vocab_size)
    assert jnp.allclose(out_bf16, ref_out, atol=5e-2)
    assert jnp.allclose(h_bf16, ref_h, atol=5e-2)

    print("KERNEL_OK")
</pallas_src>

<mosaic_0001>
module attributes {stable_mosaic.version = 11 : i64} {
  func.func @_lstm_decoder_kernel(%arg0: i32, %arg1: i32, %arg2: i32, %arg3: memref<8x8x128xf32, #tpu.memory_space<vmem>>, %arg4: memref<1x8x128xf32, #tpu.memory_space<vmem>>, %arg5: memref<1x8x128xf32, #tpu.memory_space<vmem>>, %arg6: memref<128x512xf32, #tpu.memory_space<vmem>>, %arg7: memref<128x512xf32, #tpu.memory_space<vmem>>, %arg8: memref<1x512xf32, #tpu.memory_space<vmem>>, %arg9: memref<128x128xf32, #tpu.memory_space<vmem>>, %arg10: memref<1x128xf32, #tpu.memory_space<vmem>>, %arg11: memref<8x8x128xf32, #tpu.memory_space<vmem>>, %arg12: memref<1x8x128xf32, #tpu.memory_space<vmem>>, %arg13: memref<1x8x128xf32, #tpu.memory_space<vmem>>, %arg14: memref<8x128xf32, #tpu.memory_space<vmem>>, %arg15: memref<8x128xf32, #tpu.memory_space<vmem>>, %arg16: memref<8x8x128xf32, #tpu.memory_space<vmem>>) attributes {dimension_semantics = [#tpu.dimension_semantics<parallel>, #tpu.dimension_semantics<arbitrary>, #tpu.dimension_semantics<arbitrary>], iteration_bounds = array<i64: 1, 1, 1>, scalar_prefetch = 0 : i64, scratch_operands = 3 : i64, tpu.core_type = #tpu.core_type<tc>, window_params = [{transform_indices = @transform_0, window_bounds = array<i64: 8, 8, 128>}, {transform_indices = @transform_1, window_bounds = array<i64: 1, 8, 128>}, {transform_indices = @transform_2, window_bounds = array<i64: 1, 8, 128>}, {pipeline_mode = #tpu.pipeline_mode<synchronous>, transform_indices = @transform_3, window_bounds = array<i64: 128, 512>}, {pipeline_mode = #tpu.pipeline_mode<synchronous>, transform_indices = @transform_4, window_bounds = array<i64: 128, 512>}, {pipeline_mode = #tpu.pipeline_mode<synchronous>, transform_indices = @transform_5, window_bounds = array<i64: 1, 512>}, {pipeline_mode = #tpu.pipeline_mode<synchronous>, transform_indices = @transform_6, window_bounds = array<i64: 128, 128>}, {pipeline_mode = #tpu.pipeline_mode<synchronous>, transform_indices = @transform_7, window_bounds = array<i64: 1, 128>}, {transform_indices = @transform_8, window_bounds = array<i64: 8, 8, 128>}, {transform_indices = @transform_9, window_bounds = array<i64: 1, 8, 128>}, {transform_indices = @transform_10, window_bounds = array<i64: 1, 8, 128>}]} {
    %c0_i32 = arith.constant 0 : i32
    %0 = arith.cmpi eq, %arg1, %c0_i32 : i32
    %c0_i32_0 = arith.constant 0 : i32
    %1 = arith.cmpi eq, %arg2, %c0_i32_0 : i32
    %2 = arith.andi %0, %1 : i1
    %3 = arith.extui %2 : i1 to i32
    %c0_i32_1 = arith.constant 0 : i32
    %4 = arith.cmpi ne, %3, %c0_i32_1 : i32
    scf.if %4 {
      %c0_16 = arith.constant 0 : index
      %c0_17 = arith.constant 0 : index
      %c0_18 = arith.constant 0 : index
      %22 = vector.load %arg4[%c0_16, %c0_17, %c0_18] : memref<1x8x128xf32, #tpu.memory_space<vmem>>, vector<1x8x128xf32>
      %23 = vector.shape_cast %22 : vector<1x8x128xf32> to vector<8x128xf32>
      %c0_19 = arith.constant 0 : index
      %c0_20 = arith.constant 0 : index
      %24 = vector.load %arg14[%c0_19, %c0_20] : memref<8x128xf32, #tpu.memory_space<vmem>>, vector<8x128xf32>
      tpu.vector_store %arg14[%c0_19, %c0_20], %23 {strides = array<i32>} : memref<8x128xf32, #tpu.memory_space<vmem>>, vector<8x128xf32>,
      %c0_21 = arith.constant 0 : index
      %c0_22 = arith.constant 0 : index
      %c0_23 = arith.constant 0 : index
      %25 = vector.load %arg5[%c0_21, %c0_22, %c0_23] : memref<1x8x128xf32, #tpu.memory_space<vmem>>, vector<1x8x128xf32>
      %26 = vector.shape_cast %25 : vector<1x8x128xf32> to vector<8x128xf32>
      %c0_24 = arith.constant 0 : index
      %c0_25 = arith.constant 0 : index
      %27 = vector.load %arg15[%c0_24, %c0_25] : memref<8x128xf32, #tpu.memory_space<vmem>>, vector<8x128xf32>
      tpu.vector_store %arg15[%c0_24, %c0_25], %26 {strides = array<i32>} : memref<8x128xf32, #tpu.memory_space<vmem>>, vector<8x128xf32>,
    } else {
    }
    %c0_i32_2 = arith.constant 0 : i32
    %5 = arith.cmpi eq, %arg2, %c0_i32_2 : i32
    %6 = arith.extui %5 : i1 to i32
    %c0_i32_3 = arith.constant 0 : i32
    %7 = arith.cmpi ne, %6, %c0_i32_3 : i32
    scf.if %7 {
      %c0_16 = arith.constant 0 : index
      %c0_17 = arith.constant 0 : index
      %22 = vector.load %arg6[%c0_16, %c0_17] : memref<128x512xf32, #tpu.memory_space<vmem>>, vector<128x512xf32>
      %c0_18 = arith.constant 0 : index
      %c0_19 = arith.constant 0 : index
      %23 = vector.load %arg7[%c0_18, %c0_19] : memref<128x512xf32, #tpu.memory_space<vmem>>, vector<128x512xf32>
      %c0_20 = arith.constant 0 : index
      %c0_21 = arith.constant 0 : index
      %24 = vector.load %arg8[%c0_20, %c0_21] : memref<1x512xf32, #tpu.memory_space<vmem>>, vector<1x512xf32>
      %c0_22 = arith.constant 0 : index
      %c0_23 = arith.constant 0 : index
      %c0_24 = arith.constant 0 : index
      %25 = vector.load %arg3[%c0_22, %c0_23, %c0_24] : memref<8x8x128xf32, #tpu.memory_space<vmem>>, vector<8x8x128xf32>
      %26 = vector.shape_cast %25 : vector<8x8x128xf32> to vector<64x128xf32>
      %cst_25 = arith.constant dense<0.000000e+00> : vector<64x512xf32>
      %27 = tpu.matmul %26, %22, %cst_25 {dimension_numbers = #tpu.dot_dimension_numbers<[1], [0], [0], [1], [0, 0, 1, 1], [], []>} : vector<64x128xf32>, vector<128x512xf32>, vector<64x512xf32> -> vector<64x512xf32>
      %28 = vector.broadcast %24 : vector<1x512xf32> to vector<64x512xf32>
      %29 = arith.addf %27, %28 : vector<64x512xf32>
      %c0_26 = arith.constant 0 : index
      %c0_27 = arith.constant 0 : index
      %30 = vector.load %arg14[%c0_26, %c0_27] : memref<8x128xf32, #tpu.memory_space<vmem>>, vector<8x128xf32>
      %c0_28 = arith.constant 0 : index
      %c0_29 = arith.constant 0 : index
      %31 = vector.load %arg15[%c0_28, %c0_29] : memref<8x128xf32, #tpu.memory_space<vmem>>, vector<8x128xf32>
      %32 = vector.extract_strided_slice %29 {offsets = [0, 0], sizes = [8, 512], strides = [1, 1]} : vector<64x512xf32> to vector<8x512xf32>
      %cst_30 = arith.constant dense<0.000000e+00> : vector<8x512xf32>
      %33 = tpu.matmul %30, %23, %cst_30 {dimension_numbers = #tpu.dot_dimension_numbers<[1], [0], [0], [1], [0, 0, 1, 1], [], []>} : vector<8x128xf32>, vector<128x512xf32>, vector<8x512xf32> -> vector<8x512xf32>
      %34 = arith.addf %32, %33 : vector<8x512xf32>
      %35 = vector.extract_strided_slice %34 {offsets = [0, 0], sizes = [8, 128], strides = [1, 1]} : vector<8x512xf32> to vector<8x128xf32>
      %cst_31 = arith.constant 5.000000e-01 : f32
      %36 = vector.broadcast %cst_31 : f32 to vector<8x128xf32>
      %37 = arith.mulf %36, %35 : vector<8x128xf32>
      %38 = math.tanh %37 : vector<8x128xf32>
      %cst_32 = arith.constant 1.000000e+00 : f32
      %39 = vector.broadcast %cst_32 : f32 to vector<8x128xf32>
      %40 = arith.addf %38, %39 : vector<8x128xf32>
      %cst_33 = arith.constant 5.000000e-01 : f32
      %41 = vector.broadcast %cst_33 : f32 to vector<8x128xf32>
      %42 = arith.mulf %41, %40 : vector<8x128xf32>
      %43 = vector.extract_strided_slice %34 {offsets = [0, 128], sizes = [8, 128], strides = [1, 1]} : vector<8x512xf32> to vector<8x128xf32>
      %cst_34 = arith.constant 5.000000e-01 : f32
      %44 = vector.broadcast %cst_34 : f32 to vector<8x128xf32>
      %45 = arith.mulf %44, %43 : vector<8x128xf32>
      %46 = math.tanh %45 : vector<8x128xf32>
      %cst_35 = arith.constant 1.000000e+00 : f32
      %47 = vector.broadcast %cst_35 : f32 to vector<8x128xf32>
      %48 = arith.addf %46, %47 : vector<8x128xf32>
      %cst_36 = arith.constant 5.000000e-01 : f32
      %49 = vector.broadcast %cst_36 : f32 to vector<8x128xf32>
      %50 = arith.mulf %49, %48 : vector<8x128xf32>
      %51 = vector.extract_strided_slice %34 {offsets = [0, 256], sizes = [8, 128], strides = [1, 1]} : vector<8x512xf32> to vector<8x128xf32>
      %52 = math.tanh %51 : vector<8x128xf32>
      %53 = vector.extract_strided_slice %34 {offsets = [0, 384], sizes = [8, 128], strides = [1, 1]} : vector<8x512xf32> to vector<8x128xf32>
      %cst_37 = arith.constant 5.000000e-01 : f32
      %54 = vector.broadcast %cst_37 : f32 to vector<8x128xf32>
      %55 = arith.mulf %54, %53 : vector<8x128xf32>
      %56 = math.tanh %55 : vector<8x128xf32>
      %cst_38 = arith.constant 1.000000e+00 : f32
      %57 = vector.broadcast %cst_38 : f32 to vector<8x128xf32>
      %58 = arith.addf %56, %57 : vector<8x128xf32>
      %cst_39 = arith.constant 5.000000e-01 : f32
      %59 = vector.broadcast %cst_39 : f32 to vector<8x128xf32>
      %60 = arith.mulf %59, %58 : vector<8x128xf32>
      %61 = arith.mulf %50, %31 : vector<8x128xf32>
      %62 = arith.mulf %42, %52 : vector<8x128xf32>
      %63 = arith.addf %61, %62 : vector<8x128xf32>
      %64 = math.tanh %63 : vector<8x128xf32>
      %65 = arith.mulf %60, %64 : vector<8x128xf32>
      %c0_40 = arith.constant 0 : index
      %c0_41 = arith.constant 0 : index
      %c0_42 = arith.constant 0 : index
      %66 = vector.load %arg16[%c0_40, %c0_41, %c0_42] : memref<8x8x128xf32, #tpu.memory_space<vmem>>, vector<1x8x128xf32>
      %67 = vector.shape_cast %66 : vector<1x8x128xf32> to vector<8x128xf32>
      %68 = vector.shape_cast %65 : vector<8x128xf32> to vector<1x8x128xf32>
      tpu.vector_store %arg16[%c0_40, %c0_41, %c0_42], %68 {strides = array<i32>} : memref<8x8x128xf32, #tpu.memory_space<vmem>>, vector<1x8x128xf32>,
      %69 = vector.extract_strided_slice %29 {offsets = [8, 0], sizes = [8, 512], strides = [1, 1]} : vector<64x512xf32> to vector<8x512xf32>
      %cst_43 = arith.constant dense<0.000000e+00> : vector<8x512xf32>
      %70 = tpu.matmul %65, %23, %cst_43 {dimension_numbers = #tpu.dot_dimension_numbers<[1], [0], [0], [1], [0, 0, 1, 1], [], []>} : vector<8x128xf32>, vector<128x512xf32>, vector<8x512xf32> -> vector<8x512xf32>
      %71 = arith.addf %69, %70 : vector<8x512xf32>
      %72 = vector.extract_strided_slice %71 {offsets = [0, 0], sizes = [8, 128], strides = [1, 1]} : vector<8x512xf32> to vector<8x128xf32>
      %cst_44 = arith.constant 5.000000e-01 : f32
      %73 = vector.broadcast %cst_44 : f32 to vector<8x128xf32>
      %74 = arith.mulf %73, %72 : vector<8x128xf32>
      %75 = math.tanh %74 : vector<8x128xf32>
      %cst_45 = arith.constant 1.000000e+00 : f32
      %76 = vector.broadcast %cst_45 : f32 to vector<8x128xf32>
      %77 = arith.addf %75, %76 : vector<8x128xf32>
      %cst_46 = arith.constant 5.000000e-01 : f32
      %78 = vector.broadcast %cst_46 : f32 to vector<8x128xf32>
      %79 = arith.mulf %78, %77 : vector<8x128xf32>
      %80 = vector.extract_strided_slice %71 {offsets = [0, 128], sizes = [8, 128], strides = [1, 1]} : vector<8x512xf32> to vector<8x128xf32>
      %cst_47 = arith.constant 5.000000e-01 : f32
      %81 = vector.broadcast %cst_47 : f32 to vector<8x128xf32>
      %82 = arith.mulf %81, %80 : vector<8x128xf32>
      %83 = math.tanh %82 : vector<8x128xf32>
      %cst_48 = arith.constant 1.000000e+00 : f32
      %84 = vector.broadcast %cst_48 : f32 to vector<8x128xf32>
      %85 = arith.addf %83, %84 : vector<8x128xf32>
      %cst_49 = arith.constant 5.000000e-01 : f32
      %86 = vector.broadcast %cst_49 : f32 to vector<8x128xf32>
      %87 = arith.mulf %86, %85 : vector<8x128xf32>
      %88 = vector.extract_strided_slice %71 {offsets = [0, 256], sizes = [8, 128], strides = [1, 1]} : vector<8x512xf32> to vector<8x128xf32>
      %89 = math.tanh %88 : vector<8x128xf32>
      %90 = vector.extract_strided_slice %71 {offsets = [0, 384], sizes = [8, 128], strides = [1, 1]} : vector<8x512xf32> to vector<8x128xf32>
      %cst_50 = arith.constant 5.000000e-01 : f32
      %91 = vector.broadcast %cst_50 : f32 to vector<8x128xf32>
      %92 = arith.mulf %91, %90 : vector<8x128xf32>
      %93 = math.tanh %92 : vector<8x128xf32>
      %cst_51 = arith.constant 1.000000e+00 : f32
      %94 = vector.broadcast %cst_51 : f32 to vector<8x128xf32>
      %95 = arith.addf %93, %94 : vector<8x128xf32>
      %cst_52 = arith.constant 5.000000e-01 : f32
      %96 = vector.broadcast %cst_52 : f32 to vector<8x128xf32>
      %97 = arith.mulf %96, %95 : vector<8x128xf32>
      %98 = arith.mulf %87, %63 : vector<8x128xf32>
      %99 = arith.mulf %79, %89 : vector<8x128xf32>
      %100 = arith.addf %98, %99 : vector<8x128xf32>
      %101 = math.tanh %100 : vector<8x128xf32>
      %102 = arith.mulf %97, %101 : vector<8x128xf32>
      %c1 = arith.constant 1 : index
      %c0_53 = arith.constant 0 : index
      %c0_54 = arith.constant 0 : index
      %103 = vector.load %arg16[%c1, %c0_53, %c0_54] : memref<8x8x128xf32, #tpu.memory_space<vmem>>, vector<1x8x128xf32>
      %104 = vector.shape_cast %103 : vector<1x8x128xf32> to vector<8x128xf32>
      %105 = vector.shape_cast %102 : vector<8x128xf32> to vector<1x8x128xf32>
      tpu.vector_store %arg16[%c1, %c0_53, %c0_54], %105 {strides = array<i32>} : memref<8x8x128xf32, #tpu.memory_space<vmem>>, vector<1x8x128xf32>,
      %106 = vector.extract_strided_slice %29 {offsets = [16, 0], sizes = [8, 512], strides = [1, 1]} : vector<64x512xf32> to vector<8x512xf32>
      %cst_55 = arith.constant dense<0.000000e+00> : vector<8x512xf32>
      %107 = tpu.matmul %102, %23, %cst_55 {dimension_numbers = #tpu.dot_dimension_numbers<[1], [0], [0], [1], [0, 0, 1, 1], [], []>} : vector<8x128xf32>, vector<128x512xf32>, vector<8x512xf32> -> vector<8x512xf32>
      %108 = arith.addf %106, %107 : vector<8x512xf32>
      %109 = vector.extract_strided_slice %108 {offsets = [0, 0], sizes = [8, 128], strides = [1, 1]} : vector<8x512xf32> to vector<8x128xf32>
      %cst_56 = arith.constant 5.000000e-01 : f32
      %110 = vector.broadcast %cst_56 : f32 to vector<8x128xf32>
      %111 = arith.mulf %110, %109 : vector<8x128xf32>
      %112 = math.tanh %111 : vector<8x128xf32>
      %cst_57 = arith.constant 1.000000e+00 : f32
      %113 = vector.broadcast %cst_57 : f32 to vector<8x128xf32>
      %114 = arith.addf %112, %113 : vector<8x128xf32>
      %cst_58 = arith.constant 5.000000e-01 : f32
      %115 = vector.broadcast %cst_58 : f32 to vector<8x128xf32>
      %116 = arith.mulf %115, %114 : vector<8x128xf32>
      %117 = vector.extract_strided_slice %108 {offsets = [0, 128], sizes = [8, 128], strides = [1, 1]} : vector<8x512xf32> to vector<8x128xf32>
      %cst_59 = arith.constant 5.000000e-01 : f32
      %118 = vector.broadcast %cst_59 : f32 to vector<8x128xf32>
      %119 = arith.mulf %118, %117 : vector<8x128xf32>
      %120 = math.tanh %119 : vector<8x128xf32>
      %cst_60 = arith.constant 1.000000e+00 : f32
      %121 = vector.broadcast %cst_60 : f32 to vector<8x128xf32>
      %122 = arith.addf %120, %121 : vector<8x128xf32>
      %cst_61 = arith.constant 5.000000e-01 : f32
      %123 = vector.broadcast %cst_61 : f32 to vector<8x128xf32>
      %124 = arith.mulf %123, %122 : vector<8x128xf32>
      %125 = vector.extract_strided_slice %108 {offsets = [0, 256], sizes = [8, 128], strides = [1, 1]} : vector<8x512xf32> to vector<8x128xf32>
      %126 = math.tanh %125 : vector<8x128xf32>
      %127 = vector.extract_strided_slice %108 {offsets = [0, 384], sizes = [8, 128], strides = [1, 1]} : vector<8x512xf32> to vector<8x128xf32>
      %cst_62 = arith.constant 5.000000e-01 : f32
      %128 = vector.broadcast %cst_62 : f32 to vector<8x128xf32>
      %129 = arith.mulf %128, %127 : vector<8x128xf32>
      %130 = math.tanh %129 : vector<8x128xf32>
      %cst_63 = arith.constant 1.000000e+00 : f32
      %131 = vector.broadcast %cst_63 : f32 to vector<8x128xf32>
      %132 = arith.addf %130, %131 : vector<8x128xf32>
      %cst_64 = arith.constant 5.000000e-01 : f32
      %133 = vector.broadcast %cst_64 : f32 to vector<8x128xf32>
      %134 = arith.mulf %133, %132 : vector<8x128xf32>
      %135 = arith.mulf %124, %100 : vector<8x128xf32>
      %136 = arith.mulf %116, %126 : vector<8x128xf32>
      %137 = arith.addf %135, %136 : vector<8x128xf32>
      %138 = math.tanh %137 : vector<8x128xf32>
      %139 = arith.mulf %134, %138 : vector<8x128xf32>
      %c2 = arith.constant 2 : index
      %c0_65 = arith.constant 0 : index
      %c0_66 = arith.constant 0 : index
      %140 = vector.load %arg16[%c2, %c0_65, %c0_66] : memref<8x8x128xf32, #tpu.memory_space<vmem>>, vector<1x8x128xf32>
      %141 = vector.shape_cast %140 : vector<1x8x128xf32> to vector<8x128xf32>
      %142 = vector.shape_cast %139 : vector<8x128xf32> to vector<1x8x128xf32>
      tpu.vector_store %arg16[%c2, %c0_65, %c0_66], %142 {strides = array<i32>} : memref<8x8x128xf32, #tpu.memory_space<vmem>>, vector<1x8x128xf32>,
      %143 = vector.extract_strided_slice %29 {offsets = [24, 0], sizes = [8, 512], strides = [1, 1]} : vector<64x512xf32> to vector<8x512xf32>
      %cst_67 = arith.constant dense<0.000000e+00> : vector<8x512xf32>
      %144 = tpu.matmul %139, %23, %cst_67 {dimension_numbers = #tpu.dot_dimension_numbers<[1], [0], [0], [1], [0, 0, 1, 1], [], []>} : vector<8x128xf32>, vector<128x512xf32>, vector<8x512xf32> -> vector<8x512xf32>
      %145 = arith.addf %143, %144 : vector<8x512xf32>
      %146 = vector.extract_strided_slice %145 {offsets = [0, 0], sizes = [8, 128], strides = [1, 1]} : vector<8x512xf32> to vector<8x128xf32>
      %cst_68 = arith.constant 5.000000e-01 : f32
      %147 = vector.broadcast %cst_68 : f32 to vector<8x128xf32>
      %148 = arith.mulf %147, %146 : vector<8x128xf32>
      %149 = math.tanh %148 : vector<8x128xf32>
      %cst_69 = arith.constant 1.000000e+00 : f32
      %150 = vector.broadcast %cst_69 : f32 to vector<8x128xf32>
      %151 = arith.addf %149, %150 : vector<8x128xf32>
      %cst_70 = arith.constant 5.000000e-01 : f32
      %152 = vector.broadcast %cst_70 : f32 to vector<8x128xf32>
      %153 = arith.mulf %152, %151 : vector<8x128xf32>
      %154 = vector.extract_strided_slice %145 {offsets = [0, 128], sizes = [8, 128], strides = [1, 1]} : vector<8x512xf32> to vector<8x128xf32>
      %cst_71 = arith.constant 5.000000e-01 : f32
      %155 = vector.broadcast %cst_71 : f32 to vector<8x128xf32>
      %156 = arith.mulf %155, %154 : vector<8x128xf32>
      %157 = math.tanh %156 : vector<8x128xf32>
      %cst_72 = arith.constant 1.000000e+00 : f32
      %158 = vector.broadcast %cst_72 : f32 to vector<8x128xf32>
      %159 = arith.addf %157, %158 : vector<8x128xf32>
      %cst_73 = arith.constant 5.000000e-01 : f32
      %160 = vector.broadcast %cst_73 : f32 to vector<8x128xf32>
      %161 = arith.mulf %160, %159 : vector<8x128xf32>
      %162 = vector.extract_strided_slice %145 {offsets = [0, 256], sizes = [8, 128], strides = [1, 1]} : vector<8x512xf32> to vector<8x128xf32>
      %163 = math.tanh %162 : vector<8x128xf32>
      %164 = vector.extract_strided_slice %145 {offsets = [0, 384], sizes = [8, 128], strides = [1, 1]} : vector<8x512xf32> to vector<8x128xf32>
      %cst_74 = arith.constant 5.000000e-01 : f32
      %165 = vector.broadcast %cst_74 : f32 to vector<8x128xf32>
      %166 = arith.mulf %165, %164 : vector<8x128xf32>
      %167 = math.tanh %166 : vector<8x128xf32>
      %cst_75 = arith.constant 1.000000e+00 : f32
      %168 = vector.broadcast %cst_75 : f32 to vector<8x128xf32>
      %169 = arith.addf %167, %168 : vector<8x128xf32>
      %cst_76 = arith.constant 5.000000e-01 : f32
      %170 = vector.broadcast %cst_76 : f32 to vector<8x128xf32>
      %171 = arith.mulf %170, %169 : vector<8x128xf32>
      %172 = arith.mulf %161, %137 : vector<8x128xf32>
      %173 = arith.mulf %153, %163 : vector<8x128xf32>
      %174 = arith.addf %172, %173 : vector<8x128xf32>
      %175 = math.tanh %174 : vector<8x128xf32>
      %176 = arith.mulf %171, %175 : vector<8x128xf32>
      %c3 = arith.constant 3 : index
      %c0_77 = arith.constant 0 : index
      %c0_78 = arith.constant 0 : index
      %177 = vector.load %arg16[%c3, %c0_77, %c0_78] : memref<8x8x128xf32, #tpu.memory_space<vmem>>, vector<1x8x128xf32>
      %178 = vector.shape_cast %177 : vector<1x8x128xf32> to vector<8x128xf32>
      %179 = vector.shape_cast %176 : vector<8x128xf32> to vector<1x8x128xf32>
      tpu.vector_store %arg16[%c3, %c0_77, %c0_78], %179 {strides = array<i32>} : memref<8x8x128xf32, #tpu.memory_space<vmem>>, vector<1x8x128xf32>,
      %180 = vector.extract_strided_slice %29 {offsets = [32, 0], sizes = [8, 512], strides = [1, 1]} : vector<64x512xf32> to vector<8x512xf32>
      %cst_79 = arith.constant dense<0.000000e+00> : vector<8x512xf32>
      %181 = tpu.matmul %176, %23, %cst_79 {dimension_numbers = #tpu.dot_dimension_numbers<[1], [0], [0], [1], [0, 0, 1, 1], [], []>} : vector<8x128xf32>, vector<128x512xf32>, vector<8x512xf32> -> vector<8x512xf32>
      %182 = arith.addf %180, %181 : vector<8x512xf32>
      %183 = vector.extract_strided_slice %182 {offsets = [0, 0], sizes = [8, 128], strides = [1, 1]} : vector<8x512xf32> to vector<8x128xf32>
      %cst_80 = arith.constant 5.000000e-01 : f32
      %184 = vector.broadcast %cst_80 : f32 to vector<8x128xf32>
      %185 = arith.mulf %184, %183 : vector<8x128xf32>
      %186 = math.tanh %185 : vector<8x128xf32>
      %cst_81 = arith.constant 1.000000e+00 : f32
      %187 = vector.broadcast %cst_81 : f32 to vector<8x128xf32>
      %188 = arith.addf %186, %187 : vector<8x128xf32>
      %cst_82 = arith.constant 5.000000e-01 : f32
      %189 = vector.broadcast %cst_82 : f32 to vector<8x128xf32>
      %190 = arith.mulf %189, %188 : vector<8x128xf32>
      %191 = vector.extract_strided_slice %182 {offsets = [0, 128], sizes = [8, 128], strides = [1, 1]} : vector<8x512xf32> to vector<8x128xf32>
      %cst_83 = arith.constant 5.000000e-01 : f32
      %192 = vector.broadcast %cst_83 : f32 to vector<8x128xf32>
      %193 = arith.mulf %192, %191 : vector<8x128xf32>
      %194 = math.tanh %193 : vector<8x128xf32>
      %cst_84 = arith.constant 1.000000e+00 : f32
      %195 = vector.broadcast %cst_84 : f32 to vector<8x128xf32>
      %196 = arith.addf %194, %195 : vector<8x128xf32>
      %cst_85 = arith.constant 5.000000e-01 : f32
      %197 = vector.broadcast %cst_85 : f32 to vector<8x128xf32>
      %198 = arith.mulf %197, %196 : vector<8x128xf32>
      %199 = vector.extract_strided_slice %182 {offsets = [0, 256], sizes = [8, 128], strides = [1, 1]} : vector<8x512xf32> to vector<8x128xf32>
      %200 = math.tanh %199 : vector<8x128xf32>
      %201 = vector.extract_strided_slice %182 {offsets = [0, 384], sizes = [8, 128], strides = [1, 1]} : vector<8x512xf32> to vector<8x128xf32>
      %cst_86 = arith.constant 5.000000e-01 : f32
      %202 = vector.broadcast %cst_86 : f32 to vector<8x128xf32>
      %203 = arith.mulf %202, %201 : vector<8x128xf32>
      %204 = math.tanh %203 : vector<8x128xf32>
      %cst_87 = arith.constant 1.000000e+00 : f32
      %205 = vector.broadcast %cst_87 : f32 to vector<8x128xf32>
      %206 = arith.addf %204, %205 : vector<8x128xf32>
      %cst_88 = arith.constant 5.000000e-01 : f32
      %207 = vector.broadcast %cst_88 : f32 to vector<8x128xf32>
      %208 = arith.mulf %207, %206 : vector<8x128xf32>
      %209 = arith.mulf %198, %174 : vector<8x128xf32>
      %210 = arith.mulf %190, %200 : vector<8x128xf32>
      %211 = arith.addf %209, %210 : vector<8x128xf32>
      %212 = math.tanh %211 : vector<8x128xf32>
      %213 = arith.mulf %208, %212 : vector<8x128xf32>
      %c4 = arith.constant 4 : index
      %c0_89 = arith.constant 0 : index
      %c0_90 = arith.constant 0 : index
      %214 = vector.load %arg16[%c4, %c0_89, %c0_90] : memref<8x8x128xf32, #tpu.memory_space<vmem>>, vector<1x8x128xf32>
      %215 = vector.shape_cast %214 : vector<1x8x128xf32> to vector<8x128xf32>
      %216 = vector.shape_cast %213 : vector<8x128xf32> to vector<1x8x128xf32>
      tpu.vector_store %arg16[%c4, %c0_89, %c0_90], %216 {strides = array<i32>} : memref<8x8x128xf32, #tpu.memory_space<vmem>>, vector<1x8x128xf32>,
      %217 = vector.extract_strided_slice %29 {offsets = [40, 0], sizes = [8, 512], strides = [1, 1]} : vector<64x512xf32> to vector<8x512xf32>
      %cst_91 = arith.constant dense<0.000000e+00> : vector<8x512xf32>
      %218 = tpu.matmul %213, %23, %cst_91 {dimension_numbers = #tpu.dot_dimension_numbers<[1], [0], [0], [1], [0, 0, 1, 1], [], []>} : vector<8x128xf32>, vector<128x512xf32>, vector<8x512xf32> -> vector<8x512xf32>
      %219 = arith.addf %217, %218 : vector<8x512xf32>
      %220 = vector.extract_strided_slice %219 {offsets = [0, 0], sizes = [8, 128], strides = [1, 1]} : vector<8x512xf32> to vector<8x128xf32>
      %cst_92 = arith.constant 5.000000e-01 : f32
      %221 = vector.broadcast %cst_92 : f32 to vector<8x128xf32>
      %222 = arith.mulf %221, %220 : vector<8x128xf32>
      %223 = math.tanh %222 : vector<8x128xf32>
      %cst_93 = arith.constant 1.000000e+00 : f32
      %224 = vector.broadcast %cst_93 : f32 to vector<8x128xf32>
      %225 = arith.addf %223, %224 : vector<8x128xf32>
      %cst_94 = arith.constant 5.000000e-01 : f32
      %226 = vector.broadcast %cst_94 : f32 to vector<8x128xf32>
      %227 = arith.mulf %226, %225 : vector<8x128xf32>
      %228 = vector.extract_strided_slice %219 {offsets = [0, 128], sizes = [8, 128], strides = [1, 1]} : vector<8x512xf32> to vector<8x128xf32>
      %cst_95 = arith.constant 5.000000e-01 : f32
      %229 = vector.broadcast %cst_95 : f32 to vector<8x128xf32>
      %230 = arith.mulf %229, %228 : vector<8x128xf32>
      %231 = math.tanh %230 : vector<8x128xf32>
      %cst_96 = arith.constant 1.000000e+00 : f32
      %232 = vector.broadcast %cst_96 : f32 to vector<8x128xf32>
      %233 = arith.addf %231, %232 : vector<8x128xf32>
      %cst_97 = arith.constant 5.000000e-01 : f32
      %234 = vector.broadcast %cst_97 : f32 to vector<8x128xf32>
      %235 = arith.mulf %234, %233 : vector<8x128xf32>
      %236 = vector.extract_strided_slice %219 {offsets = [0, 256], sizes = [8, 128], strides = [1, 1]} : vector<8x512xf32> to vector<8x128xf32>
      %237 = math.tanh %236 : vector<8x128xf32>
      %238 = vector.extract_strided_slice %219 {offsets = [0, 384], sizes = [8, 128], strides = [1, 1]} : vector<8x512xf32> to vector<8x128xf32>
      %cst_98 = arith.constant 5.000000e-01 : f32
      %239 = vector.broadcast %cst_98 : f32 to vector<8x128xf32>
      %240 = arith.mulf %239, %238 : vector<8x128xf32>
      %241 = math.tanh %240 : vector<8x128xf32>
      %cst_99 = arith.constant 1.000000e+00 : f32
      %242 = vector.broadcast %cst_99 : f32 to vector<8x128xf32>
      %243 = arith.addf %241, %242 : vector<8x128xf32>
      %cst_100 = arith.constant 5.000000e-01 : f32
      %244 = vector.broadcast %cst_100 : f32 to vector<8x128xf32>
      %245 = arith.mulf %244, %243 : vector<8x128xf32>
      %246 = arith.mulf %235, %211 : vector<8x128xf32>
      %247 = arith.mulf %227, %237 : vector<8x128xf32>
      %248 = arith.addf %246, %247 : vector<8x128xf32>
      %249 = math.tanh %248 : vector<8x128xf32>
      %250 = arith.mulf %245, %249 : vector<8x128xf32>
      %c5 = arith.constant 5 : index
      %c0_101 = arith.constant 0 : index
      %c0_102 = arith.constant 0 : index
      %251 = vector.load %arg16[%c5, %c0_101, %c0_102] : memref<8x8x128xf32, #tpu.memory_space<vmem>>, vector<1x8x128xf32>
      %252 = vector.shape_cast %251 : vector<1x8x128xf32> to vector<8x128xf32>
      %253 = vector.shape_cast %250 : vector<8x128xf32> to vector<1x8x128xf32>
      tpu.vector_store %arg16[%c5, %c0_101, %c0_102], %253 {strides = array<i32>} : memref<8x8x128xf32, #tpu.memory_space<vmem>>, vector<1x8x128xf32>,
      %254 = vector.extract_strided_slice %29 {offsets = [48, 0], sizes = [8, 512], strides = [1, 1]} : vector<64x512xf32> to vector<8x512xf32>
      %cst_103 = arith.constant dense<0.000000e+00> : vector<8x512xf32>
      %255 = tpu.matmul %250, %23, %cst_103 {dimension_numbers = #tpu.dot_dimension_numbers<[1], [0], [0], [1], [0, 0, 1, 1], [], []>} : vector<8x128xf32>, vector<128x512xf32>, vector<8x512xf32> -> vector<8x512xf32>
      %256 = arith.addf %254, %255 : vector<8x512xf32>
      %257 = vector.extract_strided_slice %256 {offsets = [0, 0], sizes = [8, 128], strides = [1, 1]} : vector<8x512xf32> to vector<8x128xf32>
      %cst_104 = arith.constant 5.000000e-01 : f32
      %258 = vector.broadcast %cst_104 : f32 to vector<8x128xf32>
      %259 = arith.mulf %258, %257 : vector<8x128xf32>
      %260 = math.tanh %259 : vector<8x128xf32>
      %cst_105 = arith.constant 1.000000e+00 : f32
      %261 = vector.broadcast %cst_105 : f32 to vector<8x128xf32>
      %262 = arith.addf %260, %261 : vector<8x128xf32>
      %cst_106 = arith.constant 5.000000e-01 : f32
      %263 = vector.broadcast %cst_106 : f32 to vector<8x128xf32>
      %264 = arith.mulf %263, %262 : vector<8x128xf32>
      %265 = vector.extract_strided_slice %256 {offsets = [0, 128], sizes = [8, 128], strides = [1, 1]} : vector<8x512xf32> to vector<8x128xf32>
      %cst_107 = arith.constant 5.000000e-01 : f32
      %266 = vector.broadcast %cst_107 : f32 to vector<8x128xf32>
      %267 = arith.mulf %266, %265 : vector<8x128xf32>
      %268 = math.tanh %267 : vector<8x128xf32>
      %cst_108 = arith.constant 1.000000e+00 : f32
      %269 = vector.broadcast %cst_108 : f32 to vector<8x128xf32>
      %270 = arith.addf %268, %269 : vector<8x128xf32>
      %cst_109 = arith.constant 5.000000e-01 : f32
      %271 = vector.broadcast %cst_109 : f32 to vector<8x128xf32>
      %272 = arith.mulf %271, %270 : vector<8x128xf32>
      %273 = vector.extract_strided_slice %256 {offsets = [0, 256], sizes = [8, 128], strides = [1, 1]} : vector<8x512xf32> to vector<8x128xf32>
      %274 = math.tanh %273 : vector<8x128xf32>
      %275 = vector.extract_strided_slice %256 {offsets = [0, 384], sizes = [8, 128], strides = [1, 1]} : vector<8x512xf32> to vector<8x128xf32>
      %cst_110 = arith.constant 5.000000e-01 : f32
      %276 = vector.broadcast %cst_110 : f32 to vector<8x128xf32>
      %277 = arith.mulf %276, %275 : vector<8x128xf32>
      %278 = math.tanh %277 : vector<8x128xf32>
      %cst_111 = arith.constant 1.000000e+00 : f32
      %279 = vector.broadcast %cst_111 : f32 to vector<8x128xf32>
      %280 = arith.addf %278, %279 : vector<8x128xf32>
      %cst_112 = arith.constant 5.000000e-01 : f32
      %281 = vector.broadcast %cst_112 : f32 to vector<8x128xf32>
      %282 = arith.mulf %281, %280 : vector<8x128xf32>
      %283 = arith.mulf %272, %248 : vector<8x128xf32>
      %284 = arith.mulf %264, %274 : vector<8x128xf32>
      %285 = arith.addf %283, %284 : vector<8x128xf32>
      %286 = math.tanh %285 : vector<8x128xf32>
      %287 = arith.mulf %282, %286 : vector<8x128xf32>
      %c6 = arith.constant 6 : index
      %c0_113 = arith.constant 0 : index
      %c0_114 = arith.constant 0 : index
      %288 = vector.load %arg16[%c6, %c0_113, %c0_114] : memref<8x8x128xf32, #tpu.memory_space<vmem>>, vector<1x8x128xf32>
      %289 = vector.shape_cast %288 : vector<1x8x128xf32> to vector<8x128xf32>
      %290 = vector.shape_cast %287 : vector<8x128xf32> to vector<1x8x128xf32>
      tpu.vector_store %arg16[%c6, %c0_113, %c0_114], %290 {strides = array<i32>} : memref<8x8x128xf32, #tpu.memory_space<vmem>>, vector<1x8x128xf32>,
      %291 = vector.extract_strided_slice %29 {offsets = [56, 0], sizes = [8, 512], strides = [1, 1]} : vector<64x512xf32> to vector<8x512xf32>
      %cst_115 = arith.constant dense<0.000000e+00> : vector<8x512xf32>
      %292 = tpu.matmul %287, %23, %cst_115 {dimension_numbers = #tpu.dot_dimension_numbers<[1], [0], [0], [1], [0, 0, 1, 1], [], []>} : vector<8x128xf32>, vector<128x512xf32>, vector<8x512xf32> -> vector<8x512xf32>
      %293 = arith.addf %291, %292 : vector<8x512xf32>
      %294 = vector.extract_strided_slice %293 {offsets = [0, 0], sizes = [8, 128], strides = [1, 1]} : vector<8x512xf32> to vector<8x128xf32>
      %cst_116 = arith.constant 5.000000e-01 : f32
      %295 = vector.broadcast %cst_116 : f32 to vector<8x128xf32>
      %296 = arith.mulf %295, %294 : vector<8x128xf32>
      %297 = math.tanh %296 : vector<8x128xf32>
      %cst_117 = arith.constant 1.000000e+00 : f32
      %298 = vector.broadcast %cst_117 : f32 to vector<8x128xf32>
      %299 = arith.addf %297, %298 : vector<8x128xf32>
      %cst_118 = arith.constant 5.000000e-01 : f32
      %300 = vector.broadcast %cst_118 : f32 to vector<8x128xf32>
      %301 = arith.mulf %300, %299 : vector<8x128xf32>
      %302 = vector.extract_strided_slice %293 {offsets = [0, 128], sizes = [8, 128], strides = [1, 1]} : vector<8x512xf32> to vector<8x128xf32>
      %cst_119 = arith.constant 5.000000e-01 : f32
      %303 = vector.broadcast %cst_119 : f32 to vector<8x128xf32>
      %304 = arith.mulf %303, %302 : vector<8x128xf32>
      %305 = math.tanh %304 : vector<8x128xf32>
      %cst_120 = arith.constant 1.000000e+00 : f32
      %306 = vector.broadcast %cst_120 : f32 to vector<8x128xf32>
      %307 = arith.addf %305, %306 : vector<8x128xf32>
      %cst_121 = arith.constant 5.000000e-01 : f32
      %308 = vector.broadcast %cst_121 : f32 to vector<8x128xf32>
      %309 = arith.mulf %308, %307 : vector<8x128xf32>
      %310 = vector.extract_strided_slice %293 {offsets = [0, 256], sizes = [8, 128], strides = [1, 1]} : vector<8x512xf32> to vector<8x128xf32>
      %311 = math.tanh %310 : vector<8x128xf32>
      %312 = vector.extract_strided_slice %293 {offsets = [0, 384], sizes = [8, 128], strides = [1, 1]} : vector<8x512xf32> to vector<8x128xf32>
      %cst_122 = arith.constant 5.000000e-01 : f32
      %313 = vector.broadcast %cst_122 : f32 to vector<8x128xf32>
      %314 = arith.mulf %313, %312 : vector<8x128xf32>
      %315 = math.tanh %314 : vector<8x128xf32>
      %cst_123 = arith.constant 1.000000e+00 : f32
      %316 = vector.broadcast %cst_123 : f32 to vector<8x128xf32>
      %317 = arith.addf %315, %316 : vector<8x128xf32>
      %cst_124 = arith.constant 5.000000e-01 : f32
      %318 = vector.broadcast %cst_124 : f32 to vector<8x128xf32>
      %319 = arith.mulf %318, %317 : vector<8x128xf32>
      %320 = arith.mulf %309, %285 : vector<8x128xf32>
      %321 = arith.mulf %301, %311 : vector<8x128xf32>
      %322 = arith.addf %320, %321 : vector<8x128xf32>
      %323 = math.tanh %322 : vector<8x128xf32>
      %324 = arith.mulf %319, %323 : vector<8x128xf32>
      %c7 = arith.constant 7 : index
      %c0_125 = arith.constant 0 : index
      %c0_126 = arith.constant 0 : index
      %325 = vector.load %arg16[%c7, %c0_125, %c0_126] : memref<8x8x128xf32, #tpu.memory_space<vmem>>, vector<1x8x128xf32>
      %326 = vector.shape_cast %325 : vector<1x8x128xf32> to vector<8x128xf32>
      %327 = vector.shape_cast %324 : vector<8x128xf32> to vector<1x8x128xf32>
      tpu.vector_store %arg16[%c7, %c0_125, %c0_126], %327 {strides = array<i32>} : memref<8x8x128xf32, #tpu.memory_space<vmem>>, vector<1x8x128xf32>,
      %c0_127 = arith.constant 0 : index
      %c0_128 = arith.constant 0 : index
      %328 = vector.load %arg14[%c0_127, %c0_128] : memref<8x128xf32, #tpu.memory_space<vmem>>, vector<8x128xf32>
      tpu.vector_store %arg14[%c0_127, %c0_128], %324 {strides = array<i32>} : memref<8x128xf32, #tpu.memory_space<vmem>>, vector<8x128xf32>,
      %c0_129 = arith.constant 0 : index
      %c0_130 = arith.constant 0 : index
      %329 = vector.load %arg15[%c0_129, %c0_130] : memref<8x128xf32, #tpu.memory_space<vmem>>, vector<8x128xf32>
      tpu.vector_store %arg15[%c0_129, %c0_130], %322 {strides = array<i32>} : memref<8x128xf32, #tpu.memory_space<vmem>>, vector<8x128xf32>,
    } else {
    }
    %c0_i32_4 = arith.constant 0 : i32
    %8 = arith.cmpi eq, %arg2, %c0_i32_4 : i32
    %c0_i32_5 = arith.constant 0 : i32
    %9 = arith.cmpi eq, %arg1, %c0_i32_5 : i32
    %10 = arith.andi %8, %9 : i1
    %11 = arith.extui %10 : i1 to i32
    %c0_i32_6 = arith.constant 0 : i32
    %12 = arith.cmpi ne, %11, %c0_i32_6 : i32
    scf.if %12 {
      %c0_16 = arith.constant 0 : index
      %c0_17 = arith.constant 0 : index
      %22 = vector.load %arg14[%c0_16, %c0_17] : memref<8x128xf32, #tpu.memory_space<vmem>>, vector<8x128xf32>
      %c0_18 = arith.constant 0 : index
      %c0_19 = arith.constant 0 : index
      %c0_20 = arith.constant 0 : index
      %23 = vector.load %arg12[%c0_18, %c0_19, %c0_20] : memref<1x8x128xf32, #tpu.memory_space<vmem>>, vector<1x8x128xf32>
      %24 = vector.shape_cast %23 : vector<1x8x128xf32> to vector<8x128xf32>
      %25 = vector.shape_cast %22 : vector<8x128xf32> to vector<1x8x128xf32>
      tpu.vector_store %arg12[%c0_18, %c0_19, %c0_20], %25 {strides = array<i32>} : memref<1x8x128xf32, #tpu.memory_space<vmem>>, vector<1x8x128xf32>,
      %c0_21 = arith.constant 0 : index
      %c0_22 = arith.constant 0 : index
      %26 = vector.load %arg15[%c0_21, %c0_22] : memref<8x128xf32, #tpu.memory_space<vmem>>, vector<8x128xf32>
      %c0_23 = arith.constant 0 : index
      %c0_24 = arith.constant 0 : index
      %c0_25 = arith.constant 0 : index
      %27 = vector.load %arg13[%c0_23, %c0_24, %c0_25] : memref<1x8x128xf32, #tpu.memory_space<vmem>>, vector<1x8x128xf32>
      %28 = vector.shape_cast %27 : vector<1x8x128xf32> to vector<8x128xf32>
      %29 = vector.shape_cast %26 : vector<8x128xf32> to vector<1x8x128xf32>
      tpu.vector_store %arg13[%c0_23, %c0_24, %c0_25], %29 {strides = array<i32>} : memref<1x8x128xf32, #tpu.memory_space<vmem>>, vector<1x8x128xf32>,
    } else {
    }
    %c0 = arith.constant 0 : index
    %c0_7 = arith.constant 0 : index
    %c0_8 = arith.constant 0 : index
    %13 = vector.load %arg16[%c0, %c0_7, %c0_8] : memref<8x8x128xf32, #tpu.memory_space<vmem>>, vector<8x8x128xf32>
    %14 = vector.shape_cast %13 : vector<8x8x128xf32> to vector<64x128xf32>
    %c0_9 = arith.constant 0 : index
    %c0_10 = arith.constant 0 : index
    %15 = vector.load %arg9[%c0_9, %c0_10] : memref<128x128xf32, #tpu.memory_space<vmem>>, vector<128x128xf32>
    %cst = arith.constant dense<0.000000e+00> : vector<64x128xf32>
    %16 = tpu.matmul %14, %15, %cst {dimension_numbers = #tpu.dot_dimension_numbers<[1], [0], [0], [1], [0, 0, 1, 1], [], []>} : vector<64x128xf32>, vector<128x128xf32>, vector<64x128xf32> -> vector<64x128xf32>
    %c0_11 = arith.constant 0 : index
    %c0_12 = arith.constant 0 : index
    %17 = vector.load %arg10[%c0_11, %c0_12] : memref<1x128xf32, #tpu.memory_space<vmem>>, vector<1x128xf32>
    %18 = vector.broadcast %17 : vector<1x128xf32> to vector<64x128xf32>
    %19 = arith.addf %16, %18 : vector<64x128xf32>
    %20 = vector.shape_cast %19 : vector<64x128xf32> to vector<8x8x128xf32>
    %c0_13 = arith.constant 0 : index
    %c0_14 = arith.constant 0 : index
    %c0_15 = arith.constant 0 : index
    %21 = vector.load %arg11[%c0_13, %c0_14, %c0_15] : memref<8x8x128xf32, #tpu.memory_space<vmem>>, vector<8x8x128xf32>
    tpu.vector_store %arg11[%c0_13, %c0_14, %c0_15], %20 {strides = array<i32>} : memref<8x8x128xf32, #tpu.memory_space<vmem>>, vector<8x8x128xf32>,
    return
  }
  func.func @transform_0(%arg0: i32, %arg1: i32, %arg2: i32) -> (i32, i32, i32) {
    %c0_i32 = arith.constant 0 : i32
    %c0_i32_0 = arith.constant 0 : i32
    return %arg1, %arg0, %c0_i32 : i32, i32, i32
  }
  func.func @transform_1(%arg0: i32, %arg1: i32, %arg2: i32) -> (i32, i32, i32) {
    %c0_i32 = arith.constant 0 : i32
    %c0_i32_0 = arith.constant 0 : i32
    %c0_i32_1 = arith.constant 0 : i32
    return %c0_i32, %arg0, %c0_i32_0 : i32, i32, i32
  }
  func.func @transform_2(%arg0: i32, %arg1: i32, %arg2: i32) -> (i32, i32, i32) {
    %c0_i32 = arith.constant 0 : i32
    %c0_i32_0 = arith.constant 0 : i32
    %c0_i32_1 = arith.constant 0 : i32
    return %c0_i32, %arg0, %c0_i32_0 : i32, i32, i32
  }
  func.func @transform_3(%arg0: i32, %arg1: i32, %arg2: i32) -> (i32, i32) {
    %c0_i32 = arith.constant 0 : i32
    %c0_i32_0 = arith.constant 0 : i32
    %c0_i32_1 = arith.constant 0 : i32
    return %c0_i32, %c0_i32_0 : i32, i32
  }
  func.func @transform_4(%arg0: i32, %arg1: i32, %arg2: i32) -> (i32, i32) {
    %c0_i32 = arith.constant 0 : i32
    %c0_i32_0 = arith.constant 0 : i32
    %c0_i32_1 = arith.constant 0 : i32
    return %c0_i32, %c0_i32_0 : i32, i32
  }
  func.func @transform_5(%arg0: i32, %arg1: i32, %arg2: i32) -> (i32, i32) {
    %c0_i32 = arith.constant 0 : i32
    %c0_i32_0 = arith.constant 0 : i32
    %c0_i32_1 = arith.constant 0 : i32
    return %c0_i32, %c0_i32_0 : i32, i32
  }
  func.func @transform_6(%arg0: i32, %arg1: i32, %arg2: i32) -> (i32, i32) {
    %c0_i32 = arith.constant 0 : i32
    %c0_i32_0 = arith.constant 0 : i32
    return %c0_i32, %arg2 : i32, i32
  }
  func.func @transform_7(%arg0: i32, %arg1: i32, %arg2: i32) -> (i32, i32) {
    %c0_i32 = arith.constant 0 : i32
    %c0_i32_0 = arith.constant 0 : i32
    return %c0_i32, %arg2 : i32, i32
  }
  func.func @transform_8(%arg0: i32, %arg1: i32, %arg2: i32) -> (i32, i32, i32) {
    %c0_i32 = arith.constant 0 : i32
    return %arg1, %arg0, %arg2 : i32, i32, i32
  }
  func.func @transform_9(%arg0: i32, %arg1: i32, %arg2: i32) -> (i32, i32, i32) {
    %c0_i32 = arith.constant 0 : i32
    %c0_i32_0 = arith.constant 0 : i32
    %c0_i32_1 = arith.constant 0 : i32
    return %c0_i32, %arg0, %c0_i32_0 : i32, i32, i32
  }
  func.func @transform_10(%arg0: i32, %arg1: i32, %arg2: i32) -> (i32, i32, i32) {
    %c0_i32 = arith.constant 0 : i32
    %c0_i32_0 = arith.constant 0 : i32
    %c0_i32_1 = arith.constant 0 : i32
    return %c0_i32, %arg0, %c0_i32_0 : i32, i32, i32
  }
}

module attributes {stable_mosaic.version = 11 : i64} {
  func.func @_lstm_decoder_kernel(%arg0: i32, %arg1: i32, %arg2: i32, %arg3: memref<8x8x128xf32, #tpu.memory_space<vmem>>, %arg4: memref<1x8x128xf32, #tpu.memory_space<vmem>>, %arg5: memref<1x8x128xf32, #tpu.memory_space<vmem>>, %arg6: memref<128x512xf32, #tpu.memory_space<vmem>>, %arg7: memref<128x512xf32, #tpu.memory_space<vmem>>, %arg8: memref<1x512xf32, #tpu.memory_space<vmem>>, %arg9: memref<128x128xf32, #tpu.memory_space<vmem>>, %arg10: memref<1x128xf32, #tpu.memory_space<vmem>>, %arg11: memref<8x8x128xf32, #tpu.memory_space<vmem>>, %arg12: memref<1x8x128xf32, #tpu.memory_space<vmem>>, %arg13: memref<1x8x128xf32, #tpu.memory_space<vmem>>, %arg14: memref<8x128xf32, #tpu.memory_space<vmem>>, %arg15: memref<8x128xf32, #tpu.memory_space<vmem>>, %arg16: memref<8x8x128xf32, #tpu.memory_space<vmem>>) attributes {dimension_semantics = [#tpu.dimension_semantics<parallel>, #tpu.dimension_semantics<arbitrary>, #tpu.dimension_semantics<arbitrary>], iteration_bounds = array<i64: 1, 1, 1>, scalar_prefetch = 0 : i64, scratch_operands = 3 : i64, tpu.core_type = #tpu.core_type<tc>, window_params = [{transform_indices = @transform_0, window_bounds = array<i64: 8, 8, 128>}, {transform_indices = @transform_1, window_bounds = array<i64: 1, 8, 128>}, {transform_indices = @transform_2, window_bounds = array<i64: 1, 8, 128>}, {pipeline_mode = #tpu.pipeline_mode<synchronous>, transform_indices = @transform_3, window_bounds = array<i64: 128, 512>}, {pipeline_mode = #tpu.pipeline_mode<synchronous>, transform_indices = @transform_4, window_bounds = array<i64: 128, 512>}, {pipeline_mode = #tpu.pipeline_mode<synchronous>, transform_indices = @transform_5, window_bounds = array<i64: 1, 512>}, {transform_indices = @transform_6, window_bounds = array<i64: 128, 128>}, {transform_indices = @transform_7, window_bounds = array<i64: 1, 128>}, {transform_indices = @transform_8, window_bounds = array<i64: 8, 8, 128>}, {transform_indices = @transform_9, window_bounds = array<i64: 1, 8, 128>}, {transform_indices = @transform_10, window_bounds = array<i64: 1, 8, 128>}]} {
    %c0_i32 = arith.constant 0 : i32
    %0 = arith.cmpi eq, %arg1, %c0_i32 : i32
    %c0_i32_0 = arith.constant 0 : i32
    %1 = arith.cmpi eq, %arg2, %c0_i32_0 : i32
    %2 = arith.andi %0, %1 : i1
    %3 = arith.extui %2 : i1 to i32
    %c0_i32_1 = arith.constant 0 : i32
    %4 = arith.cmpi ne, %3, %c0_i32_1 : i32
    scf.if %4 {
      %c0_16 = arith.constant 0 : index
      %c0_17 = arith.constant 0 : index
      %c0_18 = arith.constant 0 : index
      %22 = vector.load %arg4[%c0_16, %c0_17, %c0_18] : memref<1x8x128xf32, #tpu.memory_space<vmem>>, vector<1x8x128xf32>
      %23 = vector.shape_cast %22 : vector<1x8x128xf32> to vector<8x128xf32>
      %c0_19 = arith.constant 0 : index
      %c0_20 = arith.constant 0 : index
      %24 = vector.load %arg14[%c0_19, %c0_20] : memref<8x128xf32, #tpu.memory_space<vmem>>, vector<8x128xf32>
      tpu.vector_store %arg14[%c0_19, %c0_20], %23 {strides = array<i32>} : memref<8x128xf32, #tpu.memory_space<vmem>>, vector<8x128xf32>,
      %c0_21 = arith.constant 0 : index
      %c0_22 = arith.constant 0 : index
      %c0_23 = arith.constant 0 : index
      %25 = vector.load %arg5[%c0_21, %c0_22, %c0_23] : memref<1x8x128xf32, #tpu.memory_space<vmem>>, vector<1x8x128xf32>
      %26 = vector.shape_cast %25 : vector<1x8x128xf32> to vector<8x128xf32>
      %c0_24 = arith.constant 0 : index
      %c0_25 = arith.constant 0 : index
      %27 = vector.load %arg15[%c0_24, %c0_25] : memref<8x128xf32, #tpu.memory_space<vmem>>, vector<8x128xf32>
      tpu.vector_store %arg15[%c0_24, %c0_25], %26 {strides = array<i32>} : memref<8x128xf32, #tpu.memory_space<vmem>>, vector<8x128xf32>,
    } else {
    }
    %c0_i32_2 = arith.constant 0 : i32
    %5 = arith.cmpi eq, %arg2, %c0_i32_2 : i32
    %6 = arith.extui %5 : i1 to i32
    %c0_i32_3 = arith.constant 0 : i32
    %7 = arith.cmpi ne, %6, %c0_i32_3 : i32
    scf.if %7 {
      %c0_16 = arith.constant 0 : index
      %c0_17 = arith.constant 0 : index
      %22 = vector.load %arg6[%c0_16, %c0_17] : memref<128x512xf32, #tpu.memory_space<vmem>>, vector<128x512xf32>
      %c0_18 = arith.constant 0 : index
      %c0_19 = arith.constant 0 : index
      %23 = vector.load %arg7[%c0_18, %c0_19] : memref<128x512xf32, #tpu.memory_space<vmem>>, vector<128x512xf32>
      %c0_20 = arith.constant 0 : index
      %c0_21 = arith.constant 0 : index
      %24 = vector.load %arg8[%c0_20, %c0_21] : memref<1x512xf32, #tpu.memory_space<vmem>>, vector<1x512xf32>
      %c0_22 = arith.constant 0 : index
      %c0_23 = arith.constant 0 : index
      %c0_24 = arith.constant 0 : index
      %25 = vector.load %arg3[%c0_22, %c0_23, %c0_24] : memref<8x8x128xf32, #tpu.memory_space<vmem>>, vector<8x8x128xf32>
      %26 = vector.shape_cast %25 : vector<8x8x128xf32> to vector<64x128xf32>
      %cst_25 = arith.constant dense<0.000000e+00> : vector<64x512xf32>
      %27 = tpu.matmul %26, %22, %cst_25 {dimension_numbers = #tpu.dot_dimension_numbers<[1], [0], [0], [1], [0, 0, 1, 1], [], []>} : vector<64x128xf32>, vector<128x512xf32>, vector<64x512xf32> -> vector<64x512xf32>
      %28 = vector.broadcast %24 : vector<1x512xf32> to vector<64x512xf32>
      %29 = arith.addf %27, %28 : vector<64x512xf32>
      %c0_26 = arith.constant 0 : index
      %c0_27 = arith.constant 0 : index
      %30 = vector.load %arg14[%c0_26, %c0_27] : memref<8x128xf32, #tpu.memory_space<vmem>>, vector<8x128xf32>
      %c0_28 = arith.constant 0 : index
      %c0_29 = arith.constant 0 : index
      %31 = vector.load %arg15[%c0_28, %c0_29] : memref<8x128xf32, #tpu.memory_space<vmem>>, vector<8x128xf32>
      %32 = vector.extract_strided_slice %29 {offsets = [0, 0], sizes = [8, 512], strides = [1, 1]} : vector<64x512xf32> to vector<8x512xf32>
      %cst_30 = arith.constant dense<0.000000e+00> : vector<8x512xf32>
      %33 = tpu.matmul %30, %23, %cst_30 {dimension_numbers = #tpu.dot_dimension_numbers<[1], [0], [0], [1], [0, 0, 1, 1], [], []>} : vector<8x128xf32>, vector<128x512xf32>, vector<8x512xf32> -> vector<8x512xf32>
      %34 = arith.addf %32, %33 : vector<8x512xf32>
      %35 = vector.extract_strided_slice %34 {offsets = [0, 0], sizes = [8, 128], strides = [1, 1]} : vector<8x512xf32> to vector<8x128xf32>
      %cst_31 = arith.constant 5.000000e-01 : f32
      %36 = vector.broadcast %cst_31 : f32 to vector<8x128xf32>
      %37 = arith.mulf %36, %35 : vector<8x128xf32>
      %38 = math.tanh %37 : vector<8x128xf32>
      %cst_32 = arith.constant 1.000000e+00 : f32
      %39 = vector.broadcast %cst_32 : f32 to vector<8x128xf32>
      %40 = arith.addf %38, %39 : vector<8x128xf32>
      %cst_33 = arith.constant 5.000000e-01 : f32
      %41 = vector.broadcast %cst_33 : f32 to vector<8x128xf32>
      %42 = arith.mulf %41, %40 : vector<8x128xf32>
      %43 = vector.extract_strided_slice %34 {offsets = [0, 128], sizes = [8, 128], strides = [1, 1]} : vector<8x512xf32> to vector<8x128xf32>
      %cst_34 = arith.constant 5.000000e-01 : f32
      %44 = vector.broadcast %cst_34 : f32 to vector<8x128xf32>
      %45 = arith.mulf %44, %43 : vector<8x128xf32>
      %46 = math.tanh %45 : vector<8x128xf32>
      %cst_35 = arith.constant 1.000000e+00 : f32
      %47 = vector.broadcast %cst_35 : f32 to vector<8x128xf32>
      %48 = arith.addf %46, %47 : vector<8x128xf32>
      %cst_36 = arith.constant 5.000000e-01 : f32
      %49 = vector.broadcast %cst_36 : f32 to vector<8x128xf32>
      %50 = arith.mulf %49, %48 : vector<8x128xf32>
      %51 = vector.extract_strided_slice %34 {offsets = [0, 256], sizes = [8, 128], strides = [1, 1]} : vector<8x512xf32> to vector<8x128xf32>
      %52 = math.tanh %51 : vector<8x128xf32>
      %53 = vector.extract_strided_slice %34 {offsets = [0, 384], sizes = [8, 128], strides = [1, 1]} : vector<8x512xf32> to vector<8x128xf32>
      %cst_37 = arith.constant 5.000000e-01 : f32
      %54 = vector.broadcast %cst_37 : f32 to vector<8x128xf32>
      %55 = arith.mulf %54, %53 : vector<8x128xf32>
      %56 = math.tanh %55 : vector<8x128xf32>
      %cst_38 = arith.constant 1.000000e+00 : f32
      %57 = vector.broadcast %cst_38 : f32 to vector<8x128xf32>
      %58 = arith.addf %56, %57 : vector<8x128xf32>
      %cst_39 = arith.constant 5.000000e-01 : f32
      %59 = vector.broadcast %cst_39 : f32 to vector<8x128xf32>
      %60 = arith.mulf %59, %58 : vector<8x128xf32>
      %61 = arith.mulf %50, %31 : vector<8x128xf32>
      %62 = arith.mulf %42, %52 : vector<8x128xf32>
      %63 = arith.addf %61, %62 : vector<8x128xf32>
      %64 = math.tanh %63 : vector<8x128xf32>
      %65 = arith.mulf %60, %64 : vector<8x128xf32>
      %c0_40 = arith.constant 0 : index
      %c0_41 = arith.constant 0 : index
      %c0_42 = arith.constant 0 : index
      %66 = vector.load %arg16[%c0_40, %c0_41, %c0_42] : memref<8x8x128xf32, #tpu.memory_space<vmem>>, vector<1x8x128xf32>
      %67 = vector.shape_cast %66 : vector<1x8x128xf32> to vector<8x128xf32>
      %68 = vector.shape_cast %65 : vector<8x128xf32> to vector<1x8x128xf32>
      tpu.vector_store %arg16[%c0_40, %c0_41, %c0_42], %68 {strides = array<i32>} : memref<8x8x128xf32, #tpu.memory_space<vmem>>, vector<1x8x128xf32>,
      %69 = vector.extract_strided_slice %29 {offsets = [8, 0], sizes = [8, 512], strides = [1, 1]} : vector<64x512xf32> to vector<8x512xf32>
      %cst_43 = arith.constant dense<0.000000e+00> : vector<8x512xf32>
      %70 = tpu.matmul %65, %23, %cst_43 {dimension_numbers = #tpu.dot_dimension_numbers<[1], [0], [0], [1], [0, 0, 1, 1], [], []>} : vector<8x128xf32>, vector<128x512xf32>, vector<8x512xf32> -> vector<8x512xf32>
      %71 = arith.addf %69, %70 : vector<8x512xf32>
      %72 = vector.extract_strided_slice %71 {offsets = [0, 0], sizes = [8, 128], strides = [1, 1]} : vector<8x512xf32> to vector<8x128xf32>
      %cst_44 = arith.constant 5.000000e-01 : f32
      %73 = vector.broadcast %cst_44 : f32 to vector<8x128xf32>
      %74 = arith.mulf %73, %72 : vector<8x128xf32>
      %75 = math.tanh %74 : vector<8x128xf32>
      %cst_45 = arith.constant 1.000000e+00 : f32
      %76 = vector.broadcast %cst_45 : f32 to vector<8x128xf32>
      %77 = arith.addf %75, %76 : vector<8x128xf32>
      %cst_46 = arith.constant 5.000000e-01 : f32
      %78 = vector.broadcast %cst_46 : f32 to vector<8x128xf32>
      %79 = arith.mulf %78, %77 : vector<8x128xf32>
      %80 = vector.extract_strided_slice %71 {offsets = [0, 128], sizes = [8, 128], strides = [1, 1]} : vector<8x512xf32> to vector<8x128xf32>
      %cst_47 = arith.constant 5.000000e-01 : f32
      %81 = vector.broadcast %cst_47 : f32 to vector<8x128xf32>
      %82 = arith.mulf %81, %80 : vector<8x128xf32>
      %83 = math.tanh %82 : vector<8x128xf32>
      %cst_48 = arith.constant 1.000000e+00 : f32
      %84 = vector.broadcast %cst_48 : f32 to vector<8x128xf32>
      %85 = arith.addf %83, %84 : vector<8x128xf32>
      %cst_49 = arith.constant 5.000000e-01 : f32
      %86 = vector.broadcast %cst_49 : f32 to vector<8x128xf32>
      %87 = arith.mulf %86, %85 : vector<8x128xf32>
      %88 = vector.extract_strided_slice %71 {offsets = [0, 256], sizes = [8, 128], strides = [1, 1]} : vector<8x512xf32> to vector<8x128xf32>
      %89 = math.tanh %88 : vector<8x128xf32>
      %90 = vector.extract_strided_slice %71 {offsets = [0, 384], sizes = [8, 128], strides = [1, 1]} : vector<8x512xf32> to vector<8x128xf32>
      %cst_50 = arith.constant 5.000000e-01 : f32
      %91 = vector.broadcast %cst_50 : f32 to vector<8x128xf32>
      %92 = arith.mulf %91, %90 : vector<8x128xf32>
      %93 = math.tanh %92 : vector<8x128xf32>
      %cst_51 = arith.constant 1.000000e+00 : f32
      %94 = vector.broadcast %cst_51 : f32 to vector<8x128xf32>
      %95 = arith.addf %93, %94 : vector<8x128xf32>
      %cst_52 = arith.constant 5.000000e-01 : f32
      %96 = vector.broadcast %cst_52 : f32 to vector<8x128xf32>
      %97 = arith.mulf %96, %95 : vector<8x128xf32>
      %98 = arith.mulf %87, %63 : vector<8x128xf32>
      %99 = arith.mulf %79, %89 : vector<8x128xf32>
      %100 = arith.addf %98, %99 : vector<8x128xf32>
      %101 = math.tanh %100 : vector<8x128xf32>
      %102 = arith.mulf %97, %101 : vector<8x128xf32>
      %c1 = arith.constant 1 : index
      %c0_53 = arith.constant 0 : index
      %c0_54 = arith.constant 0 : index
      %103 = vector.load %arg16[%c1, %c0_53, %c0_54] : memref<8x8x128xf32, #tpu.memory_space<vmem>>, vector<1x8x128xf32>
      %104 = vector.shape_cast %103 : vector<1x8x128xf32> to vector<8x128xf32>
      %105 = vector.shape_cast %102 : vector<8x128xf32> to vector<1x8x128xf32>
      tpu.vector_store %arg16[%c1, %c0_53, %c0_54], %105 {strides = array<i32>} : memref<8x8x128xf32, #tpu.memory_space<vmem>>, vector<1x8x128xf32>,
      %106 = vector.extract_strided_slice %29 {offsets = [16, 0], sizes = [8, 512], strides = [1, 1]} : vector<64x512xf32> to vector<8x512xf32>
      %cst_55 = arith.constant dense<0.000000e+00> : vector<8x512xf32>
      %107 = tpu.matmul %102, %23, %cst_55 {dimension_numbers = #tpu.dot_dimension_numbers<[1], [0], [0], [1], [0, 0, 1, 1], [], []>} : vector<8x128xf32>, vector<128x512xf32>, vector<8x512xf32> -> vector<8x512xf32>
      %108 = arith.addf %106, %107 : vector<8x512xf32>
      %109 = vector.extract_strided_slice %108 {offsets = [0, 0], sizes = [8, 128], strides = [1, 1]} : vector<8x512xf32> to vector<8x128xf32>
      %cst_56 = arith.constant 5.000000e-01 : f32
      %110 = vector.broadcast %cst_56 : f32 to vector<8x128xf32>
      %111 = arith.mulf %110, %109 : vector<8x128xf32>
      %112 = math.tanh %111 : vector<8x128xf32>
      %cst_57 = arith.constant 1.000000e+00 : f32
      %113 = vector.broadcast %cst_57 : f32 to vector<8x128xf32>
      %114 = arith.addf %112, %113 : vector<8x128xf32>
      %cst_58 = arith.constant 5.000000e-01 : f32
      %115 = vector.broadcast %cst_58 : f32 to vector<8x128xf32>
      %116 = arith.mulf %115, %114 : vector<8x128xf32>
      %117 = vector.extract_strided_slice %108 {offsets = [0, 128], sizes = [8, 128], strides = [1, 1]} : vector<8x512xf32> to vector<8x128xf32>
      %cst_59 = arith.constant 5.000000e-01 : f32
      %118 = vector.broadcast %cst_59 : f32 to vector<8x128xf32>
      %119 = arith.mulf %118, %117 : vector<8x128xf32>
      %120 = math.tanh %119 : vector<8x128xf32>
      %cst_60 = arith.constant 1.000000e+00 : f32
      %121 = vector.broadcast %cst_60 : f32 to vector<8x128xf32>
      %122 = arith.addf %120, %121 : vector<8x128xf32>
      %cst_61 = arith.constant 5.000000e-01 : f32
      %123 = vector.broadcast %cst_61 : f32 to vector<8x128xf32>
      %124 = arith.mulf %123, %122 : vector<8x128xf32>
      %125 = vector.extract_strided_slice %108 {offsets = [0, 256], sizes = [8, 128], strides = [1, 1]} : vector<8x512xf32> to vector<8x128xf32>
      %126 = math.tanh %125 : vector<8x128xf32>
      %127 = vector.extract_strided_slice %108 {offsets = [0, 384], sizes = [8, 128], strides = [1, 1]} : vector<8x512xf32> to vector<8x128xf32>
      %cst_62 = arith.constant 5.000000e-01 : f32
      %128 = vector.broadcast %cst_62 : f32 to vector<8x128xf32>
      %129 = arith.mulf %128, %127 : vector<8x128xf32>
      %130 = math.tanh %129 : vector<8x128xf32>
      %cst_63 = arith.constant 1.000000e+00 : f32
      %131 = vector.broadcast %cst_63 : f32 to vector<8x128xf32>
      %132 = arith.addf %130, %131 : vector<8x128xf32>
      %cst_64 = arith.constant 5.000000e-01 : f32
      %133 = vector.broadcast %cst_64 : f32 to vector<8x128xf32>
      %134 = arith.mulf %133, %132 : vector<8x128xf32>
      %135 = arith.mulf %124, %100 : vector<8x128xf32>
      %136 = arith.mulf %116, %126 : vector<8x128xf32>
      %137 = arith.addf %135, %136 : vector<8x128xf32>
      %138 = math.tanh %137 : vector<8x128xf32>
      %139 = arith.mulf %134, %138 : vector<8x128xf32>
      %c2 = arith.constant 2 : index
      %c0_65 = arith.constant 0 : index
      %c0_66 = arith.constant 0 : index
      %140 = vector.load %arg16[%c2, %c0_65, %c0_66] : memref<8x8x128xf32, #tpu.memory_space<vmem>>, vector<1x8x128xf32>
      %141 = vector.shape_cast %140 : vector<1x8x128xf32> to vector<8x128xf32>
      %142 = vector.shape_cast %139 : vector<8x128xf32> to vector<1x8x128xf32>
      tpu.vector_store %arg16[%c2, %c0_65, %c0_66], %142 {strides = array<i32>} : memref<8x8x128xf32, #tpu.memory_space<vmem>>, vector<1x8x128xf32>,
      %143 = vector.extract_strided_slice %29 {offsets = [24, 0], sizes = [8, 512], strides = [1, 1]} : vector<64x512xf32> to vector<8x512xf32>
      %cst_67 = arith.constant dense<0.000000e+00> : vector<8x512xf32>
      %144 = tpu.matmul %139, %23, %cst_67 {dimension_numbers = #tpu.dot_dimension_numbers<[1], [0], [0], [1], [0, 0, 1, 1], [], []>} : vector<8x128xf32>, vector<128x512xf32>, vector<8x512xf32> -> vector<8x512xf32>
      %145 = arith.addf %143, %144 : vector<8x512xf32>
      %146 = vector.extract_strided_slice %145 {offsets = [0, 0], sizes = [8, 128], strides = [1, 1]} : vector<8x512xf32> to vector<8x128xf32>
      %cst_68 = arith.constant 5.000000e-01 : f32
      %147 = vector.broadcast %cst_68 : f32 to vector<8x128xf32>
      %148 = arith.mulf %147, %146 : vector<8x128xf32>
      %149 = math.tanh %148 : vector<8x128xf32>
      %cst_69 = arith.constant 1.000000e+00 : f32
      %150 = vector.broadcast %cst_69 : f32 to vector<8x128xf32>
      %151 = arith.addf %149, %150 : vector<8x128xf32>
      %cst_70 = arith.constant 5.000000e-01 : f32
      %152 = vector.broadcast %cst_70 : f32 to vector<8x128xf32>
      %153 = arith.mulf %152, %151 : vector<8x128xf32>
      %154 = vector.extract_strided_slice %145 {offsets = [0, 128], sizes = [8, 128], strides = [1, 1]} : vector<8x512xf32> to vector<8x128xf32>
      %cst_71 = arith.constant 5.000000e-01 : f32
      %155 = vector.broadcast %cst_71 : f32 to vector<8x128xf32>
      %156 = arith.mulf %155, %154 : vector<8x128xf32>
      %157 = math.tanh %156 : vector<8x128xf32>
      %cst_72 = arith.constant 1.000000e+00 : f32
      %158 = vector.broadcast %cst_72 : f32 to vector<8x128xf32>
      %159 = arith.addf %157, %158 : vector<8x128xf32>
      %cst_73 = arith.constant 5.000000e-01 : f32
      %160 = vector.broadcast %cst_73 : f32 to vector<8x128xf32>
      %161 = arith.mulf %160, %159 : vector<8x128xf32>
      %162 = vector.extract_strided_slice %145 {offsets = [0, 256], sizes = [8, 128], strides = [1, 1]} : vector<8x512xf32> to vector<8x128xf32>
      %163 = math.tanh %162 : vector<8x128xf32>
      %164 = vector.extract_strided_slice %145 {offsets = [0, 384], sizes = [8, 128], strides = [1, 1]} : vector<8x512xf32> to vector<8x128xf32>
      %cst_74 = arith.constant 5.000000e-01 : f32
      %165 = vector.broadcast %cst_74 : f32 to vector<8x128xf32>
      %166 = arith.mulf %165, %164 : vector<8x128xf32>
      %167 = math.tanh %166 : vector<8x128xf32>
      %cst_75 = arith.constant 1.000000e+00 : f32
      %168 = vector.broadcast %cst_75 : f32 to vector<8x128xf32>
      %169 = arith.addf %167, %168 : vector<8x128xf32>
      %cst_76 = arith.constant 5.000000e-01 : f32
      %170 = vector.broadcast %cst_76 : f32 to vector<8x128xf32>
      %171 = arith.mulf %170, %169 : vector<8x128xf32>
      %172 = arith.mulf %161, %137 : vector<8x128xf32>
      %173 = arith.mulf %153, %163 : vector<8x128xf32>
      %174 = arith.addf %172, %173 : vector<8x128xf32>
      %175 = math.tanh %174 : vector<8x128xf32>
      %176 = arith.mulf %171, %175 : vector<8x128xf32>
      %c3 = arith.constant 3 : index
      %c0_77 = arith.constant 0 : index
      %c0_78 = arith.constant 0 : index
      %177 = vector.load %arg16[%c3, %c0_77, %c0_78] : memref<8x8x128xf32, #tpu.memory_space<vmem>>, vector<1x8x128xf32>
      %178 = vector.shape_cast %177 : vector<1x8x128xf32> to vector<8x128xf32>
      %179 = vector.shape_cast %176 : vector<8x128xf32> to vector<1x8x128xf32>
      tpu.vector_store %arg16[%c3, %c0_77, %c0_78], %179 {strides = array<i32>} : memref<8x8x128xf32, #tpu.memory_space<vmem>>, vector<1x8x128xf32>,
      %180 = vector.extract_strided_slice %29 {offsets = [32, 0], sizes = [8, 512], strides = [1, 1]} : vector<64x512xf32> to vector<8x512xf32>
      %cst_79 = arith.constant dense<0.000000e+00> : vector<8x512xf32>
      %181 = tpu.matmul %176, %23, %cst_79 {dimension_numbers = #tpu.dot_dimension_numbers<[1], [0], [0], [1], [0, 0, 1, 1], [], []>} : vector<8x128xf32>, vector<128x512xf32>, vector<8x512xf32> -> vector<8x512xf32>
      %182 = arith.addf %180, %181 : vector<8x512xf32>
      %183 = vector.extract_strided_slice %182 {offsets = [0, 0], sizes = [8, 128], strides = [1, 1]} : vector<8x512xf32> to vector<8x128xf32>
      %cst_80 = arith.constant 5.000000e-01 : f32
      %184 = vector.broadcast %cst_80 : f32 to vector<8x128xf32>
      %185 = arith.mulf %184, %183 : vector<8x128xf32>
      %186 = math.tanh %185 : vector<8x128xf32>
      %cst_81 = arith.constant 1.000000e+00 : f32
      %187 = vector.broadcast %cst_81 : f32 to vector<8x128xf32>
      %188 = arith.addf %186, %187 : vector<8x128xf32>
      %cst_82 = arith.constant 5.000000e-01 : f32
      %189 = vector.broadcast %cst_82 : f32 to vector<8x128xf32>
      %190 = arith.mulf %189, %188 : vector<8x128xf32>
      %191 = vector.extract_strided_slice %182 {offsets = [0, 128], sizes = [8, 128], strides = [1, 1]} : vector<8x512xf32> to vector<8x128xf32>
      %cst_83 = arith.constant 5.000000e-01 : f32
      %192 = vector.broadcast %cst_83 : f32 to vector<8x128xf32>
      %193 = arith.mulf %192, %191 : vector<8x128xf32>
      %194 = math.tanh %193 : vector<8x128xf32>
      %cst_84 = arith.constant 1.000000e+00 : f32
      %195 = vector.broadcast %cst_84 : f32 to vector<8x128xf32>
      %196 = arith.addf %194, %195 : vector<8x128xf32>
      %cst_85 = arith.constant 5.000000e-01 : f32
      %197 = vector.broadcast %cst_85 : f32 to vector<8x128xf32>
      %198 = arith.mulf %197, %196 : vector<8x128xf32>
      %199 = vector.extract_strided_slice %182 {offsets = [0, 256], sizes = [8, 128], strides = [1, 1]} : vector<8x512xf32> to vector<8x128xf32>
      %200 = math.tanh %199 : vector<8x128xf32>
      %201 = vector.extract_strided_slice %182 {offsets = [0, 384], sizes = [8, 128], strides = [1, 1]} : vector<8x512xf32> to vector<8x128xf32>
      %cst_86 = arith.constant 5.000000e-01 : f32
      %202 = vector.broadcast %cst_86 : f32 to vector<8x128xf32>
      %203 = arith.mulf %202, %201 : vector<8x128xf32>
      %204 = math.tanh %203 : vector<8x128xf32>
      %cst_87 = arith.constant 1.000000e+00 : f32
      %205 = vector.broadcast %cst_87 : f32 to vector<8x128xf32>
      %206 = arith.addf %204, %205 : vector<8x128xf32>
      %cst_88 = arith.constant 5.000000e-01 : f32
      %207 = vector.broadcast %cst_88 : f32 to vector<8x128xf32>
      %208 = arith.mulf %207, %206 : vector<8x128xf32>
      %209 = arith.mulf %198, %174 : vector<8x128xf32>
      %210 = arith.mulf %190, %200 : vector<8x128xf32>
      %211 = arith.addf %209, %210 : vector<8x128xf32>
      %212 = math.tanh %211 : vector<8x128xf32>
      %213 = arith.mulf %208, %212 : vector<8x128xf32>
      %c4 = arith.constant 4 : index
      %c0_89 = arith.constant 0 : index
      %c0_90 = arith.constant 0 : index
      %214 = vector.load %arg16[%c4, %c0_89, %c0_90] : memref<8x8x128xf32, #tpu.memory_space<vmem>>, vector<1x8x128xf32>
      %215 = vector.shape_cast %214 : vector<1x8x128xf32> to vector<8x128xf32>
      %216 = vector.shape_cast %213 : vector<8x128xf32> to vector<1x8x128xf32>
      tpu.vector_store %arg16[%c4, %c0_89, %c0_90], %216 {strides = array<i32>} : memref<8x8x128xf32, #tpu.memory_space<vmem>>, vector<1x8x128xf32>,
      %217 = vector.extract_strided_slice %29 {offsets = [40, 0], sizes = [8, 512], strides = [1, 1]} : vector<64x512xf32> to vector<8x512xf32>
      %cst_91 = arith.constant dense<0.000000e+00> : vector<8x512xf32>
      %218 = tpu.matmul %213, %23, %cst_91 {dimension_numbers = #tpu.dot_dimension_numbers<[1], [0], [0], [1], [0, 0, 1, 1], [], []>} : vector<8x128xf32>, vector<128x512xf32>, vector<8x512xf32> -> vector<8x512xf32>
      %219 = arith.addf %217, %218 : vector<8x512xf32>
      %220 = vector.extract_strided_slice %219 {offsets = [0, 0], sizes = [8, 128], strides = [1, 1]} : vector<8x512xf32> to vector<8x128xf32>
      %cst_92 = arith.constant 5.000000e-01 : f32
      %221 = vector.broadcast %cst_92 : f32 to vector<8x128xf32>
      %222 = arith.mulf %221, %220 : vector<8x128xf32>
      %223 = math.tanh %222 : vector<8x128xf32>
      %cst_93 = arith.constant 1.000000e+00 : f32
      %224 = vector.broadcast %cst_93 : f32 to vector<8x128xf32>
      %225 = arith.addf %223, %224 : vector<8x128xf32>
      %cst_94 = arith.constant 5.000000e-01 : f32
      %226 = vector.broadcast %cst_94 : f32 to vector<8x128xf32>
      %227 = arith.mulf %226, %225 : vector<8x128xf32>
      %228 = vector.extract_strided_slice %219 {offsets = [0, 128], sizes = [8, 128], strides = [1, 1]} : vector<8x512xf32> to vector<8x128xf32>
      %cst_95 = arith.constant 5.000000e-01 : f32
      %229 = vector.broadcast %cst_95 : f32 to vector<8x128xf32>
      %230 = arith.mulf %229, %228 : vector<8x128xf32>
      %231 = math.tanh %230 : vector<8x128xf32>
      %cst_96 = arith.constant 1.000000e+00 : f32
      %232 = vector.broadcast %cst_96 : f32 to vector<8x128xf32>
      %233 = arith.addf %231, %232 : vector<8x128xf32>
      %cst_97 = arith.constant 5.000000e-01 : f32
      %234 = vector.broadcast %cst_97 : f32 to vector<8x128xf32>
      %235 = arith.mulf %234, %233 : vector<8x128xf32>
      %236 = vector.extract_strided_slice %219 {offsets = [0, 256], sizes = [8, 128], strides = [1, 1]} : vector<8x512xf32> to vector<8x128xf32>
      %237 = math.tanh %236 : vector<8x128xf32>
      %238 = vector.extract_strided_slice %219 {offsets = [0, 384], sizes = [8, 128], strides = [1, 1]} : vector<8x512xf32> to vector<8x128xf32>
      %cst_98 = arith.constant 5.000000e-01 : f32
      %239 = vector.broadcast %cst_98 : f32 to vector<8x128xf32>
      %240 = arith.mulf %239, %238 : vector<8x128xf32>
      %241 = math.tanh %240 : vector<8x128xf32>
      %cst_99 = arith.constant 1.000000e+00 : f32
      %242 = vector.broadcast %cst_99 : f32 to vector<8x128xf32>
      %243 = arith.addf %241, %242 : vector<8x128xf32>
      %cst_100 = arith.constant 5.000000e-01 : f32
      %244 = vector.broadcast %cst_100 : f32 to vector<8x128xf32>
      %245 = arith.mulf %244, %243 : vector<8x128xf32>
      %246 = arith.mulf %235, %211 : vector<8x128xf32>
      %247 = arith.mulf %227, %237 : vector<8x128xf32>
      %248 = arith.addf %246, %247 : vector<8x128xf32>
      %249 = math.tanh %248 : vector<8x128xf32>
      %250 = arith.mulf %245, %249 : vector<8x128xf32>
      %c5 = arith.constant 5 : index
      %c0_101 = arith.constant 0 : index
      %c0_102 = arith.constant 0 : index
      %251 = vector.load %arg16[%c5, %c0_101, %c0_102] : memref<8x8x128xf32, #tpu.memory_space<vmem>>, vector<1x8x128xf32>
      %252 = vector.shape_cast %251 : vector<1x8x128xf32> to vector<8x128xf32>
      %253 = vector.shape_cast %250 : vector<8x128xf32> to vector<1x8x128xf32>
      tpu.vector_store %arg16[%c5, %c0_101, %c0_102], %253 {strides = array<i32>} : memref<8x8x128xf32, #tpu.memory_space<vmem>>, vector<1x8x128xf32>,
      %254 = vector.extract_strided_slice %29 {offsets = [48, 0], sizes = [8, 512], strides = [1, 1]} : vector<64x512xf32> to vector<8x512xf32>
      %cst_103 = arith.constant dense<0.000000e+00> : vector<8x512xf32>
      %255 = tpu.matmul %250, %23, %cst_103 {dimension_numbers = #tpu.dot_dimension_numbers<[1], [0], [0], [1], [0, 0, 1, 1], [], []>} : vector<8x128xf32>, vector<128x512xf32>, vector<8x512xf32> -> vector<8x512xf32>
      %256 = arith.addf %254, %255 : vector<8x512xf32>
      %257 = vector.extract_strided_slice %256 {offsets = [0, 0], sizes = [8, 128], strides = [1, 1]} : vector<8x512xf32> to vector<8x128xf32>
      %cst_104 = arith.constant 5.000000e-01 : f32
      %258 = vector.broadcast %cst_104 : f32 to vector<8x128xf32>
      %259 = arith.mulf %258, %257 : vector<8x128xf32>
      %260 = math.tanh %259 : vector<8x128xf32>
      %cst_105 = arith.constant 1.000000e+00 : f32
      %261 = vector.broadcast %cst_105 : f32 to vector<8x128xf32>
      %262 = arith.addf %260, %261 : vector<8x128xf32>
      %cst_106 = arith.constant 5.000000e-01 : f32
      %263 = vector.broadcast %cst_106 : f32 to vector<8x128xf32>
      %264 = arith.mulf %263, %262 : vector<8x128xf32>
      %265 = vector.extract_strided_slice %256 {offsets = [0, 128], sizes = [8, 128], strides = [1, 1]} : vector<8x512xf32> to vector<8x128xf32>
      %cst_107 = arith.constant 5.000000e-01 : f32
      %266 = vector.broadcast %cst_107 : f32 to vector<8x128xf32>
      %267 = arith.mulf %266, %265 : vector<8x128xf32>
      %268 = math.tanh %267 : vector<8x128xf32>
      %cst_108 = arith.constant 1.000000e+00 : f32
      %269 = vector.broadcast %cst_108 : f32 to vector<8x128xf32>
      %270 = arith.addf %268, %269 : vector<8x128xf32>
      %cst_109 = arith.constant 5.000000e-01 : f32
      %271 = vector.broadcast %cst_109 : f32 to vector<8x128xf32>
      %272 = arith.mulf %271, %270 : vector<8x128xf32>
      %273 = vector.extract_strided_slice %256 {offsets = [0, 256], sizes = [8, 128], strides = [1, 1]} : vector<8x512xf32> to vector<8x128xf32>
      %274 = math.tanh %273 : vector<8x128xf32>
      %275 = vector.extract_strided_slice %256 {offsets = [0, 384], sizes = [8, 128], strides = [1, 1]} : vector<8x512xf32> to vector<8x128xf32>
      %cst_110 = arith.constant 5.000000e-01 : f32
      %276 = vector.broadcast %cst_110 : f32 to vector<8x128xf32>
      %277 = arith.mulf %276, %275 : vector<8x128xf32>
      %278 = math.tanh %277 : vector<8x128xf32>
      %cst_111 = arith.constant 1.000000e+00 : f32
      %279 = vector.broadcast %cst_111 : f32 to vector<8x128xf32>
      %280 = arith.addf %278, %279 : vector<8x128xf32>
      %cst_112 = arith.constant 5.000000e-01 : f32
      %281 = vector.broadcast %cst_112 : f32 to vector<8x128xf32>
      %282 = arith.mulf %281, %280 : vector<8x128xf32>
      %283 = arith.mulf %272, %248 : vector<8x128xf32>
      %284 = arith.mulf %264, %274 : vector<8x128xf32>
      %285 = arith.addf %283, %284 : vector<8x128xf32>
      %286 = math.tanh %285 : vector<8x128xf32>
      %287 = arith.mulf %282, %286 : vector<8x128xf32>
      %c6 = arith.constant 6 : index
      %c0_113 = arith.constant 0 : index
      %c0_114 = arith.constant 0 : index
      %288 = vector.load %arg16[%c6, %c0_113, %c0_114] : memref<8x8x128xf32, #tpu.memory_space<vmem>>, vector<1x8x128xf32>
      %289 = vector.shape_cast %288 : vector<1x8x128xf32> to vector<8x128xf32>
      %290 = vector.shape_cast %287 : vector<8x128xf32> to vector<1x8x128xf32>
      tpu.vector_store %arg16[%c6, %c0_113, %c0_114], %290 {strides = array<i32>} : memref<8x8x128xf32, #tpu.memory_space<vmem>>, vector<1x8x128xf32>,
      %291 = vector.extract_strided_slice %29 {offsets = [56, 0], sizes = [8, 512], strides = [1, 1]} : vector<64x512xf32> to vector<8x512xf32>
      %cst_115 = arith.constant dense<0.000000e+00> : vector<8x512xf32>
      %292 = tpu.matmul %287, %23, %cst_115 {dimension_numbers = #tpu.dot_dimension_numbers<[1], [0], [0], [1], [0, 0, 1, 1], [], []>} : vector<8x128xf32>, vector<128x512xf32>, vector<8x512xf32> -> vector<8x512xf32>
      %293 = arith.addf %291, %292 : vector<8x512xf32>
      %294 = vector.extract_strided_slice %293 {offsets = [0, 0], sizes = [8, 128], strides = [1, 1]} : vector<8x512xf32> to vector<8x128xf32>
      %cst_116 = arith.constant 5.000000e-01 : f32
      %295 = vector.broadcast %cst_116 : f32 to vector<8x128xf32>
      %296 = arith.mulf %295, %294 : vector<8x128xf32>
      %297 = math.tanh %296 : vector<8x128xf32>
      %cst_117 = arith.constant 1.000000e+00 : f32
      %298 = vector.broadcast %cst_117 : f32 to vector<8x128xf32>
      %299 = arith.addf %297, %298 : vector<8x128xf32>
      %cst_118 = arith.constant 5.000000e-01 : f32
      %300 = vector.broadcast %cst_118 : f32 to vector<8x128xf32>
      %301 = arith.mulf %300, %299 : vector<8x128xf32>
      %302 = vector.extract_strided_slice %293 {offsets = [0, 128], sizes = [8, 128], strides = [1, 1]} : vector<8x512xf32> to vector<8x128xf32>
      %cst_119 = arith.constant 5.000000e-01 : f32
      %303 = vector.broadcast %cst_119 : f32 to vector<8x128xf32>
      %304 = arith.mulf %303, %302 : vector<8x128xf32>
      %305 = math.tanh %304 : vector<8x128xf32>
      %cst_120 = arith.constant 1.000000e+00 : f32
      %306 = vector.broadcast %cst_120 : f32 to vector<8x128xf32>
      %307 = arith.addf %305, %306 : vector<8x128xf32>
      %cst_121 = arith.constant 5.000000e-01 : f32
      %308 = vector.broadcast %cst_121 : f32 to vector<8x128xf32>
      %309 = arith.mulf %308, %307 : vector<8x128xf32>
      %310 = vector.extract_strided_slice %293 {offsets = [0, 256], sizes = [8, 128], strides = [1, 1]} : vector<8x512xf32> to vector<8x128xf32>
      %311 = math.tanh %310 : vector<8x128xf32>
      %312 = vector.extract_strided_slice %293 {offsets = [0, 384], sizes = [8, 128], strides = [1, 1]} : vector<8x512xf32> to vector<8x128xf32>
      %cst_122 = arith.constant 5.000000e-01 : f32
      %313 = vector.broadcast %cst_122 : f32 to vector<8x128xf32>
      %314 = arith.mulf %313, %312 : vector<8x128xf32>
      %315 = math.tanh %314 : vector<8x128xf32>
      %cst_123 = arith.constant 1.000000e+00 : f32
      %316 = vector.broadcast %cst_123 : f32 to vector<8x128xf32>
      %317 = arith.addf %315, %316 : vector<8x128xf32>
      %cst_124 = arith.constant 5.000000e-01 : f32
      %318 = vector.broadcast %cst_124 : f32 to vector<8x128xf32>
      %319 = arith.mulf %318, %317 : vector<8x128xf32>
      %320 = arith.mulf %309, %285 : vector<8x128xf32>
      %321 = arith.mulf %301, %311 : vector<8x128xf32>
      %322 = arith.addf %320, %321 : vector<8x128xf32>
      %323 = math.tanh %322 : vector<8x128xf32>
      %324 = arith.mulf %319, %323 : vector<8x128xf32>
      %c7 = arith.constant 7 : index
      %c0_125 = arith.constant 0 : index
      %c0_126 = arith.constant 0 : index
      %325 = vector.load %arg16[%c7, %c0_125, %c0_126] : memref<8x8x128xf32, #tpu.memory_space<vmem>>, vector<1x8x128xf32>
      %326 = vector.shape_cast %325 : vector<1x8x128xf32> to vector<8x128xf32>
      %327 = vector.shape_cast %324 : vector<8x128xf32> to vector<1x8x128xf32>
      tpu.vector_store %arg16[%c7, %c0_125, %c0_126], %327 {strides = array<i32>} : memref<8x8x128xf32, #tpu.memory_space<vmem>>, vector<1x8x128xf32>,
      %c0_127 = arith.constant 0 : index
      %c0_128 = arith.constant 0 : index
      %328 = vector.load %arg14[%c0_127, %c0_128] : memref<8x128xf32, #tpu.memory_space<vmem>>, vector<8x128xf32>
      tpu.vector_store %arg14[%c0_127, %c0_128], %324 {strides = array<i32>} : memref<8x128xf32, #tpu.memory_space<vmem>>, vector<8x128xf32>,
      %c0_129 = arith.constant 0 : index
      %c0_130 = arith.constant 0 : index
      %329 = vector.load %arg15[%c0_129, %c0_130] : memref<8x128xf32, #tpu.memory_space<vmem>>, vector<8x128xf32>
      tpu.vector_store %arg15[%c0_129, %c0_130], %322 {strides = array<i32>} : memref<8x128xf32, #tpu.memory_space<vmem>>, vector<8x128xf32>,
    } else {
    }
    %c0_i32_4 = arith.constant 0 : i32
    %8 = arith.cmpi eq, %arg2, %c0_i32_4 : i32
    %c0_i32_5 = arith.constant 0 : i32
    %9 = arith.cmpi eq, %arg1, %c0_i32_5 : i32
    %10 = arith.andi %8, %9 : i1
    %11 = arith.extui %10 : i1 to i32
    %c0_i32_6 = arith.constant 0 : i32
    %12 = arith.cmpi ne, %11, %c0_i32_6 : i32
    scf.if %12 {
      %c0_16 = arith.constant 0 : index
      %c0_17 = arith.constant 0 : index
      %22 = vector.load %arg14[%c0_16, %c0_17] : memref<8x128xf32, #tpu.memory_space<vmem>>, vector<8x128xf32>
      %c0_18 = arith.constant 0 : index
      %c0_19 = arith.constant 0 : index
      %c0_20 = arith.constant 0 : index
      %23 = vector.load %arg12[%c0_18, %c0_19, %c0_20] : memref<1x8x128xf32, #tpu.memory_space<vmem>>, vector<1x8x128xf32>
      %24 = vector.shape_cast %23 : vector<1x8x128xf32> to vector<8x128xf32>
      %25 = vector.shape_cast %22 : vector<8x128xf32> to vector<1x8x128xf32>
      tpu.vector_store %arg12[%c0_18, %c0_19, %c0_20], %25 {strides = array<i32>} : memref<1x8x128xf32, #tpu.memory_space<vmem>>, vector<1x8x128xf32>,
      %c0_21 = arith.constant 0 : index
      %c0_22 = arith.constant 0 : index
      %26 = vector.load %arg15[%c0_21, %c0_22] : memref<8x128xf32, #tpu.memory_space<vmem>>, vector<8x128xf32>
      %c0_23 = arith.constant 0 : index
      %c0_24 = arith.constant 0 : index
      %c0_25 = arith.constant 0 : index
      %27 = vector.load %arg13[%c0_23, %c0_24, %c0_25] : memref<1x8x128xf32, #tpu.memory_space<vmem>>, vector<1x8x128xf32>
      %28 = vector.shape_cast %27 : vector<1x8x128xf32> to vector<8x128xf32>
      %29 = vector.shape_cast %26 : vector<8x128xf32> to vector<1x8x128xf32>
      tpu.vector_store %arg13[%c0_23, %c0_24, %c0_25], %29 {strides = array<i32>} : memref<1x8x128xf32, #tpu.memory_space<vmem>>, vector<1x8x128xf32>,
    } else {
    }
    %c0 = arith.constant 0 : index
    %c0_7 = arith.constant 0 : index
    %c0_8 = arith.constant 0 : index
    %13 = vector.load %arg16[%c0, %c0_7, %c0_8] : memref<8x8x128xf32, #tpu.memory_space<vmem>>, vector<8x8x128xf32>
    %14 = vector.shape_cast %13 : vector<8x8x128xf32> to vector<64x128xf32>
    %c0_9 = arith.constant 0 : index
    %c0_10 = arith.constant 0 : index
    %15 = vector.load %arg9[%c0_9, %c0_10] : memref<128x128xf32, #tpu.memory_space<vmem>>, vector<128x128xf32>
    %cst = arith.constant dense<0.000000e+00> : vector<64x128xf32>
    %16 = tpu.matmul %14, %15, %cst {dimension_numbers = #tpu.dot_dimension_numbers<[1], [0], [0], [1], [0, 0, 1, 1], [], []>} : vector<64x128xf32>, vector<128x128xf32>, vector<64x128xf32> -> vector<64x128xf32>
    %c0_11 = arith.constant 0 : index
    %c0_12 = arith.constant 0 : index
    %17 = vector.load %arg10[%c0_11, %c0_12] : memref<1x128xf32, #tpu.memory_space<vmem>>, vector<1x128xf32>
    %18 = vector.broadcast %17 : vector<1x128xf32> to vector<64x128xf32>
    %19 = arith.addf %16, %18 : vector<64x128xf32>
    %20 = vector.shape_cast %19 : vector<64x128xf32> to vector<8x8x128xf32>
    %c0_13 = arith.constant 0 : index
    %c0_14 = arith.constant 0 : index
    %c0_15 = arith.constant 0 : index
    %21 = vector.load %arg11[%c0_13, %c0_14, %c0_15] : memref<8x8x128xf32, #tpu.memory_space<vmem>>, vector<8x8x128xf32>
    tpu.vector_store %arg11[%c0_13, %c0_14, %c0_15], %20 {strides = array<i32>} : memref<8x8x128xf32, #tpu.memory_space<vmem>>, vector<8x8x128xf32>,
    return
  }
  func.func @transform_0(%arg0: i32, %arg1: i32, %arg2: i32) -> (i32, i32, i32) {
    %c0_i32 = arith.constant 0 : i32
    %c0_i32_0 = arith.constant 0 : i32
    return %arg1, %arg0, %c0_i32 : i32, i32, i32
  }
  func.func @transform_1(%arg0: i32, %arg1: i32, %arg2: i32) -> (i32, i32, i32) {
    %c0_i32 = arith.constant 0 : i32
    %c0_i32_0 = arith.constant 0 : i32
    %c0_i32_1 = arith.constant 0 : i32
    return %c0_i32, %arg0, %c0_i32_0 : i32, i32, i32
  }
  func.func @transform_2(%arg0: i32, %arg1: i32, %arg2: i32) -> (i32, i32, i32) {
    %c0_i32 = arith.constant 0 : i32
    %c0_i32_0 = arith.constant 0 : i32
    %c0_i32_1 = arith.constant 0 : i32
    return %c0_i32, %arg0, %c0_i32_0 : i32, i32, i32
  }
  func.func @transform_3(%arg0: i32, %arg1: i32, %arg2: i32) -> (i32, i32) {
    %c0_i32 = arith.constant 0 : i32
    %c0_i32_0 = arith.constant 0 : i32
    %c0_i32_1 = arith.constant 0 : i32
    return %c0_i32, %c0_i32_0 : i32, i32
  }
  func.func @transform_4(%arg0: i32, %arg1: i32, %arg2: i32) -> (i32, i32) {
    %c0_i32 = arith.constant 0 : i32
    %c0_i32_0 = arith.constant 0 : i32
    %c0_i32_1 = arith.constant 0 : i32
    return %c0_i32, %c0_i32_0 : i32, i32
  }
  func.func @transform_5(%arg0: i32, %arg1: i32, %arg2: i32) -> (i32, i32) {
    %c0_i32 = arith.constant 0 : i32
    %c0_i32_0 = arith.constant 0 : i32
    %c0_i32_1 = arith.constant 0 : i32
    return %c0_i32, %c0_i32_0 : i32, i32
  }
  func.func @transform_6(%arg0: i32, %arg1: i32, %arg2: i32) -> (i32, i32) {
    %c0_i32 = arith.constant 0 : i32
    %c0_i32_0 = arith.constant 0 : i32
    return %c0_i32, %arg2 : i32, i32
  }
  func.func @transform_7(%arg0: i32, %arg1: i32, %arg2: i32) -> (i32, i32) {
    %c0_i32 = arith.constant 0 : i32
    %c0_i32_0 = arith.constant 0 : i32
    return %c0_i32, %arg2 : i32, i32
  }
  func.func @transform_8(%arg0: i32, %arg1: i32, %arg2: i32) -> (i32, i32, i32) {
    %c0_i32 = arith.constant 0 : i32
    return %arg1, %arg0, %arg2 : i32, i32, i32
  }
  func.func @transform_9(%arg0: i32, %arg1: i32, %arg2: i32) -> (i32, i32, i32) {
    %c0_i32 = arith.constant 0 : i32
    %c0_i32_0 = arith.constant 0 : i32
    %c0_i32_1 = arith.constant 0 : i32
    return %c0_i32, %arg0, %c0_i32_0 : i32, i32, i32
  }
  func.func @transform_10(%arg0: i32, %arg1: i32, %arg2: i32) -> (i32, i32, i32) {
    %c0_i32 = arith.constant 0 : i32
    %c0_i32_0 = arith.constant 0 : i32
    %c0_i32_1 = arith.constant 0 : i32
    return %c0_i32, %arg0, %c0_i32_0 : i32, i32, i32
  }
}

</mosaic_0001>

<llo_original>
// kernel: tpu_custom_call.1
$region0: #{tpu_custom_call.1}
  #allocation0 [shape = 'u32[]', space=smem, size = 0x4, offset = 0x4, fixed_abs, tag = 'smem constant byte address 0x4 - core index']
  #allocation1 [shape = 'u32[72,128]{1,0:T(1,128)}', space=vmem, size = 0x9000, scoped, tag = 'internal scratch']
  #allocation2 [shape = 'f32[8,128]{1,0:T(8,128)}', space=vmem, size = 0x1000, scoped, tag = 'scratch operand']
  #allocation3 [shape = 'f32[8,128]{1,0:T(8,128)}', space=vmem, size = 0x1000, scoped, tag = 'scratch operand']
  #allocation4 [shape = 'f32[8,8,128]{2,1,0:T(8,128)}', space=vmem, size = 0x8000, scoped, tag = 'scratch operand']
  %s0 = inlined_call_operand.hbm [shape: f32[8,8,128], index: 0, kind: input, shape index: {}]
  %s1 = inlined_call_operand.hbm [shape: f32[1,8,128], index: 1, kind: input, shape index: {}]
  %s2 = inlined_call_operand.hbm [shape: f32[1,8,128], index: 2, kind: input, shape index: {}]
  %s3 = inlined_call_operand.hbm [shape: f32[128,512], index: 3, kind: input, shape index: {}]
  %s4 = inlined_call_operand.hbm [shape: f32[128,512], index: 4, kind: input, shape index: {}]
  %s5 = inlined_call_operand.vmem [shape: f32[1,512], index: 5, kind: input, shape index: {}]
  %s6 = inlined_call_operand.hbm [shape: f32[128,128], index: 6, kind: input, shape index: {}]
  %s7 = inlined_call_operand.vmem [shape: f32[1,128], index: 7, kind: input, shape index: {}]
  %s8 = inlined_call_operand.hbm [shape: f32[8,8,128], index: 8, kind: output, shape index: {0}]
  %s9 = inlined_call_operand.hbm [shape: f32[1,8,128], index: 9, kind: output, shape index: {1}]
  %s10 = inlined_call_operand.hbm [shape: f32[1,8,128], index: 10, kind: output, shape index: {2}]
  %11 = xla_tuple %s8, %s9, %s10
  %s12 = sld [smem:[#allocation0]]
  $region94: #{tpu_custom_call.1} parent=0
    _
  %s14 = ssub.s32 1, %s12
  %s15 = scalar_select 0, %s14, %s12
  $region1: #{tpu_custom_call.1} parent=0
    #allocation5 [shape = 'u8[32768]{0}', space=vmem, size = 0x8000, scoped, tag = 'input window, operand 0, single buffered']
    #allocation6 [shape = 's32[1]{0}', space=sflag, size = 0x4, scoped, tag = 'scoped memory for tpu_custom_call.1']
    #allocation7 [shape = 's32[1]{0}', space=sflag, size = 0x4, scoped, tag = 'scoped memory for tpu_custom_call.1']
    #allocation8 [shape = 'u8[4096]{0}', space=vmem, size = 0x1000, scoped, tag = 'input window, operand 1, single buffered']
    #allocation9 [shape = 's32[1]{0}', space=sflag, size = 0x4, scoped, tag = 'scoped memory for tpu_custom_call.1']
    #allocation10 [shape = 'u8[4096]{0}', space=vmem, size = 0x1000, scoped, tag = 'input window, operand 2, single buffered']
    #allocation11 [shape = 'u8[262144]{0}', space=vmem, size = 0x40000, scoped, tag = 'input window, operand 3, single buffered']
    #allocation12 [shape = 's32[1]{0}', space=sflag, size = 0x4, scoped, tag = 'scoped memory for tpu_custom_call.1']
    #allocation13 [shape = 'u8[262144]{0}', space=vmem, size = 0x40000, scoped, tag = 'input window, operand 4, single buffered']
    #allocation14 [shape = 'u8[65536]{0}', space=vmem, size = 0x10000, scoped, tag = 'input window, operand 6, single buffered']
    #allocation15 [shape = 's32[1]{0}', space=sflag, size = 0x4, scoped, tag = 'scoped memory for tpu_custom_call.1']
    #allocation16 [shape = 'u8[32768]{0}', space=vmem, size = 0x8000, scoped, tag = 'output window, operand 0, single buffered']
    #allocation17 [shape = 'u8[4096]{0}', space=vmem, size = 0x1000, scoped, tag = 'output window, operand 1, single buffered']
    #allocation18 [shape = 's32[1]{0}', space=sflag, size = 0x4, scoped, tag = 'scoped memory for tpu_custom_call.1']
    #allocation19 [shape = 'u8[4096]{0}', space=vmem, size = 0x1000, scoped, tag = 'output window, operand 2, single buffered']
    %16 = vsyncpa [#allocation6], 0
    %17 = vsyncpa [#allocation9], 0
    %18 = vsyncpa [#allocation12], 0
    %19 = vsyncpa [#allocation15], 0
    %20 = vsyncpa [#allocation7], 0
    %21 = vsyncpa [#allocation18], 0
    // Predicated region
    $region2: #{tpu_custom_call.1} parent=1 // pred_check
      _
    $region3: #{tpu_custom_call.1} parent=1 // pred_check_branch
      %23 = sbr.rel (0) target = $region5
    $region4: #{tpu_custom_call.1} parent=1 // pred_region
      %25 = vsyncadd [#allocation6], 0
      %s26 = sshll.u32 %s0, 4
      %s27 = int_to_ptr.hbm [resolvable:$true] %s26
      %s28 = sshll.u32 [#allocation5], 4
      %s29 = int_to_ptr.vmem [resolvable:$true] %s28
      %34 = dma.hbm_to_vmem [thread:$0]  %s27, 1024, %s29, [#allocation6], 128, 128, 8
    $region5: #{tpu_custom_call.1} parent=1 // pred_fallthru
      _
    // Predicated region
    $region6: #{tpu_custom_call.1} parent=1 // pred_check
      _
    $region7: #{tpu_custom_call.1} parent=1 // pred_check_branch
      %36 = sbr.rel (0) target = $region9
    $region8: #{tpu_custom_call.1} parent=1 // pred_region
      %38 = vsyncadd [#allocation9], 0
      %s40 = sshll.u32 %s1, 4
      %s41 = int_to_ptr.hbm [resolvable:$true] %s40
      %s42 = sshll.u32 [#allocation8], 4
      %s43 = int_to_ptr.vmem [resolvable:$true] %s42
      %45 = dma.hbm_to_vmem [thread:$0]  %s41, 128, %s43, [#allocation9]
    $region9: #{tpu_custom_call.1} parent=1 // pred_fallthru
      _
    // Predicated region
    $region10: #{tpu_custom_call.1} parent=1 // pred_check
      _
    $region11: #{tpu_custom_call.1} parent=1 // pred_check_branch
      %47 = sbr.rel (0) target = $region13
    $region12: #{tpu_custom_call.1} parent=1 // pred_region
      %49 = vsyncadd [#allocation9], 0
      %s51 = sshll.u32 %s2, 4
      %s52 = int_to_ptr.hbm [resolvable:$true] %s51
      %s53 = sshll.u32 [#allocation10], 4
      %s54 = int_to_ptr.vmem [resolvable:$true] %s53
      %56 = dma.hbm_to_vmem [thread:$0]  %s52, 128, %s54, [#allocation9]
    $region13: #{tpu_custom_call.1} parent=1 // pred_fallthru
      _
    // Predicated region
    $region14: #{tpu_custom_call.1} parent=1 // pred_check
      _
    $region15: #{tpu_custom_call.1} parent=1 // pred_check_branch
      %58 = sbr.rel (0) target = $region17
    $region16: #{tpu_custom_call.1} parent=1 // pred_region
      %60 = vsyncadd [#allocation12], 0
      %s61 = sshll.u32 %s3, 4
      %s62 = int_to_ptr.hbm [resolvable:$true] %s61
      %s63 = sshll.u32 [#allocation11], 4
      %s64 = int_to_ptr.vmem [resolvable:$true] %s63
      %69 = dma.hbm_to_vmem [thread:$0]  %s62, 8192, %s64, [#allocation12], 512, 512, 32
    $region17: #{tpu_custom_call.1} parent=1 // pred_fallthru
      _
    // Predicated region
    $region18: #{tpu_custom_call.1} parent=1 // pred_check
      _
    $region19: #{tpu_custom_call.1} parent=1 // pred_check_branch
      %71 = sbr.rel (0) target = $region21
    $region20: #{tpu_custom_call.1} parent=1 // pred_region
      %73 = vsyncadd [#allocation12], 0
      %s74 = sshll.u32 %s4, 4
      %s75 = int_to_ptr.hbm [resolvable:$true] %s74
      %s76 = sshll.u32 [#allocation13], 4
      %s77 = int_to_ptr.vmem [resolvable:$true] %s76
      %82 = dma.hbm_to_vmem [thread:$0]  %s75, 8192, %s77, [#allocation12], 512, 512, 32
    $region21: #{tpu_custom_call.1} parent=1 // pred_fallthru
      _
    // Predicated region
    $region22: #{tpu_custom_call.1} parent=1 // pred_check
      _
    $region23: #{tpu_custom_call.1} parent=1 // pred_check_branch
      %84 = sbr.rel (0) target = $region25
    $region24: #{tpu_custom_call.1} parent=1 // pred_region
      _
    $region25: #{tpu_custom_call.1} parent=1 // pred_fallthru
      _
    // Predicated region
    $region26: #{tpu_custom_call.1} parent=1 // pred_check
      _
    $region27: #{tpu_custom_call.1} parent=1 // pred_check_branch
      %86 = sbr.rel (0) target = $region29
    $region28: #{tpu_custom_call.1} parent=1 // pred_region
      %88 = vsyncadd [#allocation15], 0
      %s89 = sshll.u32 %s6, 4
      %s90 = int_to_ptr.hbm [resolvable:$true] %s89
      %s91 = sshll.u32 [#allocation14], 4
      %s92 = int_to_ptr.vmem [resolvable:$true] %s91
      %97 = dma.hbm_to_vmem [thread:$0]  %s90, 2048, %s92, [#allocation15], 128, 128, 8
    $region29: #{tpu_custom_call.1} parent=1 // pred_fallthru
      _
    // Predicated region
    $region30: #{tpu_custom_call.1} parent=1 // pred_check
      _
    $region31: #{tpu_custom_call.1} parent=1 // pred_check_branch
      %99 = sbr.rel (0) target = $region33
    $region32: #{tpu_custom_call.1} parent=1 // pred_region
      _
    $region33: #{tpu_custom_call.1} parent=1 // pred_fallthru
      _
    // Predicated region
    $region34: #{tpu_custom_call.1} parent=1 // pred_check
      _
    $region35: #{tpu_custom_call.1} parent=1 // pred_check_branch
      %101 = sbr.rel (0) target = $region37
    $region36: #{tpu_custom_call.1} parent=1 // pred_region
      %103 = dma.done [#allocation6], 1024
    $region37: #{tpu_custom_call.1} parent=1 // pred_fallthru
      _
    // Predicated region
    $region38: #{tpu_custom_call.1} parent=1 // pred_check
      _
    $region39: #{tpu_custom_call.1} parent=1 // pred_check_branch
      %105 = sbr.rel (0) target = $region41
    $region40: #{tpu_custom_call.1} parent=1 // pred_region
      %107 = dma.done [#allocation9], 128
    $region41: #{tpu_custom_call.1} parent=1 // pred_fallthru
      _
    // Predicated region
    $region42: #{tpu_custom_call.1} parent=1 // pred_check
      _
    $region43: #{tpu_custom_call.1} parent=1 // pred_check_branch
      %109 = sbr.rel (0) target = $region45
    $region44: #{tpu_custom_call.1} parent=1 // pred_region
      %111 = dma.done [#allocation9], 128
    $region45: #{tpu_custom_call.1} parent=1 // pred_fallthru
      _
    // Predicated region
    $region46: #{tpu_custom_call.1} parent=1 // pred_check
      _
    $region47: #{tpu_custom_call.1} parent=1 // pred_check_branch
      %113 = sbr.rel (0) target = $region49
    $region48: #{tpu_custom_call.1} parent=1 // pred_region
      %115 = dma.done [#allocation12], 8192
    $region49: #{tpu_custom_call.1} parent=1 // pred_fallthru
      _
    // Predicated region
    $region50: #{tpu_custom_call.1} parent=1 // pred_check
      _
    $region51: #{tpu_custom_call.1} parent=1 // pred_check_branch
      %117 = sbr.rel (0) target = $region53
    $region52: #{tpu_custom_call.1} parent=1 // pred_region
      %119 = dma.done [#allocation12], 8192
    $region53: #{tpu_custom_call.1} parent=1 // pred_fallthru
      _
    // Predicated region
    $region54: #{tpu_custom_call.1} parent=1 // pred_check
      _
    $region55: #{tpu_custom_call.1} parent=1 // pred_check_branch
      %121 = sbr.rel (0) target = $region57
    $region56: #{tpu_custom_call.1} parent=1 // pred_region
      %123 = dma.done [#allocation15], 2048
    $region57: #{tpu_custom_call.1} parent=1 // pred_fallthru
      _
    %p124 = scmp.eq.s32.totalorder 0, 0
    %p125 = scmp.eq.s32.totalorder 0, 0
    %p126 = pnand %p124, %p125
    %p127 = pneg %p126
    // Predicated region
    $region58: #{tpu_custom_call.1} parent=1 // pred_check
      _
    $region59: #{tpu_custom_call.1} parent=1 // pred_check_branch
      %129 = sbr.rel (%p126) target = $region61
    $region60: #{tpu_custom_call.1} parent=1 // pred_region
      %v130 = vld [vmem:[#allocation8] sm:$0xff]
      %131 = vst [vmem:[#allocation2] sm:$0xff] %v130
      %v132 = vld [vmem:[#allocation10] sm:$0xff]
      %133 = vst [vmem:[#allocation3] sm:$0xff] %v132
    $region61: #{tpu_custom_call.1} parent=1 // pred_fallthru
      _
    // Predicated region
    $region62: #{tpu_custom_call.1} parent=1 // pred_check
      %p134 = pneg %p125
    $region63: #{tpu_custom_call.1} parent=1 // pred_check_branch
      %136 = sbr.rel (%p134) target = $region65
    $region64: #{tpu_custom_call.1} parent=1 // pred_region
      %v137 = vld [vmem:[#allocation11] sm:$0xff]
      %v138 = vld [vmem:[#allocation11 + $0x8] sm:$0xff]
      %v139 = vld [vmem:[#allocation11 + $0x10] sm:$0xff]
      %v140 = vld [vmem:[#allocation11 + $0x18] sm:$0xff]
      %v141 = vld [vmem:[#allocation11 + $0x20] sm:$0xff]
      %v142 = vld [vmem:[#allocation11 + $0x28] sm:$0xff]
      %v143 = vld [vmem:[#allocation11 + $0x30] sm:$0xff]
      %v144 = vld [vmem:[#allocation11 + $0x38] sm:$0xff]
      %v145 = vld [vmem:[#allocation11 + $0x40] sm:$0xff]
      %v146 = vld [vmem:[#allocation11 + $0x48] sm:$0xff]
      %v147 = vld [vmem:[#allocation11 + $0x50] sm:$0xff]
      %v148 = vld [vmem:[#allocation11 + $0x58] sm:$0xff]
      %v149 = vld [vmem:[#allocation11 + $0x60] sm:$0xff]
      %v150 = vld [vmem:[#allocation11 + $0x68] sm:$0xff]
      %v151 = vld [vmem:[#allocation11 + $0x70] sm:$0xff]
      %v152 = vld [vmem:[#allocation11 + $0x78] sm:$0xff]
      %v153 = vld [vmem:[#allocation11 + $0x80] sm:$0xff]
      %v154 = vld [vmem:[#allocation11 + $0x88] sm:$0xff]
      %v155 = vld [vmem:[#allocation11 + $0x90] sm:$0xff]
      %v156 = vld [vmem:[#allocation11 + $0x98] sm:$0xff]
      %v157 = vld [vmem:[#allocation11 + $0xa0] sm:$0xff]
      %v158 = vld [vmem:[#allocation11 + $0xa8] sm:$0xff]
      %v159 = vld [vmem:[#allocation11 + $0xb0] sm:$0xff]
      %v160 = vld [vmem:[#allocation11 + $0xb8] sm:$0xff]
      %v161 = vld [vmem:[#allocation11 + $0xc0] sm:$0xff]
      %v162 = vld [vmem:[#allocation11 + $0xc8] sm:$0xff]
      %v163 = vld [vmem:[#allocation11 + $0xd0] sm:$0xff]
      %v164 = vld [vmem:[#allocation11 + $0xd8] sm:$0xff]
      %v165 = vld [vmem:[#allocation11 + $0xe0] sm:$0xff]
      %v166 = vld [vmem:[#allocation11 + $0xe8] sm:$0xff]
      %v167 = vld [vmem:[#allocation11 + $0xf0] sm:$0xff]
      %v168 = vld [vmem:[#allocation11 + $0xf8] sm:$0xff]
      %v169 = vld [vmem:[#allocation11 + $0x100] sm:$0xff]
      %v170 = vld [vmem:[#allocation11 + $0x108] sm:$0xff]
      %v171 = vld [vmem:[#allocation11 + $0x110] sm:$0xff]
      %v172 = vld [vmem:[#allocation11 + $0x118] sm:$0xff]
      %v173 = vld [vmem:[#allocation11 + $0x120] sm:$0xff]
      %v174 = vld [vmem:[#allocation11 + $0x128] sm:$0xff]
      %v175 = vld [vmem:[#allocation11 + $0x130] sm:$0xff]
      %v176 = vld [vmem:[#allocation11 + $0x138] sm:$0xff]
      %v177 = vld [vmem:[#allocation11 + $0x140] sm:$0xff]
      %v178 = vld [vmem:[#allocation11 + $0x148] sm:$0xff]
      %v179 = vld [vmem:[#allocation11 + $0x150] sm:$0xff]
      %v180 = vld [vmem:[#allocation11 + $0x158] sm:$0xff]
      %v181 = vld [vmem:[#allocation11 + $0x160] sm:$0xff]
      %v182 = vld [vmem:[#allocation11 + $0x168] sm:$0xff]
      %v183 = vld [vmem:[#allocation11 + $0x170] sm:$0xff]
      %v184 = vld [vmem:[#allocation11 + $0x178] sm:$0xff]
      %v185 = vld [vmem:[#allocation11 + $0x180] sm:$0xff]
      %v186 = vld [vmem:[#allocation11 + $0x188] sm:$0xff]
      %v187 = vld [vmem:[#allocation11 + $0x190] sm:$0xff]
      %v188 = vld [vmem:[#allocation11 + $0x198] sm:$0xff]
      %v189 = vld [vmem:[#allocation11 + $0x1a0] sm:$0xff]
      %v190 = vld [vmem:[#allocation11 + $0x1a8] sm:$0xff]
      %v191 = vld [vmem:[#allocation11 + $0x1b0] sm:$0xff]
      %v192 = vld [vmem:[#allocation11 + $0x1b8] sm:$0xff]
      %v193 = vld [vmem:[#allocation11 + $0x1c0] sm:$0xff]
      %v194 = vld [vmem:[#allocation11 + $0x1c8] sm:$0xff]
      %v195 = vld [vmem:[#allocation11 + $0x1d0] sm:$0xff]
      %v196 = vld [vmem:[#allocation11 + $0x1d8] sm:$0xff]
      %v197 = vld [vmem:[#allocation11 + $0x1e0] sm:$0xff]
      %v198 = vld [vmem:[#allocation11 + $0x1e8] sm:$0xff]
      %v199 = vld [vmem:[#allocation11 + $0x1f0] sm:$0xff]
      %v200 = vld [vmem:[#allocation11 + $0x1f8] sm:$0xff]
      %v201 = vld [vmem:[#allocation13] sm:$0xff]
      %v202 = vld [vmem:[#allocation13 + $0x8] sm:$0xff]
      %v203 = vld [vmem:[#allocation13 + $0x10] sm:$0xff]
      %v204 = vld [vmem:[#allocation13 + $0x18] sm:$0xff]
      %v205 = vld [vmem:[#allocation13 + $0x20] sm:$0xff]
      %v206 = vld [vmem:[#allocation13 + $0x28] sm:$0xff]
      %v207 = vld [vmem:[#allocation13 + $0x30] sm:$0xff]
      %v208 = vld [vmem:[#allocation13 + $0x38] sm:$0xff]
      %v209 = vld [vmem:[#allocation13 + $0x40] sm:$0xff]
      %v210 = vld [vmem:[#allocation13 + $0x48] sm:$0xff]
      %v211 = vld [vmem:[#allocation13 + $0x50] sm:$0xff]
      %v212 = vld [vmem:[#allocation13 + $0x58] sm:$0xff]
      %v213 = vld [vmem:[#allocation13 + $0x60] sm:$0xff]
      %v214 = vld [vmem:[#allocation13 + $0x68] sm:$0xff]
      %v215 = vld [vmem:[#allocation13 + $0x70] sm:$0xff]
      %v216 = vld [vmem:[#allocation13 + $0x78] sm:$0xff]
      %v217 = vld [vmem:[#allocation13 + $0x80] sm:$0xff]
      %v218 = vld [vmem:[#allocation13 + $0x88] sm:$0xff]
      %v219 = vld [vmem:[#allocation13 + $0x90] sm:$0xff]
      %v220 = vld [vmem:[#allocation13 + $0x98] sm:$0xff]
      %v221 = vld [vmem:[#allocation13 + $0xa0] sm:$0xff]
      %v222 = vld [vmem:[#allocation13 + $0xa8] sm:$0xff]
      %v223 = vld [vmem:[#allocation13 + $0xb0] sm:$0xff]
      %v224 = vld [vmem:[#allocation13 + $0xb8] sm:$0xff]
      %v225 = vld [vmem:[#allocation13 + $0xc0] sm:$0xff]
      %v226 = vld [vmem:[#allocation13 + $0xc8] sm:$0xff]
      %v227 = vld [vmem:[#allocation13 + $0xd0] sm:$0xff]
      %v228 = vld [vmem:[#allocation13 + $0xd8] sm:$0xff]
      %v229 = vld [vmem:[#allocation13 + $0xe0] sm:$0xff]
      %v230 = vld [vmem:[#allocation13 + $0xe8] sm:$0xff]
      %v231 = vld [vmem:[#allocation13 + $0xf0] sm:$0xff]
      %v232 = vld [vmem:[#allocation13 + $0xf8] sm:$0xff]
      %v233 = vld [vmem:[#allocation13 + $0x100] sm:$0xff]
      %v234 = vld [vmem:[#allocation13 + $0x108] sm:$0xff]
      %v235 = vld [vmem:[#allocation13 + $0x110] sm:$0xff]
      %v236 = vld [vmem:[#allocation13 + $0x118] sm:$0xff]
      %v237 = vld [vmem:[#allocation13 + $0x120] sm:$0xff]
      %v238 = vld [vmem:[#allocation13 + $0x128] sm:$0xff]
      %v239 = vld [vmem:[#allocation13 + $0x130] sm:$0xff]
      %v240 = vld [vmem:[#allocation13 + $0x138] sm:$0xff]
      %v241 = vld [vmem:[#allocation13 + $0x140] sm:$0xff]
      %v242 = vld [vmem:[#allocation13 + $0x148] sm:$0xff]
      %v243 = vld [vmem:[#allocation13 + $0x150] sm:$0xff]
      %v244 = vld [vmem:[#allocation13 + $0x158] sm:$0xff]
      %v245 = vld [vmem:[#allocation13 + $0x160] sm:$0xff]
      %v246 = vld [vmem:[#allocation13 + $0x168] sm:$0xff]
      %v247 = vld [vmem:[#allocation13 + $0x170] sm:$0xff]
      %v248 = vld [vmem:[#allocation13 + $0x178] sm:$0xff]
      %v249 = vld [vmem:[#allocation13 + $0x180] sm:$0xff]
      %v250 = vld [vmem:[#allocation13 + $0x188] sm:$0xff]
      %v251 = vld [vmem:[#allocation13 + $0x190] sm:$0xff]
      %v252 = vld [vmem:[#allocation13 + $0x198] sm:$0xff]
      %v253 = vld [vmem:[#allocation13 + $0x1a0] sm:$0xff]
      %v254 = vld [vmem:[#allocation13 + $0x1a8] sm:$0xff]
      %v255 = vld [vmem:[#allocation13 + $0x1b0] sm:$0xff]
      %v256 = vld [vmem:[#allocation13 + $0x1b8] sm:$0xff]
      %v257 = vld [vmem:[#allocation13 + $0x1c0] sm:$0xff]
      %v258 = vld [vmem:[#allocation13 + $0x1c8] sm:$0xff]
      %v259 = vld [vmem:[#allocation13 + $0x1d0] sm:$0xff]
      %v260 = vld [vmem:[#allocation13 + $0x1d8] sm:$0xff]
      %v261 = vld [vmem:[#allocation13 + $0x1e0] sm:$0xff]
      %v262 = vld [vmem:[#allocation13 + $0x1e8] sm:$0xff]
      %v263 = vld [vmem:[#allocation13 + $0x1f0] sm:$0xff]
      %v264 = vld [vmem:[#allocation13 + $0x1f8] sm:$0xff]
      %v265 = vld [vmem:[%s5] sm:$0xf]
      %v266 = vld [vmem:[#allocation5] sm:$0xff]
      %v267 = vld [vmem:[#allocation5 + $0x8] sm:$0xff]
      %v268 = vld [vmem:[#allocation5 + $0x10] sm:$0xff]
      %v269 = vld [vmem:[#allocation5 + $0x18] sm:$0xff]
      %v270 = vld [vmem:[#allocation5 + $0x20] sm:$0xff]
      %v271 = vld [vmem:[#allocation5 + $0x28] sm:$0xff]
      %v272 = vld [vmem:[#allocation5 + $0x30] sm:$0xff]
      %v273 = vld [vmem:[#allocation5 + $0x38] sm:$0xff]
      %v275 = vperm.slane %v265, 0
      %v276 = vperm.slane %v265, 1
      %v277 = vperm.slane %v265, 2
      %v278 = vperm.slane %v265, 3
      %283 = vmatpush.msra.mxu0 %v197
      %284 = vmatpush.msra.mxu0 %v193
      %285 = vmatpush.msra.mxu0 %v189
      %286 = vmatpush.msra.mxu0 %v185
      %287 = vmatpush.msra.mxu0 %v181
      %288 = vmatpush.msra.mxu0 %v177
      %289 = vmatpush.msra.mxu0 %v173
      %290 = vmatpush.msra.mxu0 %v169
      %291 = vmatpush.msra.mxu0 %v165
      %292 = vmatpush.msra.mxu0 %v161
      %293 = vmatpush.msra.mxu0 %v157
      %294 = vmatpush.msra.mxu0 %v153
      %295 = vmatpush.msra.mxu0 %v149
      %296 = vmatpush.msra.mxu0 %v145
      %297 = vmatpush.msra.mxu0 %v141
      %298 = vmatpush.msra.mxu0 %v137
      %299 = vmatmul.f32.gmra.mxu0 %v266
      %v300 = vpop.f32.mrf.mxu0
      %v301 = vadd.f32 %v275, %v300
      %302 = vmatmul.f32.gmra.mxu0 %v267
      %v303 = vpop.f32.mrf.mxu0
      %v304 = vadd.f32 %v275, %v303
      %305 = vmatmul.f32.gmra.mxu0 %v268
      %v306 = vpop.f32.mrf.mxu0
      %v307 = vadd.f32 %v275, %v306
      %308 = vmatmul.f32.gmra.mxu0 %v269
      %v309 = vpop.f32.mrf.mxu0
      %v310 = vadd.f32 %v275, %v309
      %311 = vmatmul.f32.gmra.mxu0 %v270
      %v312 = vpop.f32.mrf.mxu0
      %v313 = vadd.f32 %v275, %v312
      %314 = vmatmul.f32.gmra.mxu0 %v271
      %v315 = vpop.f32.mrf.mxu0
      %v316 = vadd.f32 %v275, %v315
      %317 = vmatmul.f32.gmra.mxu0 %v272
      %v318 = vpop.f32.mrf.mxu0
      %v319 = vadd.f32 %v275, %v318
      %320 = vmatmul.f32.gmra.mxu0 %v273
      %v321 = vpop.f32.mrf.mxu0
      %v322 = vadd.f32 %v275, %v321
      %323 = vdwg.mxu0
      %324 = vmatpush.msra.mxu0 %v198
      %325 = vmatpush.msra.mxu0 %v194
      %326 = vmatpush.msra.mxu0 %v190
      %327 = vmatpush.msra.mxu0 %v186
      %328 = vmatpush.msra.mxu0 %v182
      %329 = vmatpush.msra.mxu0 %v178
      %330 = vmatpush.msra.mxu0 %v174
      %331 = vmatpush.msra.mxu0 %v170
      %332 = vmatpush.msra.mxu0 %v166
      %333 = vmatpush.msra.mxu0 %v162
      %334 = vmatpush.msra.mxu0 %v158
      %335 = vmatpush.msra.mxu0 %v154
      %336 = vmatpush.msra.mxu0 %v150
      %337 = vmatpush.msra.mxu0 %v146
      %338 = vmatpush.msra.mxu0 %v142
      %339 = vmatpush.msra.mxu0 %v138
      %340 = vmatmul.f32.gmra.mxu0 %v266
      %v341 = vpop.f32.mrf.mxu0
      %v342 = vadd.f32 %v276, %v341
      %343 = vmatmul.f32.gmra.mxu0 %v267
      %v344 = vpop.f32.mrf.mxu0
      %v345 = vadd.f32 %v276, %v344
      %346 = vmatmul.f32.gmra.mxu0 %v268
      %v347 = vpop.f32.mrf.mxu0
      %v348 = vadd.f32 %v276, %v347
      %349 = vmatmul.f32.gmra.mxu0 %v269
      %v350 = vpop.f32.mrf.mxu0
      %v351 = vadd.f32 %v276, %v350
      %352 = vmatmul.f32.gmra.mxu0 %v270
      %v353 = vpop.f32.mrf.mxu0
      %v354 = vadd.f32 %v276, %v353
      %355 = vmatmul.f32.gmra.mxu0 %v271
      %v356 = vpop.f32.mrf.mxu0
      %v357 = vadd.f32 %v276, %v356
      %358 = vmatmul.f32.gmra.mxu0 %v272
      %v359 = vpop.f32.mrf.mxu0
      %v360 = vadd.f32 %v276, %v359
      %361 = vmatmul.f32.gmra.mxu0 %v273
      %v362 = vpop.f32.mrf.mxu0
      %v363 = vadd.f32 %v276, %v362
      %364 = vdwg.mxu0
      %365 = vmatpush.msra.mxu0 %v199
      %366 = vmatpush.msra.mxu0 %v195
      %367 = vmatpush.msra.mxu0 %v191
      %368 = vmatpush.msra.mxu0 %v187
      %369 = vmatpush.msra.mxu0 %v183
      %370 = vmatpush.msra.mxu0 %v179
      %371 = vmatpush.msra.mxu0 %v175
      %372 = vmatpush.msra.mxu0 %v171
      %373 = vmatpush.msra.mxu0 %v167
      %374 = vmatpush.msra.mxu0 %v163
      %375 = vmatpush.msra.mxu0 %v159
      %376 = vmatpush.msra.mxu0 %v155
      %377 = vmatpush.msra.mxu0 %v151
      %378 = vmatpush.msra.mxu0 %v147
      %379 = vmatpush.msra.mxu0 %v143
      %380 = vmatpush.msra.mxu0 %v139
      %381 = vmatmul.f32.gmra.mxu0 %v266
      %v382 = vpop.f32.mrf.mxu0
      %v383 = vadd.f32 %v277, %v382
      %384 = vmatmul.f32.gmra.mxu0 %v267
      %v385 = vpop.f32.mrf.mxu0
      %v386 = vadd.f32 %v277, %v385
      %387 = vmatmul.f32.gmra.mxu0 %v268
      %v388 = vpop.f32.mrf.mxu0
      %v389 = vadd.f32 %v277, %v388
      %390 = vmatmul.f32.gmra.mxu0 %v269
      %v391 = vpop.f32.mrf.mxu0
      %v392 = vadd.f32 %v277, %v391
      %393 = vmatmul.f32.gmra.mxu0 %v270
      %v394 = vpop.f32.mrf.mxu0
      %v395 = vadd.f32 %v277, %v394
      %396 = vmatmul.f32.gmra.mxu0 %v271
      %v397 = vpop.f32.mrf.mxu0
      %v398 = vadd.f32 %v277, %v397
      %399 = vmatmul.f32.gmra.mxu0 %v272
      %v400 = vpop.f32.mrf.mxu0
      %v401 = vadd.f32 %v277, %v400
      %402 = vmatmul.f32.gmra.mxu0 %v273
      %v403 = vpop.f32.mrf.mxu0
      %v404 = vadd.f32 %v277, %v403
      %405 = vdwg.mxu0
      %406 = vmatpush.msra.mxu0 %v200
      %407 = vmatpush.msra.mxu0 %v196
      %408 = vmatpush.msra.mxu0 %v192
      %409 = vmatpush.msra.mxu0 %v188
      %410 = vmatpush.msra.mxu0 %v184
      %411 = vmatpush.msra.mxu0 %v180
      %412 = vmatpush.msra.mxu0 %v176
      %413 = vmatpush.msra.mxu0 %v172
      %414 = vmatpush.msra.mxu0 %v168
      %415 = vmatpush.msra.mxu0 %v164
      %416 = vmatpush.msra.mxu0 %v160
      %417 = vmatpush.msra.mxu0 %v156
      %418 = vmatpush.msra.mxu0 %v152
      %419 = vmatpush.msra.mxu0 %v148
      %420 = vmatpush.msra.mxu0 %v144
      %421 = vmatpush.msra.mxu0 %v140
      %422 = vmatmul.f32.gmra.mxu0 %v266
      %v423 = vpop.f32.mrf.mxu0
      %v424 = vadd.f32 %v278, %v423
      %425 = vmatmul.f32.gmra.mxu0 %v267
      %v426 = vpop.f32.mrf.mxu0
      %v427 = vadd.f32 %v278, %v426
      %428 = vmatmul.f32.gmra.mxu0 %v268
      %v429 = vpop.f32.mrf.mxu0
      %v430 = vadd.f32 %v278, %v429
      %431 = vmatmul.f32.gmra.mxu0 %v269
      %v432 = vpop.f32.mrf.mxu0
      %v433 = vadd.f32 %v278, %v432
      %434 = vmatmul.f32.gmra.mxu0 %v270
      %v435 = vpop.f32.mrf.mxu0
      %v436 = vadd.f32 %v278, %v435
      %437 = vmatmul.f32.gmra.mxu0 %v271
      %v438 = vpop.f32.mrf.mxu0
      %v439 = vadd.f32 %v278, %v438
      %440 = vmatmul.f32.gmra.mxu0 %v272
      %v441 = vpop.f32.mrf.mxu0
      %v442 = vadd.f32 %v278, %v441
      %443 = vmatmul.f32.gmra.mxu0 %v273
      %v444 = vpop.f32.mrf.mxu0
      %v445 = vadd.f32 %v278, %v444
      %446 = vdwg.mxu0
      %v447 = vld [vmem:[#allocation2] sm:$0xff]
      %v448 = vld [vmem:[#allocation3] sm:$0xff]
      %449 = vmatpush.msra.mxu0 %v261
      %450 = vmatpush.msra.mxu0 %v257
      %451 = vmatpush.msra.mxu0 %v253
      %452 = vmatpush.msra.mxu0 %v249
      %453 = vmatpush.msra.mxu0 %v245
      %454 = vmatpush.msra.mxu0 %v241
      %455 = vmatpush.msra.mxu0 %v237
      %456 = vmatpush.msra.mxu0 %v233
      %457 = vmatpush.msra.mxu0 %v229
      %458 = vmatpush.msra.mxu0 %v225
      %459 = vmatpush.msra.mxu0 %v221
      %460 = vmatpush.msra.mxu0 %v217
      %461 = vmatpush.msra.mxu0 %v213
      %462 = vmatpush.msra.mxu0 %v209
      %463 = vmatpush.msra.mxu0 %v205
      %464 = vmatpush.msra.mxu0 %v201
      %465 = vmatmul.f32.gmra.mxu0 %v447
      %v466 = vpop.f32.mrf.mxu0
      %v467 = vadd.f32 0.0, %v466
      %468 = vdwg.mxu0
      %469 = vmatpush.msra.mxu0 %v262
      %470 = vmatpush.msra.mxu0 %v258
      %471 = vmatpush.msra.mxu0 %v254
      %472 = vmatpush.msra.mxu0 %v250
      %473 = vmatpush.msra.mxu0 %v246
      %474 = vmatpush.msra.mxu0 %v242
      %475 = vmatpush.msra.mxu0 %v238
      %476 = vmatpush.msra.mxu0 %v234
      %477 = vmatpush.msra.mxu0 %v230
      %478 = vmatpush.msra.mxu0 %v226
      %479 = vmatpush.msra.mxu0 %v222
      %480 = vmatpush.msra.mxu0 %v218
      %481 = vmatpush.msra.mxu0 %v214
      %482 = vmatpush.msra.mxu0 %v210
      %483 = vmatpush.msra.mxu0 %v206
      %484 = vmatpush.msra.mxu0 %v202
      %485 = vmatmul.f32.gmra.mxu0 %v447
      %v486 = vpop.f32.mrf.mxu0
      %v487 = vadd.f32 0.0, %v486
      %488 = vdwg.mxu0
      %489 = vmatpush.msra.mxu0 %v263
      %490 = vmatpush.msra.mxu0 %v259
      %491 = vmatpush.msra.mxu0 %v255
      %492 = vmatpush.msra.mxu0 %v251
      %493 = vmatpush.msra.mxu0 %v247
      %494 = vmatpush.msra.mxu0 %v243
      %495 = vmatpush.msra.mxu0 %v239
      %496 = vmatpush.msra.mxu0 %v235
      %497 = vmatpush.msra.mxu0 %v231
      %498 = vmatpush.msra.mxu0 %v227
      %499 = vmatpush.msra.mxu0 %v223
      %500 = vmatpush.msra.mxu0 %v219
      %501 = vmatpush.msra.mxu0 %v215
      %502 = vmatpush.msra.mxu0 %v211
      %503 = vmatpush.msra.mxu0 %v207
      %504 = vmatpush.msra.mxu0 %v203
      %505 = vmatmul.f32.gmra.mxu0 %v447
      %v506 = vpop.f32.mrf.mxu0
      %v507 = vadd.f32 0.0, %v506
      %508 = vdwg.mxu0
      %509 = vmatpush.msra.mxu0 %v264
      %510 = vmatpush.msra.mxu0 %v260
      %511 = vmatpush.msra.mxu0 %v256
      %512 = vmatpush.msra.mxu0 %v252
      %513 = vmatpush.msra.mxu0 %v248
      %514 = vmatpush.msra.mxu0 %v244
      %515 = vmatpush.msra.mxu0 %v240
      %516 = vmatpush.msra.mxu0 %v236
      %517 = vmatpush.msra.mxu0 %v232
      %518 = vmatpush.msra.mxu0 %v228
      %519 = vmatpush.msra.mxu0 %v224
      %520 = vmatpush.msra.mxu0 %v220
      %521 = vmatpush.msra.mxu0 %v216
      %522 = vmatpush.msra.mxu0 %v212
      %523 = vmatpush.msra.mxu0 %v208
      %524 = vmatpush.msra.mxu0 %v204
      %525 = vmatmul.f32.gmra.mxu0 %v447
      %v526 = vpop.f32.mrf.mxu0
      %v527 = vadd.f32 0.0, %v526
      %528 = vdwg.mxu0
      %v529 = vadd.f32 %v301, %v467
      %v530 = vadd.f32 %v342, %v487
      %v531 = vadd.f32 %v383, %v507
      %v532 = vadd.f32 %v424, %v527
      %v533 = vmul.f32 %v529, 0.5
      %v534 = vtanh.pop %v533
      %v535 = vadd.f32 %v534, 1.0
      %v536 = vmul.f32 %v535, 0.5
      %v537 = vmul.f32 %v530, 0.5
      %v538 = vtanh.pop %v537
      %v539 = vadd.f32 %v538, 1.0
      %v540 = vmul.f32 %v539, 0.5
      %v541 = vtanh.pop %v531
      %v542 = vmul.f32 %v532, 0.5
      %v543 = vtanh.pop %v542
      %v544 = vadd.f32 %v543, 1.0
      %v545 = vmul.f32 %v544, 0.5
      %v546 = vmul.f32 %v540, %v448
      %v547 = vmul.f32 %v536, %v541
      %v548 = vadd.f32 %v546, %v547
      %v549 = vtanh.pop %v548
      %v550 = vmul.f32 %v545, %v549
      %551 = vst [vmem:[#allocation4] sm:$0xff] %v550
      %552 = vmatpush.msra.mxu0 %v261
      %553 = vmatpush.msra.mxu0 %v257
      %554 = vmatpush.msra.mxu0 %v253
      %555 = vmatpush.msra.mxu0 %v249
      %556 = vmatpush.msra.mxu0 %v245
      %557 = vmatpush.msra.mxu0 %v241
      %558 = vmatpush.msra.mxu0 %v237
      %559 = vmatpush.msra.mxu0 %v233
      %560 = vmatpush.msra.mxu0 %v229
      %561 = vmatpush.msra.mxu0 %v225
      %562 = vmatpush.msra.mxu0 %v221
      %563 = vmatpush.msra.mxu0 %v217
      %564 = vmatpush.msra.mxu0 %v213
      %565 = vmatpush.msra.mxu0 %v209
      %566 = vmatpush.msra.mxu0 %v205
      %567 = vmatpush.msra.mxu0 %v201
      %568 = vmatmul.f32.gmra.mxu0 %v550
      %v569 = vpop.f32.mrf.mxu0
      %v570 = vadd.f32 0.0, %v569
      %571 = vdwg.mxu0
      %572 = vmatpush.msra.mxu0 %v262
      %573 = vmatpush.msra.mxu0 %v258
      %574 = vmatpush.msra.mxu0 %v254
      %575 = vmatpush.msra.mxu0 %v250
      %576 = vmatpush.msra.mxu0 %v246
      %577 = vmatpush.msra.mxu0 %v242
      %578 = vmatpush.msra.mxu0 %v238
      %579 = vmatpush.msra.mxu0 %v234
      %580 = vmatpush.msra.mxu0 %v230
      %581 = vmatpush.msra.mxu0 %v226
      %582 = vmatpush.msra.mxu0 %v222
      %583 = vmatpush.msra.mxu0 %v218
      %584 = vmatpush.msra.mxu0 %v214
      %585 = vmatpush.msra.mxu0 %v210
      %586 = vmatpush.msra.mxu0 %v206
      %587 = vmatpush.msra.mxu0 %v202
      %588 = vmatmul.f32.gmra.mxu0 %v550
      %v589 = vpop.f32.mrf.mxu0
      %v590 = vadd.f32 0.0, %v589
      %591 = vdwg.mxu0
      %592 = vmatpush.msra.mxu0 %v263
      %593 = vmatpush.msra.mxu0 %v259
      %594 = vmatpush.msra.mxu0 %v255
      %595 = vmatpush.msra.mxu0 %v251
      %596 = vmatpush.msra.mxu0 %v247
      %597 = vmatpush.msra.mxu0 %v243
      %598 = vmatpush.msra.mxu0 %v239
      %599 = vmatpush.msra.mxu0 %v235
      %600 = vmatpush.msra.mxu0 %v231
      %601 = vmatpush.msra.mxu0 %v227
      %602 = vmatpush.msra.mxu0 %v223
      %603 = vmatpush.msra.mxu0 %v219
      %604 = vmatpush.msra.mxu0 %v215
      %605 = vmatpush.msra.mxu0 %v211
      %606 = vmatpush.msra.mxu0 %v207
      %607 = vmatpush.msra.mxu0 %v203
      %608 = vmatmul.f32.gmra.mxu0 %v550
      %v609 = vpop.f32.mrf.mxu0
      %v610 = vadd.f32 0.0, %v609
      %611 = vdwg.mxu0
      %612 = vmatpush.msra.mxu0 %v264
      %613 = vmatpush.msra.mxu0 %v260
      %614 = vmatpush.msra.mxu0 %v256
      %615 = vmatpush.msra.mxu0 %v252
      %616 = vmatpush.msra.mxu0 %v248
      %617 = vmatpush.msra.mxu0 %v244
      %618 = vmatpush.msra.mxu0 %v240
      %619 = vmatpush.msra.mxu0 %v236
      %620 = vmatpush.msra.mxu0 %v232
      %621 = vmatpush.msra.mxu0 %v228
      %622 = vmatpush.msra.mxu0 %v224
      %623 = vmatpush.msra.mxu0 %v220
      %624 = vmatpush.msra.mxu0 %v216
      %625 = vmatpush.msra.mxu0 %v212
      %626 = vmatpush.msra.mxu0 %v208
      %627 = vmatpush.msra.mxu0 %v204
      %628 = vmatmul.f32.gmra.mxu0 %v550
      %v629 = vpop.f32.mrf.mxu0
      %v630 = vadd.f32 0.0, %v629
      %631 = vdwg.mxu0
      %v632 = vadd.f32 %v304, %v570
      %v633 = vadd.f32 %v345, %v590
      %v634 = vadd.f32 %v386, %v610
      %v635 = vadd.f32 %v427, %v630
      %v636 = vmul.f32 %v632, 0.5
      %v637 = vtanh.pop %v636
      %v638 = vadd.f32 %v637, 1.0
      %v639 = vmul.f32 %v638, 0.5
      %v640 = vmul.f32 %v633, 0.5
      %v641 = vtanh.pop %v640
      %v642 = vadd.f32 %v641, 1.0
      %v643 = vmul.f32 %v642, 0.5
      %v644 = vtanh.pop %v634
      %v645 = vmul.f32 %v635, 0.5
      %v646 = vtanh.pop %v645
      %v647 = vadd.f32 %v646, 1.0
      %v648 = vmul.f32 %v647, 0.5
      %v649 = vmul.f32 %v643, %v548
      %v650 = vmul.f32 %v639, %v644
      %v651 = vadd.f32 %v649, %v650
      %v652 = vtanh.pop %v651
      %v653 = vmul.f32 %v648, %v652
      %s654 = scalar_lea.vmem [#allocation4], 8
      %655 = vst [vmem:[%s654] sm:$0xff] %v653
      %656 = vmatpush.msra.mxu0 %v261
      %657 = vmatpush.msra.mxu0 %v257
      %658 = vmatpush.msra.mxu0 %v253
      %659 = vmatpush.msra.mxu0 %v249
      %660 = vmatpush.msra.mxu0 %v245
      %661 = vmatpush.msra.mxu0 %v241
      %662 = vmatpush.msra.mxu0 %v237
      %663 = vmatpush.msra.mxu0 %v233
      %664 = vmatpush.msra.mxu0 %v229
      %665 = vmatpush.msra.mxu0 %v225
      %666 = vmatpush.msra.mxu0 %v221
      %667 = vmatpush.msra.mxu0 %v217
      %668 = vmatpush.msra.mxu0 %v213
      %669 = vmatpush.msra.mxu0 %v209
      %670 = vmatpush.msra.mxu0 %v205
      %671 = vmatpush.msra.mxu0 %v201
      %672 = vmatmul.f32.gmra.mxu0 %v653
      %v673 = vpop.f32.mrf.mxu0
      %v674 = vadd.f32 0.0, %v673
      %675 = vdwg.mxu0
      %676 = vmatpush.msra.mxu0 %v262
      %677 = vmatpush.msra.mxu0 %v258
      %678 = vmatpush.msra.mxu0 %v254
      %679 = vmatpush.msra.mxu0 %v250
      %680 = vmatpush.msra.mxu0 %v246
      %681 = vmatpush.msra.mxu0 %v242
      %682 = vmatpush.msra.mxu0 %v238
      %683 = vmatpush.msra.mxu0 %v234
      %684 = vmatpush.msra.mxu0 %v230
      %685 = vmatpush.msra.mxu0 %v226
      %686 = vmatpush.msra.mxu0 %v222
      %687 = vmatpush.msra.mxu0 %v218
      %688 = vmatpush.msra.mxu0 %v214
      %689 = vmatpush.msra.mxu0 %v210
      %690 = vmatpush.msra.mxu0 %v206
      %691 = vmatpush.msra.mxu0 %v202
      %692 = vmatmul.f32.gmra.mxu0 %v653
      %v693 = vpop.f32.mrf.mxu0
      %v694 = vadd.f32 0.0, %v693
      %695 = vdwg.mxu0
      %696 = vmatpush.msra.mxu0 %v263
      %697 = vmatpush.msra.mxu0 %v259
      %698 = vmatpush.msra.mxu0 %v255
      %699 = vmatpush.msra.mxu0 %v251
      %700 = vmatpush.msra.mxu0 %v247
      %701 = vmatpush.msra.mxu0 %v243
      %702 = vmatpush.msra.mxu0 %v239
      %703 = vmatpush.msra.mxu0 %v235
      %704 = vmatpush.msra.mxu0 %v231
      %705 = vmatpush.msra.mxu0 %v227
      %706 = vmatpush.msra.mxu0 %v223
      %707 = vmatpush.msra.mxu0 %v219
      %708 = vmatpush.msra.mxu0 %v215
      %709 = vmatpush.msra.mxu0 %v211
      %710 = vmatpush.msra.mxu0 %v207
      %711 = vmatpush.msra.mxu0 %v203
      %712 = vmatmul.f32.gmra.mxu0 %v653
      %v713 = vpop.f32.mrf.mxu0
      %v714 = vadd.f32 0.0, %v713
      %715 = vdwg.mxu0
      %716 = vmatpush.msra.mxu0 %v264
      %717 = vmatpush.msra.mxu0 %v260
      %718 = vmatpush.msra.mxu0 %v256
      %719 = vmatpush.msra.mxu0 %v252
      %720 = vmatpush.msra.mxu0 %v248
      %721 = vmatpush.msra.mxu0 %v244
      %722 = vmatpush.msra.mxu0 %v240
      %723 = vmatpush.msra.mxu0 %v236
      %724 = vmatpush.msra.mxu0 %v232
      %725 = vmatpush.msra.mxu0 %v228
      %726 = vmatpush.msra.mxu0 %v224
      %727 = vmatpush.msra.mxu0 %v220
      %728 = vmatpush.msra.mxu0 %v216
      %729 = vmatpush.msra.mxu0 %v212
      %730 = vmatpush.msra.mxu0 %v208
      %731 = vmatpush.msra.mxu0 %v204
      %732 = vmatmul.f32.gmra.mxu0 %v653
      %v733 = vpop.f32.mrf.mxu0
      %v734 = vadd.f32 0.0, %v733
      %735 = vdwg.mxu0
      %v736 = vadd.f32 %v307, %v674
      %v737 = vadd.f32 %v348, %v694
      %v738 = vadd.f32 %v389, %v714
      %v739 = vadd.f32 %v430, %v734
      %v740 = vmul.f32 %v736, 0.5
      %v741 = vtanh.pop %v740
      %v742 = vadd.f32 %v741, 1.0
      %v743 = vmul.f32 %v742, 0.5
      %v744 = vmul.f32 %v737, 0.5
      %v745 = vtanh.pop %v744
      %v746 = vadd.f32 %v745, 1.0
      %v747 = vmul.f32 %v746, 0.5
      %v748 = vtanh.pop %v738
      %v749 = vmul.f32 %v739, 0.5
      %v750 = vtanh.pop %v749
      %v751 = vadd.f32 %v750, 1.0
      %v752 = vmul.f32 %v751, 0.5
      %v753 = vmul.f32 %v747, %v651
      %v754 = vmul.f32 %v743, %v748
      %v755 = vadd.f32 %v753, %v754
      %v756 = vtanh.pop %v755
      %v757 = vmul.f32 %v752, %v756
      %s758 = scalar_lea.vmem [#allocation4], 16
      %759 = vst [vmem:[%s758] sm:$0xff] %v757
      %760 = vmatpush.msra.mxu0 %v261
      %761 = vmatpush.msra.mxu0 %v257
      %762 = vmatpush.msra.mxu0 %v253
      %763 = vmatpush.msra.mxu0 %v249
      %764 = vmatpush.msra.mxu0 %v245
      %765 = vmatpush.msra.mxu0 %v241
      %766 = vmatpush.msra.mxu0 %v237
      %767 = vmatpush.msra.mxu0 %v233
      %768 = vmatpush.msra.mxu0 %v229
      %769 = vmatpush.msra.mxu0 %v225
      %770 = vmatpush.msra.mxu0 %v221
      %771 = vmatpush.msra.mxu0 %v217
      %772 = vmatpush.msra.mxu0 %v213
      %773 = vmatpush.msra.mxu0 %v209
      %774 = vmatpush.msra.mxu0 %v205
      %775 = vmatpush.msra.mxu0 %v201
      %776 = vmatmul.f32.gmra.mxu0 %v757
      %v777 = vpop.f32.mrf.mxu0
      %v778 = vadd.f32 0.0, %v777
      %779 = vdwg.mxu0
      %780 = vmatpush.msra.mxu0 %v262
      %781 = vmatpush.msra.mxu0 %v258
      %782 = vmatpush.msra.mxu0 %v254
      %783 = vmatpush.msra.mxu0 %v250
      %784 = vmatpush.msra.mxu0 %v246
      %785 = vmatpush.msra.mxu0 %v242
      %786 = vmatpush.msra.mxu0 %v238
      %787 = vmatpush.msra.mxu0 %v234
      %788 = vmatpush.msra.mxu0 %v230
      %789 = vmatpush.msra.mxu0 %v226
      %790 = vmatpush.msra.mxu0 %v222
      %791 = vmatpush.msra.mxu0 %v218
      %792 = vmatpush.msra.mxu0 %v214
      %793 = vmatpush.msra.mxu0 %v210
      %794 = vmatpush.msra.mxu0 %v206
      %795 = vmatpush.msra.mxu0 %v202
      %796 = vmatmul.f32.gmra.mxu0 %v757
      %v797 = vpop.f32.mrf.mxu0
      %v798 = vadd.f32 0.0, %v797
      %799 = vdwg.mxu0
      %800 = vmatpush.msra.mxu0 %v263
      %801 = vmatpush.msra.mxu0 %v259
      %802 = vmatpush.msra.mxu0 %v255
      %803 = vmatpush.msra.mxu0 %v251
      %804 = vmatpush.msra.mxu0 %v247
      %805 = vmatpush.msra.mxu0 %v243
      %806 = vmatpush.msra.mxu0 %v239
      %807 = vmatpush.msra.mxu0 %v235
      %808 = vmatpush.msra.mxu0 %v231
      %809 = vmatpush.msra.mxu0 %v227
      %810 = vmatpush.msra.mxu0 %v223
      %811 = vmatpush.msra.mxu0 %v219
      %812 = vmatpush.msra.mxu0 %v215
      %813 = vmatpush.msra.mxu0 %v211
      %814 = vmatpush.msra.mxu0 %v207
      %815 = vmatpush.msra.mxu0 %v203
      %816 = vmatmul.f32.gmra.mxu0 %v757
      %v817 = vpop.f32.mrf.mxu0
      %v818 = vadd.f32 0.0, %v817
      %819 = vdwg.mxu0
      %820 = vmatpush.msra.mxu0 %v264
      %821 = vmatpush.msra.mxu0 %v260
      %822 = vmatpush.msra.mxu0 %v256
      %823 = vmatpush.msra.mxu0 %v252
      %824 = vmatpush.msra.mxu0 %v248
      %825 = vmatpush.msra.mxu0 %v244
      %826 = vmatpush.msra.mxu0 %v240
      %827 = vmatpush.msra.mxu0 %v236
      %828 = vmatpush.msra.mxu0 %v232
      %829 = vmatpush.msra.mxu0 %v228
      %830 = vmatpush.msra.mxu0 %v224
      %831 = vmatpush.msra.mxu0 %v220
      %832 = vmatpush.msra.mxu0 %v216
      %833 = vmatpush.msra.mxu0 %v212
      %834 = vmatpush.msra.mxu0 %v208
      %835 = vmatpush.msra.mxu0 %v204
      %836 = vmatmul.f32.gmra.mxu0 %v757
      %v837 = vpop.f32.mrf.mxu0
      %v838 = vadd.f32 0.0, %v837
      %839 = vdwg.mxu0
      %v840 = vadd.f32 %v310, %v778
      %v841 = vadd.f32 %v351, %v798
      %v842 = vadd.f32 %v392, %v818
      %v843 = vadd.f32 %v433, %v838
      %v844 = vmul.f32 %v840, 0.5
      %v845 = vtanh.pop %v844
      %v846 = vadd.f32 %v845, 1.0
      %v847 = vmul.f32 %v846, 0.5
      %v848 = vmul.f32 %v841, 0.5
      %v849 = vtanh.pop %v848
      %v850 = vadd.f32 %v849, 1.0
      %v851 = vmul.f32 %v850, 0.5
      %v852 = vtanh.pop %v842
      %v853 = vmul.f32 %v843, 0.5
      %v854 = vtanh.pop %v853
      %v855 = vadd.f32 %v854, 1.0
      %v856 = vmul.f32 %v855, 0.5
      %v857 = vmul.f32 %v851, %v755
      %v858 = vmul.f32 %v847, %v852
      %v859 = vadd.f32 %v857, %v858
      %v860 = vtanh.pop %v859
      %v861 = vmul.f32 %v856, %v860
      %s862 = scalar_lea.vmem [#allocation4], 24
      %863 = vst [vmem:[%s862] sm:$0xff] %v861
      %864 = vmatpush.msra.mxu0 %v261
      %865 = vmatpush.msra.mxu0 %v257
      %866 = vmatpush.msra.mxu0 %v253
      %867 = vmatpush.msra.mxu0 %v249
      %868 = vmatpush.msra.mxu0 %v245
      %869 = vmatpush.msra.mxu0 %v241
      %870 = vmatpush.msra.mxu0 %v237
      %871 = vmatpush.msra.mxu0 %v233
      %872 = vmatpush.msra.mxu0 %v229
      %873 = vmatpush.msra.mxu0 %v225
      %874 = vmatpush.msra.mxu0 %v221
      %875 = vmatpush.msra.mxu0 %v217
      %876 = vmatpush.msra.mxu0 %v213
      %877 = vmatpush.msra.mxu0 %v209
      %878 = vmatpush.msra.mxu0 %v205
      %879 = vmatpush.msra.mxu0 %v201
      %880 = vmatmul.f32.gmra.mxu0 %v861
      %v881 = vpop.f32.mrf.mxu0
      %v882 = vadd.f32 0.0, %v881
      %883 = vdwg.mxu0
      %884 = vmatpush.msra.mxu0 %v262
      %885 = vmatpush.msra.mxu0 %v258
      %886 = vmatpush.msra.mxu0 %v254
      %887 = vmatpush.msra.mxu0 %v250
      %888 = vmatpush.msra.mxu0 %v246
      %889 = vmatpush.msra.mxu0 %v242
      %890 = vmatpush.msra.mxu0 %v238
      %891 = vmatpush.msra.mxu0 %v234
      %892 = vmatpush.msra.mxu0 %v230
      %893 = vmatpush.msra.mxu0 %v226
      %894 = vmatpush.msra.mxu0 %v222
      %895 = vmatpush.msra.mxu0 %v218
      %896 = vmatpush.msra.mxu0 %v214
      %897 = vmatpush.msra.mxu0 %v210
      %898 = vmatpush.msra.mxu0 %v206
      %899 = vmatpush.msra.mxu0 %v202
      %900 = vmatmul.f32.gmra.mxu0 %v861
      %v901 = vpop.f32.mrf.mxu0
      %v902 = vadd.f32 0.0, %v901
      %903 = vdwg.mxu0
      %904 = vmatpush.msra.mxu0 %v263
      %905 = vmatpush.msra.mxu0 %v259
      %906 = vmatpush.msra.mxu0 %v255
      %907 = vmatpush.msra.mxu0 %v251
      %908 = vmatpush.msra.mxu0 %v247
      %909 = vmatpush.msra.mxu0 %v243
      %910 = vmatpush.msra.mxu0 %v239
      %911 = vmatpush.msra.mxu0 %v235
      %912 = vmatpush.msra.mxu0 %v231
      %913 = vmatpush.msra.mxu0 %v227
      %914 = vmatpush.msra.mxu0 %v223
      %915 = vmatpush.msra.mxu0 %v219
      %916 = vmatpush.msra.mxu0 %v215
      %917 = vmatpush.msra.mxu0 %v211
      %918 = vmatpush.msra.mxu0 %v207
      %919 = vmatpush.msra.mxu0 %v203
      %920 = vmatmul.f32.gmra.mxu0 %v861
      %v921 = vpop.f32.mrf.mxu0
      %v922 = vadd.f32 0.0, %v921
      %923 = vdwg.mxu0
      %924 = vmatpush.msra.mxu0 %v264
      %925 = vmatpush.msra.mxu0 %v260
      %926 = vmatpush.msra.mxu0 %v256
      %927 = vmatpush.msra.mxu0 %v252
      %928 = vmatpush.msra.mxu0 %v248
      %929 = vmatpush.msra.mxu0 %v244
      %930 = vmatpush.msra.mxu0 %v240
      %931 = vmatpush.msra.mxu0 %v236
      %932 = vmatpush.msra.mxu0 %v232
      %933 = vmatpush.msra.mxu0 %v228
      %934 = vmatpush.msra.mxu0 %v224
      %935 = vmatpush.msra.mxu0 %v220
      %936 = vmatpush.msra.mxu0 %v216
      %937 = vmatpush.msra.mxu0 %v212
      %938 = vmatpush.msra.mxu0 %v208
      %939 = vmatpush.msra.mxu0 %v204
      %940 = vmatmul.f32.gmra.mxu0 %v861
      %v941 = vpop.f32.mrf.mxu0
      %v942 = vadd.f32 0.0, %v941
      %943 = vdwg.mxu0
      %v944 = vadd.f32 %v313, %v882
      %v945 = vadd.f32 %v354, %v902
      %v946 = vadd.f32 %v395, %v922
      %v947 = vadd.f32 %v436, %v942
      %v948 = vmul.f32 %v944, 0.5
      %v949 = vtanh.pop %v948
      %v950 = vadd.f32 %v949, 1.0
      %v951 = vmul.f32 %v950, 0.5
      %v952 = vmul.f32 %v945, 0.5
      %v953 = vtanh.pop %v952
      %v954 = vadd.f32 %v953, 1.0
      %v955 = vmul.f32 %v954, 0.5
      %v956 = vtanh.pop %v946
      %v957 = vmul.f32 %v947, 0.5
      %v958 = vtanh.pop %v957
      %v959 = vadd.f32 %v958, 1.0
      %v960 = vmul.f32 %v959, 0.5
      %v961 = vmul.f32 %v955, %v859
      %v962 = vmul.f32 %v951, %v956
      %v963 = vadd.f32 %v961, %v962
      %v964 = vtanh.pop %v963
      %v965 = vmul.f32 %v960, %v964
      %s966 = scalar_lea.vmem [#allocation4], 32
      %967 = vst [vmem:[%s966] sm:$0xff] %v965
      %968 = vmatpush.msra.mxu0 %v261
      %969 = vmatpush.msra.mxu0 %v257
      %970 = vmatpush.msra.mxu0 %v253
      %971 = vmatpush.msra.mxu0 %v249
      %972 = vmatpush.msra.mxu0 %v245
      %973 = vmatpush.msra.mxu0 %v241
      %974 = vmatpush.msra.mxu0 %v237
      %975 = vmatpush.msra.mxu0 %v233
      %976 = vmatpush.msra.mxu0 %v229
      %977 = vmatpush.msra.mxu0 %v225
      %978 = vmatpush.msra.mxu0 %v221
      %979 = vmatpush.msra.mxu0 %v217
      %980 = vmatpush.msra.mxu0 %v213
      %981 = vmatpush.msra.mxu0 %v209
      %982 = vmatpush.msra.mxu0 %v205
      %983 = vmatpush.msra.mxu0 %v201
      %984 = vmatmul.f32.gmra.mxu0 %v965
      %v985 = vpop.f32.mrf.mxu0
      %v986 = vadd.f32 0.0, %v985
      %987 = vdwg.mxu0
      %988 = vmatpush.msra.mxu0 %v262
      %989 = vmatpush.msra.mxu0 %v258
      %990 = vmatpush.msra.mxu0 %v254
      %991 = vmatpush.msra.mxu0 %v250
      %992 = vmatpush.msra.mxu0 %v246
      %993 = vmatpush.msra.mxu0 %v242
      %994 = vmatpush.msra.mxu0 %v238
      %995 = vmatpush.msra.mxu0 %v234
      %996 = vmatpush.msra.mxu0 %v230
      %997 = vmatpush.msra.mxu0 %v226
      %998 = vmatpush.msra.mxu0 %v222
      %999 = vmatpush.msra.mxu0 %v218
      %1000 = vmatpush.msra.mxu0 %v214
      %1001 = vmatpush.msra.mxu0 %v210
      %1002 = vmatpush.msra.mxu0 %v206
      %1003 = vmatpush.msra.mxu0 %v202
      %1004 = vmatmul.f32.gmra.mxu0 %v965
      %v1005 = vpop.f32.mrf.mxu0
      %v1006 = vadd.f32 0.0, %v1005
      %1007 = vdwg.mxu0
      %1008 = vmatpush.msra.mxu0 %v263
      %1009 = vmatpush.msra.mxu0 %v259
      %1010 = vmatpush.msra.mxu0 %v255
      %1011 = vmatpush.msra.mxu0 %v251
      %1012 = vmatpush.msra.mxu0 %v247
      %1013 = vmatpush.msra.mxu0 %v243
      %1014 = vmatpush.msra.mxu0 %v239
      %1015 = vmatpush.msra.mxu0 %v235
      %1016 = vmatpush.msra.mxu0 %v231
      %1017 = vmatpush.msra.mxu0 %v227
      %1018 = vmatpush.msra.mxu0 %v223
      %1019 = vmatpush.msra.mxu0 %v219
      %1020 = vmatpush.msra.mxu0 %v215
      %1021 = vmatpush.msra.mxu0 %v211
      %1022 = vmatpush.msra.mxu0 %v207
      %1023 = vmatpush.msra.mxu0 %v203
      %1024 = vmatmul.f32.gmra.mxu0 %v965
      %v1025 = vpop.f32.mrf.mxu0
      %v1026 = vadd.f32 0.0, %v1025
      %1027 = vdwg.mxu0
      %1028 = vmatpush.msra.mxu0 %v264
      %1029 = vmatpush.msra.mxu0 %v260
      %1030 = vmatpush.msra.mxu0 %v256
      %1031 = vmatpush.msra.mxu0 %v252
      %1032 = vmatpush.msra.mxu0 %v248
      %1033 = vmatpush.msra.mxu0 %v244
      %1034 = vmatpush.msra.mxu0 %v240
      %1035 = vmatpush.msra.mxu0 %v236
      %1036 = vmatpush.msra.mxu0 %v232
      %1037 = vmatpush.msra.mxu0 %v228
      %1038 = vmatpush.msra.mxu0 %v224
      %1039 = vmatpush.msra.mxu0 %v220
      %1040 = vmatpush.msra.mxu0 %v216
      %1041 = vmatpush.msra.mxu0 %v212
      %1042 = vmatpush.msra.mxu0 %v208
      %1043 = vmatpush.msra.mxu0 %v204
      %1044 = vmatmul.f32.gmra.mxu0 %v965
      %v1045 = vpop.f32.mrf.mxu0
      %v1046 = vadd.f32 0.0, %v1045
      %1047 = vdwg.mxu0
      %v1048 = vadd.f32 %v316, %v986
      %v1049 = vadd.f32 %v357, %v1006
      %v1050 = vadd.f32 %v398, %v1026
      %v1051 = vadd.f32 %v439, %v1046
      %v1052 = vmul.f32 %v1048, 0.5
      %v1053 = vtanh.pop %v1052
      %v1054 = vadd.f32 %v1053, 1.0
      %v1055 = vmul.f32 %v1054, 0.5
      %v1056 = vmul.f32 %v1049, 0.5
      %v1057 = vtanh.pop %v1056
      %v1058 = vadd.f32 %v1057, 1.0
      %v1059 = vmul.f32 %v1058, 0.5
      %v1060 = vtanh.pop %v1050
      %v1061 = vmul.f32 %v1051, 0.5
      %v1062 = vtanh.pop %v1061
      %v1063 = vadd.f32 %v1062, 1.0
      %v1064 = vmul.f32 %v1063, 0.5
      %v1065 = vmul.f32 %v1059, %v963
      %v1066 = vmul.f32 %v1055, %v1060
      %v1067 = vadd.f32 %v1065, %v1066
      %v1068 = vtanh.pop %v1067
      %v1069 = vmul.f32 %v1064, %v1068
      %s1070 = scalar_lea.vmem [#allocation4], 40
      %1071 = vst [vmem:[%s1070] sm:$0xff] %v1069
      %1072 = vmatpush.msra.mxu0 %v261
      %1073 = vmatpush.msra.mxu0 %v257
      %1074 = vmatpush.msra.mxu0 %v253
      %1075 = vmatpush.msra.mxu0 %v249
      %1076 = vmatpush.msra.mxu0 %v245
      %1077 = vmatpush.msra.mxu0 %v241
      %1078 = vmatpush.msra.mxu0 %v237
      %1079 = vmatpush.msra.mxu0 %v233
      %1080 = vmatpush.msra.mxu0 %v229
      %1081 = vmatpush.msra.mxu0 %v225
      %1082 = vmatpush.msra.mxu0 %v221
      %1083 = vmatpush.msra.mxu0 %v217
      %1084 = vmatpush.msra.mxu0 %v213
      %1085 = vmatpush.msra.mxu0 %v209
      %1086 = vmatpush.msra.mxu0 %v205
      %1087 = vmatpush.msra.mxu0 %v201
      %1088 = vmatmul.f32.gmra.mxu0 %v1069
      %v1089 = vpop.f32.mrf.mxu0
      %v1090 = vadd.f32 0.0, %v1089
      %1091 = vdwg.mxu0
      %1092 = vmatpush.msra.mxu0 %v262
      %1093 = vmatpush.msra.mxu0 %v258
      %1094 = vmatpush.msra.mxu0 %v254
      %1095 = vmatpush.msra.mxu0 %v250
      %1096 = vmatpush.msra.mxu0 %v246
      %1097 = vmatpush.msra.mxu0 %v242
      %1098 = vmatpush.msra.mxu0 %v238
      %1099 = vmatpush.msra.mxu0 %v234
      %1100 = vmatpush.msra.mxu0 %v230
      %1101 = vmatpush.msra.mxu0 %v226
      %1102 = vmatpush.msra.mxu0 %v222
      %1103 = vmatpush.msra.mxu0 %v218
      %1104 = vmatpush.msra.mxu0 %v214
      %1105 = vmatpush.msra.mxu0 %v210
      %1106 = vmatpush.msra.mxu0 %v206
      %1107 = vmatpush.msra.mxu0 %v202
      %1108 = vmatmul.f32.gmra.mxu0 %v1069
      %v1109 = vpop.f32.mrf.mxu0
      %v1110 = vadd.f32 0.0, %v1109
      %1111 = vdwg.mxu0
      %1112 = vmatpush.msra.mxu0 %v263
      %1113 = vmatpush.msra.mxu0 %v259
      %1114 = vmatpush.msra.mxu0 %v255
      %1115 = vmatpush.msra.mxu0 %v251
      %1116 = vmatpush.msra.mxu0 %v247
      %1117 = vmatpush.msra.mxu0 %v243
      %1118 = vmatpush.msra.mxu0 %v239
      %1119 = vmatpush.msra.mxu0 %v235
      %1120 = vmatpush.msra.mxu0 %v231
      %1121 = vmatpush.msra.mxu0 %v227
      %1122 = vmatpush.msra.mxu0 %v223
      %1123 = vmatpush.msra.mxu0 %v219
      %1124 = vmatpush.msra.mxu0 %v215
      %1125 = vmatpush.msra.mxu0 %v211
      %1126 = vmatpush.msra.mxu0 %v207
      %1127 = vmatpush.msra.mxu0 %v203
      %1128 = vmatmul.f32.gmra.mxu0 %v1069
      %v1129 = vpop.f32.mrf.mxu0
      %v1130 = vadd.f32 0.0, %v1129
      %1131 = vdwg.mxu0
      %1132 = vmatpush.msra.mxu0 %v264
      %1133 = vmatpush.msra.mxu0 %v260
      %1134 = vmatpush.msra.mxu0 %v256
      %1135 = vmatpush.msra.mxu0 %v252
      %1136 = vmatpush.msra.mxu0 %v248
      %1137 = vmatpush.msra.mxu0 %v244
      %1138 = vmatpush.msra.mxu0 %v240
      %1139 = vmatpush.msra.mxu0 %v236
      %1140 = vmatpush.msra.mxu0 %v232
      %1141 = vmatpush.msra.mxu0 %v228
      %1142 = vmatpush.msra.mxu0 %v224
      %1143 = vmatpush.msra.mxu0 %v220
      %1144 = vmatpush.msra.mxu0 %v216
      %1145 = vmatpush.msra.mxu0 %v212
      %1146 = vmatpush.msra.mxu0 %v208
      %1147 = vmatpush.msra.mxu0 %v204
      %1148 = vmatmul.f32.gmra.mxu0 %v1069
      %v1149 = vpop.f32.mrf.mxu0
      %v1150 = vadd.f32 0.0, %v1149
      %1151 = vdwg.mxu0
      %v1152 = vadd.f32 %v319, %v1090
      %v1153 = vadd.f32 %v360, %v1110
      %v1154 = vadd.f32 %v401, %v1130
      %v1155 = vadd.f32 %v442, %v1150
      %v1156 = vmul.f32 %v1152, 0.5
      %v1157 = vtanh.pop %v1156
      %v1158 = vadd.f32 %v1157, 1.0
      %v1159 = vmul.f32 %v1158, 0.5
      %v1160 = vmul.f32 %v1153, 0.5
      %v1161 = vtanh.pop %v1160
      %v1162 = vadd.f32 %v1161, 1.0
      %v1163 = vmul.f32 %v1162, 0.5
      %v1164 = vtanh.pop %v1154
      %v1165 = vmul.f32 %v1155, 0.5
      %v1166 = vtanh.pop %v1165
      %v1167 = vadd.f32 %v1166, 1.0
      %v1168 = vmul.f32 %v1167, 0.5
      %v1169 = vmul.f32 %v1163, %v1067
      %v1170 = vmul.f32 %v1159, %v1164
      %v1171 = vadd.f32 %v1169, %v1170
      %v1172 = vtanh.pop %v1171
      %v1173 = vmul.f32 %v1168, %v1172
      %s1174 = scalar_lea.vmem [#allocation4], 48
      %1175 = vst [vmem:[%s1174] sm:$0xff] %v1173
      %1176 = vmatpush.msra.mxu0 %v261
      %1177 = vmatpush.msra.mxu0 %v257
      %1178 = vmatpush.msra.mxu0 %v253
      %1179 = vmatpush.msra.mxu0 %v249
      %1180 = vmatpush.msra.mxu0 %v245
      %1181 = vmatpush.msra.mxu0 %v241
      %1182 = vmatpush.msra.mxu0 %v237
      %1183 = vmatpush.msra.mxu0 %v233
      %1184 = vmatpush.msra.mxu0 %v229
      %1185 = vmatpush.msra.mxu0 %v225
      %1186 = vmatpush.msra.mxu0 %v221
      %1187 = vmatpush.msra.mxu0 %v217
      %1188 = vmatpush.msra.mxu0 %v213
      %1189 = vmatpush.msra.mxu0 %v209
      %1190 = vmatpush.msra.mxu0 %v205
      %1191 = vmatpush.msra.mxu0 %v201
      %1192 = vmatmul.f32.gmra.mxu0 %v1173
      %v1193 = vpop.f32.mrf.mxu0
      %v1194 = vadd.f32 0.0, %v1193
      %1195 = vdwg.mxu0
      %1196 = vmatpush.msra.mxu0 %v262
      %1197 = vmatpush.msra.mxu0 %v258
      %1198 = vmatpush.msra.mxu0 %v254
      %1199 = vmatpush.msra.mxu0 %v250
      %1200 = vmatpush.msra.mxu0 %v246
      %1201 = vmatpush.msra.mxu0 %v242
      %1202 = vmatpush.msra.mxu0 %v238
      %1203 = vmatpush.msra.mxu0 %v234
      %1204 = vmatpush.msra.mxu0 %v230
      %1205 = vmatpush.msra.mxu0 %v226
      %1206 = vmatpush.msra.mxu0 %v222
      %1207 = vmatpush.msra.mxu0 %v218
      %1208 = vmatpush.msra.mxu0 %v214
      %1209 = vmatpush.msra.mxu0 %v210
      %1210 = vmatpush.msra.mxu0 %v206
      %1211 = vmatpush.msra.mxu0 %v202
      %1212 = vmatmul.f32.gmra.mxu0 %v1173
      %v1213 = vpop.f32.mrf.mxu0
      %v1214 = vadd.f32 0.0, %v1213
      %1215 = vdwg.mxu0
      %1216 = vmatpush.msra.mxu0 %v263
      %1217 = vmatpush.msra.mxu0 %v259
      %1218 = vmatpush.msra.mxu0 %v255
      %1219 = vmatpush.msra.mxu0 %v251
      %1220 = vmatpush.msra.mxu0 %v247
      %1221 = vmatpush.msra.mxu0 %v243
      %1222 = vmatpush.msra.mxu0 %v239
      %1223 = vmatpush.msra.mxu0 %v235
      %1224 = vmatpush.msra.mxu0 %v231
      %1225 = vmatpush.msra.mxu0 %v227
      %1226 = vmatpush.msra.mxu0 %v223
      %1227 = vmatpush.msra.mxu0 %v219
      %1228 = vmatpush.msra.mxu0 %v215
      %1229 = vmatpush.msra.mxu0 %v211
      %1230 = vmatpush.msra.mxu0 %v207
      %1231 = vmatpush.msra.mxu0 %v203
      %1232 = vmatmul.f32.gmra.mxu0 %v1173
      %v1233 = vpop.f32.mrf.mxu0
      %v1234 = vadd.f32 0.0, %v1233
      %1235 = vdwg.mxu0
      %1236 = vmatpush.msra.mxu0 %v264
      %1237 = vmatpush.msra.mxu0 %v260
      %1238 = vmatpush.msra.mxu0 %v256
      %1239 = vmatpush.msra.mxu0 %v252
      %1240 = vmatpush.msra.mxu0 %v248
      %1241 = vmatpush.msra.mxu0 %v244
      %1242 = vmatpush.msra.mxu0 %v240
      %1243 = vmatpush.msra.mxu0 %v236
      %1244 = vmatpush.msra.mxu0 %v232
      %1245 = vmatpush.msra.mxu0 %v228
      %1246 = vmatpush.msra.mxu0 %v224
      %1247 = vmatpush.msra.mxu0 %v220
      %1248 = vmatpush.msra.mxu0 %v216
      %1249 = vmatpush.msra.mxu0 %v212
      %1250 = vmatpush.msra.mxu0 %v208
      %1251 = vmatpush.msra.mxu0 %v204
      %1252 = vmatmul.f32.gmra.mxu0 %v1173
      %v1253 = vpop.f32.mrf.mxu0
      %v1254 = vadd.f32 0.0, %v1253
      %1255 = vdwg.mxu0
      %v1256 = vadd.f32 %v322, %v1194
      %v1257 = vadd.f32 %v363, %v1214
      %v1258 = vadd.f32 %v404, %v1234
      %v1259 = vadd.f32 %v445, %v1254
      %v1260 = vmul.f32 %v1256, 0.5
      %v1261 = vtanh.pop %v1260
      %v1262 = vadd.f32 %v1261, 1.0
      %v1263 = vmul.f32 %v1262, 0.5
      %v1264 = vmul.f32 %v1257, 0.5
      %v1265 = vtanh.pop %v1264
      %v1266 = vadd.f32 %v1265, 1.0
      %v1267 = vmul.f32 %v1266, 0.5
      %v1268 = vtanh.pop %v1258
      %v1269 = vmul.f32 %v1259, 0.5
      %v1270 = vtanh.pop %v1269
      %v1271 = vadd.f32 %v1270, 1.0
      %v1272 = vmul.f32 %v1271, 0.5
      %v1273 = vmul.f32 %v1267, %v1171
      %v1274 = vmul.f32 %v1263, %v1268
      %v1275 = vadd.f32 %v1273, %v1274
      %v1276 = vtanh.pop %v1275
      %v1277 = vmul.f32 %v1272, %v1276
      %s1278 = scalar_lea.vmem [#allocation4], 56
      %1279 = vst [vmem:[%s1278] sm:$0xff] %v1277
      %1280 = vst [vmem:[#allocation2] sm:$0xff] %v1277
      %1281 = vst [vmem:[#allocation3] sm:$0xff] %v1275
    $region65: #{tpu_custom_call.1} parent=1 // pred_fallthru
      _
    // Predicated region
    $region66: #{tpu_custom_call.1} parent=1 // pred_check
      _
    $region67: #{tpu_custom_call.1} parent=1 // pred_check_branch
      %1283 = sbr.rel (%p126) target = $region69
    $region68: #{tpu_custom_call.1} parent=1 // pred_region
      %v1284 = vld [vmem:[#allocation2] sm:$0xff]
      %1285 = vst [vmem:[#allocation17] sm:$0xff] %v1284
      %v1286 = vld [vmem:[#allocation3] sm:$0xff]
      %1287 = vst [vmem:[#allocation19] sm:$0xff] %v1286
    $region69: #{tpu_custom_call.1} parent=1 // pred_fallthru
      _
    %v1288 = vld [vmem:[#allocation4] sm:$0xff]
    %v1289 = vld [vmem:[#allocation4 + $0x8] sm:$0xff]
    %v1290 = vld [vmem:[#allocation4 + $0x10] sm:$0xff]
    %v1291 = vld [vmem:[#allocation4 + $0x18] sm:$0xff]
    %v1292 = vld [vmem:[#allocation4 + $0x20] sm:$0xff]
    %v1293 = vld [vmem:[#allocation4 + $0x28] sm:$0xff]
    %v1294 = vld [vmem:[#allocation4 + $0x30] sm:$0xff]
    %v1295 = vld [vmem:[#allocation4 + $0x38] sm:$0xff]
    %v1296 = vld [vmem:[#allocation14] sm:$0xff]
    %v1297 = vld [vmem:[#allocation14 + $0x8] sm:$0xff]
    %v1298 = vld [vmem:[#allocation14 + $0x10] sm:$0xff]
    %v1299 = vld [vmem:[#allocation14 + $0x18] sm:$0xff]
    %v1300 = vld [vmem:[#allocation14 + $0x20] sm:$0xff]
    %v1301 = vld [vmem:[#allocation14 + $0x28] sm:$0xff]
    %v1302 = vld [vmem:[#allocation14 + $0x30] sm:$0xff]
    %v1303 = vld [vmem:[#allocation14 + $0x38] sm:$0xff]
    %v1304 = vld [vmem:[#allocation14 + $0x40] sm:$0xff]
    %v1305 = vld [vmem:[#allocation14 + $0x48] sm:$0xff]
    %v1306 = vld [vmem:[#allocation14 + $0x50] sm:$0xff]
    %v1307 = vld [vmem:[#allocation14 + $0x58] sm:$0xff]
    %v1308 = vld [vmem:[#allocation14 + $0x60] sm:$0xff]
    %v1309 = vld [vmem:[#allocation14 + $0x68] sm:$0xff]
    %v1310 = vld [vmem:[#allocation14 + $0x70] sm:$0xff]
    %v1311 = vld [vmem:[#allocation14 + $0x78] sm:$0xff]
    %v1312 = vld [vmem:[%s7] sm:$0x1]
    %v1314 = vperm.slane %v1312, 0
    %1316 = vmatpush.msra.mxu0 %v1311
    %1317 = vmatpush.msra.mxu0 %v1310
    %1318 = vmatpush.msra.mxu0 %v1309
    %1319 = vmatpush.msra.mxu0 %v1308
    %1320 = vmatpush.msra.mxu0 %v1307
    %1321 = vmatpush.msra.mxu0 %v1306
    %1322 = vmatpush.msra.mxu0 %v1305
    %1323 = vmatpush.msra.mxu0 %v1304
    %1324 = vmatpush.msra.mxu0 %v1303
    %1325 = vmatpush.msra.mxu0 %v1302
    %1326 = vmatpush.msra.mxu0 %v1301
    %1327 = vmatpush.msra.mxu0 %v1300
    %1328 = vmatpush.msra.mxu0 %v1299
    %1329 = vmatpush.msra.mxu0 %v1298
    %1330 = vmatpush.msra.mxu0 %v1297
    %1331 = vmatpush.msra.mxu0 %v1296
    %1332 = vmatmul.f32.gmra.mxu0 %v1288
    %v1333 = vpop.f32.mrf.mxu0
    %v1334 = vadd.f32 %v1314, %v1333
    %1335 = vmatmul.f32.gmra.mxu0 %v1289
    %v1336 = vpop.f32.mrf.mxu0
    %v1337 = vadd.f32 %v1314, %v1336
    %1338 = vmatmul.f32.gmra.mxu0 %v1290
    %v1339 = vpop.f32.mrf.mxu0
    %v1340 = vadd.f32 %v1314, %v1339
    %1341 = vmatmul.f32.gmra.mxu0 %v1291
    %v1342 = vpop.f32.mrf.mxu0
    %v1343 = vadd.f32 %v1314, %v1342
    %1344 = vmatmul.f32.gmra.mxu0 %v1292
    %v1345 = vpop.f32.mrf.mxu0
    %v1346 = vadd.f32 %v1314, %v1345
    %1347 = vmatmul.f32.gmra.mxu0 %v1293
    %v1348 = vpop.f32.mrf.mxu0
    %v1349 = vadd.f32 %v1314, %v1348
    %1350 = vmatmul.f32.gmra.mxu0 %v1294
    %v1351 = vpop.f32.mrf.mxu0
    %v1352 = vadd.f32 %v1314, %v1351
    %1353 = vmatmul.f32.gmra.mxu0 %v1295
    %v1354 = vpop.f32.mrf.mxu0
    %v1355 = vadd.f32 %v1314, %v1354
    %1356 = vdwg.mxu0
    %1357 = vst [vmem:[#allocation16] sm:$0xff] %v1334
    %1358 = vst [vmem:[#allocation16 + $0x8] sm:$0xff] %v1337
    %1359 = vst [vmem:[#allocation16 + $0x10] sm:$0xff] %v1340
    %1360 = vst [vmem:[#allocation16 + $0x18] sm:$0xff] %v1343
    %1361 = vst [vmem:[#allocation16 + $0x20] sm:$0xff] %v1346
    %1362 = vst [vmem:[#allocation16 + $0x28] sm:$0xff] %v1349
    %1363 = vst [vmem:[#allocation16 + $0x30] sm:$0xff] %v1352
    %1364 = vst [vmem:[#allocation16 + $0x38] sm:$0xff] %v1355
    // Predicated region
    $region70: #{tpu_custom_call.1} parent=1 // pred_check
      _
    $region71: #{tpu_custom_call.1} parent=1 // pred_check_branch
      %1366 = sbr.rel (0) target = $region73
    $region72: #{tpu_custom_call.1} parent=1 // pred_region
      %1368 = vsyncadd [#allocation7], 0
      %s1369 = sshll.u32 [#allocation16], 4
      %s1370 = int_to_ptr.vmem [resolvable:$true] %s1369
      %s1371 = sshll.u32 %s8, 4
      %s1372 = int_to_ptr.hbm [resolvable:$true] %s1371
      %1377 = dma.vmem_to_hbm [thread:$0]  %s1370, 1024, %s1372, [#allocation7], 128, 128, 8
    $region73: #{tpu_custom_call.1} parent=1 // pred_fallthru
      _
    // Predicated region
    $region74: #{tpu_custom_call.1} parent=1 // pred_check
      _
    $region75: #{tpu_custom_call.1} parent=1 // pred_check_branch
      %1379 = sbr.rel (0) target = $region77
    $region76: #{tpu_custom_call.1} parent=1 // pred_region
      %1381 = vsyncadd [#allocation18], 0
      %s1383 = sshll.u32 [#allocation17], 4
      %s1384 = int_to_ptr.vmem [resolvable:$true] %s1383
      %s1385 = sshll.u32 %s9, 4
      %s1386 = int_to_ptr.hbm [resolvable:$true] %s1385
      %1388 = dma.vmem_to_hbm [thread:$0]  %s1384, 128, %s1386, [#allocation18]
    $region77: #{tpu_custom_call.1} parent=1 // pred_fallthru
      _
    // Predicated region
    $region78: #{tpu_custom_call.1} parent=1 // pred_check
      _
    $region79: #{tpu_custom_call.1} parent=1 // pred_check_branch
      %1390 = sbr.rel (0) target = $region81
    $region80: #{tpu_custom_call.1} parent=1 // pred_region
      %1392 = vsyncadd [#allocation18], 0
      %s1394 = sshll.u32 [#allocation19], 4
      %s1395 = int_to_ptr.vmem [resolvable:$true] %s1394
      %s1396 = sshll.u32 %s10, 4
      %s1397 = int_to_ptr.hbm [resolvable:$true] %s1396
      %1399 = dma.vmem_to_hbm [thread:$0]  %s1395, 128, %s1397, [#allocation18]
    $region81: #{tpu_custom_call.1} parent=1 // pred_fallthru
      _
    // Predicated region
    $region82: #{tpu_custom_call.1} parent=1 // pred_check
      _
    $region83: #{tpu_custom_call.1} parent=1 // pred_check_branch
      %1401 = sbr.rel (0) target = $region85
    $region84: #{tpu_custom_call.1} parent=1 // pred_region
      %1403 = dma.done [#allocation7], 1024
    $region85: #{tpu_custom_call.1} parent=1 // pred_fallthru
      _
    // Predicated region
    $region86: #{tpu_custom_call.1} parent=1 // pred_check
      _
    $region87: #{tpu_custom_call.1} parent=1 // pred_check_branch
      %1405 = sbr.rel (0) target = $region89
    $region88: #{tpu_custom_call.1} parent=1 // pred_region
      %1407 = dma.done [#allocation18], 128
    $region89: #{tpu_custom_call.1} parent=1 // pred_fallthru
      _
    // Predicated region
    $region90: #{tpu_custom_call.1} parent=1 // pred_check
      _
    $region91: #{tpu_custom_call.1} parent=1 // pred_check_branch
      %1409 = sbr.rel (0) target = $region93
    $region92: #{tpu_custom_call.1} parent=1 // pred_region
      %1411 = dma.done [#allocation18], 128
    $region93: #{tpu_custom_call.1} parent=1 // pred_fallthru
      _
    %1412 = vsyncpa [#allocation6], 1
    %1413 = vsyncpa [#allocation9], 1
    %1414 = vsyncpa [#allocation12], 1
    %1415 = vsyncpa [#allocation15], 1
    %1416 = vsyncpa [#allocation7], 1
    %1417 = vsyncpa [#allocation18], 1

// kernel: tpu_custom_call.1
$region0: #{tpu_custom_call.1}
  #allocation0 [shape = 'u32[]', space=smem, size = 0x4, offset = 0x4, fixed_abs, tag = 'smem constant byte address 0x4 - core index']
  #allocation1 [shape = 'u32[72,128]{1,0:T(1,128)}', space=vmem, size = 0x9000, scoped, tag = 'internal scratch']
  #allocation2 [shape = 'f32[8,128]{1,0:T(8,128)}', space=vmem, size = 0x1000, scoped, tag = 'scratch operand']
  #allocation3 [shape = 'f32[8,128]{1,0:T(8,128)}', space=vmem, size = 0x1000, scoped, tag = 'scratch operand']
  #allocation4 [shape = 'f32[8,8,128]{2,1,0:T(8,128)}', space=vmem, size = 0x8000, scoped, tag = 'scratch operand']
  %s0 = inlined_call_operand.hbm [shape: f32[8,8,128], index: 0, kind: input, shape index: {}]
  %s1 = inlined_call_operand.hbm [shape: f32[1,8,128], index: 1, kind: input, shape index: {}]
  %s2 = inlined_call_operand.hbm [shape: f32[1,8,128], index: 2, kind: input, shape index: {}]
  %s3 = inlined_call_operand.hbm [shape: f32[128,512], index: 3, kind: input, shape index: {}]
  %s4 = inlined_call_operand.hbm [shape: f32[128,512], index: 4, kind: input, shape index: {}]
  %s5 = inlined_call_operand.vmem [shape: f32[1,512], index: 5, kind: input, shape index: {}]
  %s6 = inlined_call_operand.hbm [shape: f32[128,128], index: 6, kind: input, shape index: {}]
  %s7 = inlined_call_operand.vmem [shape: f32[1,128], index: 7, kind: input, shape index: {}]
  %s8 = inlined_call_operand.hbm [shape: f32[8,8,128], index: 8, kind: output, shape index: {0}]
  %s9 = inlined_call_operand.hbm [shape: f32[1,8,128], index: 9, kind: output, shape index: {1}]
  %s10 = inlined_call_operand.hbm [shape: f32[1,8,128], index: 10, kind: output, shape index: {2}]
  %11 = xla_tuple %s8, %s9, %s10
  %s12 = sld [smem:[#allocation0]]
  $region94: #{tpu_custom_call.1} parent=0
    _
  %s14 = ssub.s32 1, %s12
  %s15 = scalar_select 0, %s14, %s12
  $region1: #{tpu_custom_call.1} parent=0
    #allocation5 [shape = 'u8[32768]{0}', space=vmem, size = 0x8000, scoped, tag = 'input window, operand 0, single buffered']
    #allocation6 [shape = 's32[1]{0}', space=sflag, size = 0x4, scoped, tag = 'scoped memory for tpu_custom_call.1']
    #allocation7 [shape = 's32[1]{0}', space=sflag, size = 0x4, scoped, tag = 'scoped memory for tpu_custom_call.1']
    #allocation8 [shape = 'u8[4096]{0}', space=vmem, size = 0x1000, scoped, tag = 'input window, operand 1, single buffered']
    #allocation9 [shape = 's32[1]{0}', space=sflag, size = 0x4, scoped, tag = 'scoped memory for tpu_custom_call.1']
    #allocation10 [shape = 'u8[4096]{0}', space=vmem, size = 0x1000, scoped, tag = 'input window, operand 2, single buffered']
    #allocation11 [shape = 'u8[262144]{0}', space=vmem, size = 0x40000, scoped, tag = 'input window, operand 3, single buffered']
    #allocation12 [shape = 's32[1]{0}', space=sflag, size = 0x4, scoped, tag = 'scoped memory for tpu_custom_call.1']
    #allocation13 [shape = 'u8[262144]{0}', space=vmem, size = 0x40000, scoped, tag = 'input window, operand 4, single buffered']
    #allocation14 [shape = 'u8[65536]{0}', space=vmem, size = 0x10000, scoped, tag = 'input window, operand 6, single buffered']
    #allocation15 [shape = 's32[1]{0}', space=sflag, size = 0x4, scoped, tag = 'scoped memory for tpu_custom_call.1']
    #allocation16 [shape = 'u8[32768]{0}', space=vmem, size = 0x8000, scoped, tag = 'output window, operand 0, single buffered']
    #allocation17 [shape = 'u8[4096]{0}', space=vmem, size = 0x1000, scoped, tag = 'output window, operand 1, single buffered']
    #allocation18 [shape = 's32[1]{0}', space=sflag, size = 0x4, scoped, tag = 'scoped memory for tpu_custom_call.1']
    #allocation19 [shape = 'u8[4096]{0}', space=vmem, size = 0x1000, scoped, tag = 'output window, operand 2, single buffered']
    %16 = vsyncpa [#allocation6], 0
    %17 = vsyncpa [#allocation9], 0
    %18 = vsyncpa [#allocation12], 0
    %19 = vsyncpa [#allocation15], 0
    %20 = vsyncpa [#allocation7], 0
    %21 = vsyncpa [#allocation18], 0
    // Predicated region
    $region2: #{tpu_custom_call.1} parent=1 // pred_check
      _
    $region3: #{tpu_custom_call.1} parent=1 // pred_check_branch
      %23 = sbr.rel (0) target = $region5
    $region4: #{tpu_custom_call.1} parent=1 // pred_region
      %25 = vsyncadd [#allocation6], 0
      %s26 = sshll.u32 %s0, 4
      %s27 = int_to_ptr.hbm [resolvable:$true] %s26
      %s28 = sshll.u32 [#allocation5], 4
      %s29 = int_to_ptr.vmem [resolvable:$true] %s28
      %34 = dma.hbm_to_vmem [thread:$0]  %s27, 1024, %s29, [#allocation6], 128, 128, 8
    $region5: #{tpu_custom_call.1} parent=1 // pred_fallthru
      _
    // Predicated region
    $region6: #{tpu_custom_call.1} parent=1 // pred_check
      _
    $region7: #{tpu_custom_call.1} parent=1 // pred_check_branch
      %36 = sbr.rel (0) target = $region9
    $region8: #{tpu_custom_call.1} parent=1 // pred_region
      %38 = vsyncadd [#allocation9], 0
      %s40 = sshll.u32 %s1, 4
      %s41 = int_to_ptr.hbm [resolvable:$true] %s40
      %s42 = sshll.u32 [#allocation8], 4
      %s43 = int_to_ptr.vmem [resolvable:$true] %s42
      %45 = dma.hbm_to_vmem [thread:$0]  %s41, 128, %s43, [#allocation9]
    $region9: #{tpu_custom_call.1} parent=1 // pred_fallthru
      _
    // Predicated region
    $region10: #{tpu_custom_call.1} parent=1 // pred_check
      _
    $region11: #{tpu_custom_call.1} parent=1 // pred_check_branch
      %47 = sbr.rel (0) target = $region13
    $region12: #{tpu_custom_call.1} parent=1 // pred_region
      %49 = vsyncadd [#allocation9], 0
      %s51 = sshll.u32 %s2, 4
      %s52 = int_to_ptr.hbm [resolvable:$true] %s51
      %s53 = sshll.u32 [#allocation10], 4
      %s54 = int_to_ptr.vmem [resolvable:$true] %s53
      %56 = dma.hbm_to_vmem [thread:$0]  %s52, 128, %s54, [#allocation9]
    $region13: #{tpu_custom_call.1} parent=1 // pred_fallthru
      _
    // Predicated region
    $region14: #{tpu_custom_call.1} parent=1 // pred_check
      _
    $region15: #{tpu_custom_call.1} parent=1 // pred_check_branch
      %58 = sbr.rel (0) target = $region17
    $region16: #{tpu_custom_call.1} parent=1 // pred_region
      %60 = vsyncadd [#allocation12], 0
      %s61 = sshll.u32 %s3, 4
      %s62 = int_to_ptr.hbm [resolvable:$true] %s61
      %s63 = sshll.u32 [#allocation11], 4
      %s64 = int_to_ptr.vmem [resolvable:$true] %s63
      %69 = dma.hbm_to_vmem [thread:$0]  %s62, 8192, %s64, [#allocation12], 512, 512, 32
    $region17: #{tpu_custom_call.1} parent=1 // pred_fallthru
      _
    // Predicated region
    $region18: #{tpu_custom_call.1} parent=1 // pred_check
      _
    $region19: #{tpu_custom_call.1} parent=1 // pred_check_branch
      %71 = sbr.rel (0) target = $region21
    $region20: #{tpu_custom_call.1} parent=1 // pred_region
      %73 = vsyncadd [#allocation12], 0
      %s74 = sshll.u32 %s4, 4
      %s75 = int_to_ptr.hbm [resolvable:$true] %s74
      %s76 = sshll.u32 [#allocation13], 4
      %s77 = int_to_ptr.vmem [resolvable:$true] %s76
      %82 = dma.hbm_to_vmem [thread:$0]  %s75, 8192, %s77, [#allocation12], 512, 512, 32
    $region21: #{tpu_custom_call.1} parent=1 // pred_fallthru
      _
    // Predicated region
    $region22: #{tpu_custom_call.1} parent=1 // pred_check
      _
    $region23: #{tpu_custom_call.1} parent=1 // pred_check_branch
      %84 = sbr.rel (0) target = $region25
    $region24: #{tpu_custom_call.1} parent=1 // pred_region
      _
    $region25: #{tpu_custom_call.1} parent=1 // pred_fallthru
      _
    // Predicated region
    $region26: #{tpu_custom_call.1} parent=1 // pred_check
      _
    $region27: #{tpu_custom_call.1} parent=1 // pred_check_branch
      %86 = sbr.rel (0) target = $region29
    $region28: #{tpu_custom_call.1} parent=1 // pred_region
      %88 = vsyncadd [#allocation15], 0
      %s89 = sshll.u32 %s6, 4
      %s90 = int_to_ptr.hbm [resolvable:$true] %s89
      %s91 = sshll.u32 [#allocation14], 4
      %s92 = int_to_ptr.vmem [resolvable:$true] %s91
      %97 = dma.hbm_to_vmem [thread:$0]  %s90, 2048, %s92, [#allocation15], 128, 128, 8
    $region29: #{tpu_custom_call.1} parent=1 // pred_fallthru
      _
    // Predicated region
    $region30: #{tpu_custom_call.1} parent=1 // pred_check
      _
    $region31: #{tpu_custom_call.1} parent=1 // pred_check_branch
      %99 = sbr.rel (0) target = $region33
    $region32: #{tpu_custom_call.1} parent=1 // pred_region
      _
    $region33: #{tpu_custom_call.1} parent=1 // pred_fallthru
      _
    // Predicated region
    $region34: #{tpu_custom_call.1} parent=1 // pred_check
      _
    $region35: #{tpu_custom_call.1} parent=1 // pred_check_branch
      %101 = sbr.rel (0) target = $region37
    $region36: #{tpu_custom_call.1} parent=1 // pred_region
      %103 = dma.done [#allocation6], 1024
    $region37: #{tpu_custom_call.1} parent=1 // pred_fallthru
      _
    // Predicated region
    $region38: #{tpu_custom_call.1} parent=1 // pred_check
      _
    $region39: #{tpu_custom_call.1} parent=1 // pred_check_branch
      %105 = sbr.rel (0) target = $region41
    $region40: #{tpu_custom_call.1} parent=1 // pred_region
      %107 = dma.done [#allocation9], 128
    $region41: #{tpu_custom_call.1} parent=1 // pred_fallthru
      _
    // Predicated region
    $region42: #{tpu_custom_call.1} parent=1 // pred_check
      _
    $region43: #{tpu_custom_call.1} parent=1 // pred_check_branch
      %109 = sbr.rel (0) target = $region45
    $region44: #{tpu_custom_call.1} parent=1 // pred_region
      %111 = dma.done [#allocation9], 128
    $region45: #{tpu_custom_call.1} parent=1 // pred_fallthru
      _
    // Predicated region
    $region46: #{tpu_custom_call.1} parent=1 // pred_check
      _
    $region47: #{tpu_custom_call.1} parent=1 // pred_check_branch
      %113 = sbr.rel (0) target = $region49
    $region48: #{tpu_custom_call.1} parent=1 // pred_region
      %115 = dma.done [#allocation12], 8192
    $region49: #{tpu_custom_call.1} parent=1 // pred_fallthru
      _
    // Predicated region
    $region50: #{tpu_custom_call.1} parent=1 // pred_check
      _
    $region51: #{tpu_custom_call.1} parent=1 // pred_check_branch
      %117 = sbr.rel (0) target = $region53
    $region52: #{tpu_custom_call.1} parent=1 // pred_region
      %119 = dma.done [#allocation12], 8192
    $region53: #{tpu_custom_call.1} parent=1 // pred_fallthru
      _
    // Predicated region
    $region54: #{tpu_custom_call.1} parent=1 // pred_check
      _
    $region55: #{tpu_custom_call.1} parent=1 // pred_check_branch
      %121 = sbr.rel (0) target = $region57
    $region56: #{tpu_custom_call.1} parent=1 // pred_region
      %123 = dma.done [#allocation15], 2048
    $region57: #{tpu_custom_call.1} parent=1 // pred_fallthru
      _
    %p124 = scmp.eq.s32.totalorder 0, 0
    %p125 = scmp.eq.s32.totalorder 0, 0
    %p126 = pnand %p124, %p125
    %p127 = pneg %p126
    // Predicated region
    $region58: #{tpu_custom_call.1} parent=1 // pred_check
      _
    $region59: #{tpu_custom_call.1} parent=1 // pred_check_branch
      %129 = sbr.rel (%p126) target = $region61
    $region60: #{tpu_custom_call.1} parent=1 // pred_region
      %v130 = vld [vmem:[#allocation8] sm:$0xff]
      %131 = vst [vmem:[#allocation2] sm:$0xff] %v130
      %v132 = vld [vmem:[#allocation10] sm:$0xff]
      %133 = vst [vmem:[#allocation3] sm:$0xff] %v132
    $region61: #{tpu_custom_call.1} parent=1 // pred_fallthru
      _
    // Predicated region
    $region62: #{tpu_custom_call.1} parent=1 // pred_check
      %p134 = pneg %p125
    $region63: #{tpu_custom_call.1} parent=1 // pred_check_branch
      %136 = sbr.rel (%p134) target = $region65
    $region64: #{tpu_custom_call.1} parent=1 // pred_region
      %v137 = vld [vmem:[#allocation11] sm:$0xff]
      %v138 = vld [vmem:[#allocation11 + $0x8] sm:$0xff]
      %v139 = vld [vmem:[#allocation11 + $0x10] sm:$0xff]
      %v140 = vld [vmem:[#allocation11 + $0x18] sm:$0xff]
      %v141 = vld [vmem:[#allocation11 + $0x20] sm:$0xff]
      %v142 = vld [vmem:[#allocation11 + $0x28] sm:$0xff]
      %v143 = vld [vmem:[#allocation11 + $0x30] sm:$0xff]
      %v144 = vld [vmem:[#allocation11 + $0x38] sm:$0xff]
      %v145 = vld [vmem:[#allocation11 + $0x40] sm:$0xff]
      %v146 = vld [vmem:[#allocation11 + $0x48] sm:$0xff]
      %v147 = vld [vmem:[#allocation11 + $0x50] sm:$0xff]
      %v148 = vld [vmem:[#allocation11 + $0x58] sm:$0xff]
      %v149 = vld [vmem:[#allocation11 + $0x60] sm:$0xff]
      %v150 = vld [vmem:[#allocation11 + $0x68] sm:$0xff]
      %v151 = vld [vmem:[#allocation11 + $0x70] sm:$0xff]
      %v152 = vld [vmem:[#allocation11 + $0x78] sm:$0xff]
      %v153 = vld [vmem:[#allocation11 + $0x80] sm:$0xff]
      %v154 = vld [vmem:[#allocation11 + $0x88] sm:$0xff]
      %v155 = vld [vmem:[#allocation11 + $0x90] sm:$0xff]
      %v156 = vld [vmem:[#allocation11 + $0x98] sm:$0xff]
      %v157 = vld [vmem:[#allocation11 + $0xa0] sm:$0xff]
      %v158 = vld [vmem:[#allocation11 + $0xa8] sm:$0xff]
      %v159 = vld [vmem:[#allocation11 + $0xb0] sm:$0xff]
      %v160 = vld [vmem:[#allocation11 + $0xb8] sm:$0xff]
      %v161 = vld [vmem:[#allocation11 + $0xc0] sm:$0xff]
      %v162 = vld [vmem:[#allocation11 + $0xc8] sm:$0xff]
      %v163 = vld [vmem:[#allocation11 + $0xd0] sm:$0xff]
      %v164 = vld [vmem:[#allocation11 + $0xd8] sm:$0xff]
      %v165 = vld [vmem:[#allocation11 + $0xe0] sm:$0xff]
      %v166 = vld [vmem:[#allocation11 + $0xe8] sm:$0xff]
      %v167 = vld [vmem:[#allocation11 + $0xf0] sm:$0xff]
      %v168 = vld [vmem:[#allocation11 + $0xf8] sm:$0xff]
      %v169 = vld [vmem:[#allocation11 + $0x100] sm:$0xff]
      %v170 = vld [vmem:[#allocation11 + $0x108] sm:$0xff]
      %v171 = vld [vmem:[#allocation11 + $0x110] sm:$0xff]
      %v172 = vld [vmem:[#allocation11 + $0x118] sm:$0xff]
      %v173 = vld [vmem:[#allocation11 + $0x120] sm:$0xff]
      %v174 = vld [vmem:[#allocation11 + $0x128] sm:$0xff]
      %v175 = vld [vmem:[#allocation11 + $0x130] sm:$0xff]
      %v176 = vld [vmem:[#allocation11 + $0x138] sm:$0xff]
      %v177 = vld [vmem:[#allocation11 + $0x140] sm:$0xff]
      %v178 = vld [vmem:[#allocation11 + $0x148] sm:$0xff]
      %v179 = vld [vmem:[#allocation11 + $0x150] sm:$0xff]
      %v180 = vld [vmem:[#allocation11 + $0x158] sm:$0xff]
      %v181 = vld [vmem:[#allocation11 + $0x160] sm:$0xff]
      %v182 = vld [vmem:[#allocation11 + $0x168] sm:$0xff]
      %v183 = vld [vmem:[#allocation11 + $0x170] sm:$0xff]
      %v184 = vld [vmem:[#allocation11 + $0x178] sm:$0xff]
      %v185 = vld [vmem:[#allocation11 + $0x180] sm:$0xff]
      %v186 = vld [vmem:[#allocation11 + $0x188] sm:$0xff]
      %v187 = vld [vmem:[#allocation11 + $0x190] sm:$0xff]
      %v188 = vld [vmem:[#allocation11 + $0x198] sm:$0xff]
      %v189 = vld [vmem:[#allocation11 + $0x1a0] sm:$0xff]
      %v190 = vld [vmem:[#allocation11 + $0x1a8] sm:$0xff]
      %v191 = vld [vmem:[#allocation11 + $0x1b0] sm:$0xff]
      %v192 = vld [vmem:[#allocation11 + $0x1b8] sm:$0xff]
      %v193 = vld [vmem:[#allocation11 + $0x1c0] sm:$0xff]
      %v194 = vld [vmem:[#allocation11 + $0x1c8] sm:$0xff]
      %v195 = vld [vmem:[#allocation11 + $0x1d0] sm:$0xff]
      %v196 = vld [vmem:[#allocation11 + $0x1d8] sm:$0xff]
      %v197 = vld [vmem:[#allocation11 + $0x1e0] sm:$0xff]
      %v198 = vld [vmem:[#allocation11 + $0x1e8] sm:$0xff]
      %v199 = vld [vmem:[#allocation11 + $0x1f0] sm:$0xff]
      %v200 = vld [vmem:[#allocation11 + $0x1f8] sm:$0xff]
      %v201 = vld [vmem:[#allocation13] sm:$0xff]
      %v202 = vld [vmem:[#allocation13 + $0x8] sm:$0xff]
      %v203 = vld [vmem:[#allocation13 + $0x10] sm:$0xff]
      %v204 = vld [vmem:[#allocation13 + $0x18] sm:$0xff]
      %v205 = vld [vmem:[#allocation13 + $0x20] sm:$0xff]
      %v206 = vld [vmem:[#allocation13 + $0x28] sm:$0xff]
      %v207 = vld [vmem:[#allocation13 + $0x30] sm:$0xff]
      %v208 = vld [vmem:[#allocation13 + $0x38] sm:$0xff]
      %v209 = vld [vmem:[#allocation13 + $0x40] sm:$0xff]
      %v210 = vld [vmem:[#allocation13 + $0x48] sm:$0xff]
      %v211 = vld [vmem:[#allocation13 + $0x50] sm:$0xff]
      %v212 = vld [vmem:[#allocation13 + $0x58] sm:$0xff]
      %v213 = vld [vmem:[#allocation13 + $0x60] sm:$0xff]
      %v214 = vld [vmem:[#allocation13 + $0x68] sm:$0xff]
      %v215 = vld [vmem:[#allocation13 + $0x70] sm:$0xff]
      %v216 = vld [vmem:[#allocation13 + $0x78] sm:$0xff]
      %v217 = vld [vmem:[#allocation13 + $0x80] sm:$0xff]
      %v218 = vld [vmem:[#allocation13 + $0x88] sm:$0xff]
      %v219 = vld [vmem:[#allocation13 + $0x90] sm:$0xff]
      %v220 = vld [vmem:[#allocation13 + $0x98] sm:$0xff]
      %v221 = vld [vmem:[#allocation13 + $0xa0] sm:$0xff]
      %v222 = vld [vmem:[#allocation13 + $0xa8] sm:$0xff]
      %v223 = vld [vmem:[#allocation13 + $0xb0] sm:$0xff]
      %v224 = vld [vmem:[#allocation13 + $0xb8] sm:$0xff]
      %v225 = vld [vmem:[#allocation13 + $0xc0] sm:$0xff]
      %v226 = vld [vmem:[#allocation13 + $0xc8] sm:$0xff]
      %v227 = vld [vmem:[#allocation13 + $0xd0] sm:$0xff]
      %v228 = vld [vmem:[#allocation13 + $0xd8] sm:$0xff]
      %v229 = vld [vmem:[#allocation13 + $0xe0] sm:$0xff]
      %v230 = vld [vmem:[#allocation13 + $0xe8] sm:$0xff]
      %v231 = vld [vmem:[#allocation13 + $0xf0] sm:$0xff]
      %v232 = vld [vmem:[#allocation13 + $0xf8] sm:$0xff]
      %v233 = vld [vmem:[#allocation13 + $0x100] sm:$0xff]
      %v234 = vld [vmem:[#allocation13 + $0x108] sm:$0xff]
      %v235 = vld [vmem:[#allocation13 + $0x110] sm:$0xff]
      %v236 = vld [vmem:[#allocation13 + $0x118] sm:$0xff]
      %v237 = vld [vmem:[#allocation13 + $0x120] sm:$0xff]
      %v238 = vld [vmem:[#allocation13 + $0x128] sm:$0xff]
      %v239 = vld [vmem:[#allocation13 + $0x130] sm:$0xff]
      %v240 = vld [vmem:[#allocation13 + $0x138] sm:$0xff]
      %v241 = vld [vmem:[#allocation13 + $0x140] sm:$0xff]
      %v242 = vld [vmem:[#allocation13 + $0x148] sm:$0xff]
      %v243 = vld [vmem:[#allocation13 + $0x150] sm:$0xff]
      %v244 = vld [vmem:[#allocation13 + $0x158] sm:$0xff]
      %v245 = vld [vmem:[#allocation13 + $0x160] sm:$0xff]
      %v246 = vld [vmem:[#allocation13 + $0x168] sm:$0xff]
      %v247 = vld [vmem:[#allocation13 + $0x170] sm:$0xff]
      %v248 = vld [vmem:[#allocation13 + $0x178] sm:$0xff]
      %v249 = vld [vmem:[#allocation13 + $0x180] sm:$0xff]
      %v250 = vld [vmem:[#allocation13 + $0x188] sm:$0xff]
      %v251 = vld [vmem:[#allocation13 + $0x190] sm:$0xff]
      %v252 = vld [vmem:[#allocation13 + $0x198] sm:$0xff]
      %v253 = vld [vmem:[#allocation13 + $0x1a0] sm:$0xff]
      %v254 = vld [vmem:[#allocation13 + $0x1a8] sm:$0xff]
      %v255 = vld [vmem:[#allocation13 + $0x1b0] sm:$0xff]
      %v256 = vld [vmem:[#allocation13 + $0x1b8] sm:$0xff]
      %v257 = vld [vmem:[#allocation13 + $0x1c0] sm:$0xff]
      %v258 = vld [vmem:[#allocation13 + $0x1c8] sm:$0xff]
      %v259 = vld [vmem:[#allocation13 + $0x1d0] sm:$0xff]
      %v260 = vld [vmem:[#allocation13 + $0x1d8] sm:$0xff]
      %v261 = vld [vmem:[#allocation13 + $0x1e0] sm:$0xff]
      %v262 = vld [vmem:[#allocation13 + $0x1e8] sm:$0xff]
      %v263 = vld [vmem:[#allocation13 + $0x1f0] sm:$0xff]
      %v264 = vld [vmem:[#allocation13 + $0x1f8] sm:$0xff]
      %v265 = vld [vmem:[%s5] sm:$0xf]
      %v266 = vld [vmem:[#allocation5] sm:$0xff]
      %v267 = vld [vmem:[#allocation5 + $0x8] sm:$0xff]
      %v268 = vld [vmem:[#allocation5 + $0x10] sm:$0xff]
      %v269 = vld [vmem:[#allocation5 + $0x18] sm:$0xff]
      %v270 = vld [vmem:[#allocation5 + $0x20] sm:$0xff]
      %v271 = vld [vmem:[#allocation5 + $0x28] sm:$0xff]
      %v272 = vld [vmem:[#allocation5 + $0x30] sm:$0xff]
      %v273 = vld [vmem:[#allocation5 + $0x38] sm:$0xff]
      %v275 = vperm.slane %v265, 0
      %v276 = vperm.slane %v265, 1
      %v277 = vperm.slane %v265, 2
      %v278 = vperm.slane %v265, 3
      %283 = vmatpush.msra.mxu0 %v197
      %284 = vmatpush.msra.mxu0 %v193
      %285 = vmatpush.msra.mxu0 %v189
      %286 = vmatpush.msra.mxu0 %v185
      %287 = vmatpush.msra.mxu0 %v181
      %288 = vmatpush.msra.mxu0 %v177
      %289 = vmatpush.msra.mxu0 %v173
      %290 = vmatpush.msra.mxu0 %v169
      %291 = vmatpush.msra.mxu0 %v165
      %292 = vmatpush.msra.mxu0 %v161
      %293 = vmatpush.msra.mxu0 %v157
      %294 = vmatpush.msra.mxu0 %v153
      %295 = vmatpush.msra.mxu0 %v149
      %296 = vmatpush.msra.mxu0 %v145
      %297 = vmatpush.msra.mxu0 %v141
      %298 = vmatpush.msra.mxu0 %v137
      %299 = vmatmul.f32.gmra.mxu0 %v266
      %v300 = vpop.f32.mrf.mxu0
      %v301 = vadd.f32 %v275, %v300
      %302 = vmatmul.f32.gmra.mxu0 %v267
      %v303 = vpop.f32.mrf.mxu0
      %v304 = vadd.f32 %v275, %v303
      %305 = vmatmul.f32.gmra.mxu0 %v268
      %v306 = vpop.f32.mrf.mxu0
      %v307 = vadd.f32 %v275, %v306
      %308 = vmatmul.f32.gmra.mxu0 %v269
      %v309 = vpop.f32.mrf.mxu0
      %v310 = vadd.f32 %v275, %v309
      %311 = vmatmul.f32.gmra.mxu0 %v270
      %v312 = vpop.f32.mrf.mxu0
      %v313 = vadd.f32 %v275, %v312
      %314 = vmatmul.f32.gmra.mxu0 %v271
      %v315 = vpop.f32.mrf.mxu0
      %v316 = vadd.f32 %v275, %v315
      %317 = vmatmul.f32.gmra.mxu0 %v272
      %v318 = vpop.f32.mrf.mxu0
      %v319 = vadd.f32 %v275, %v318
      %320 = vmatmul.f32.gmra.mxu0 %v273
      %v321 = vpop.f32.mrf.mxu0
      %v322 = vadd.f32 %v275, %v321
      %323 = vdwg.mxu0
      %324 = vmatpush.msra.mxu0 %v198
      %325 = vmatpush.msra.mxu0 %v194
      %326 = vmatpush.msra.mxu0 %v190
      %327 = vmatpush.msra.mxu0 %v186
      %328 = vmatpush.msra.mxu0 %v182
      %329 = vmatpush.msra.mxu0 %v178
      %330 = vmatpush.msra.mxu0 %v174
      %331 = vmatpush.msra.mxu0 %v170
      %332 = vmatpush.msra.mxu0 %v166
      %333 = vmatpush.msra.mxu0 %v162
      %334 = vmatpush.msra.mxu0 %v158
      %335 = vmatpush.msra.mxu0 %v154
      %336 = vmatpush.msra.mxu0 %v150
      %337 = vmatpush.msra.mxu0 %v146
      %338 = vmatpush.msra.mxu0 %v142
      %339 = vmatpush.msra.mxu0 %v138
      %340 = vmatmul.f32.gmra.mxu0 %v266
      %v341 = vpop.f32.mrf.mxu0
      %v342 = vadd.f32 %v276, %v341
      %343 = vmatmul.f32.gmra.mxu0 %v267
      %v344 = vpop.f32.mrf.mxu0
      %v345 = vadd.f32 %v276, %v344
      %346 = vmatmul.f32.gmra.mxu0 %v268
      %v347 = vpop.f32.mrf.mxu0
      %v348 = vadd.f32 %v276, %v347
      %349 = vmatmul.f32.gmra.mxu0 %v269
      %v350 = vpop.f32.mrf.mxu0
      %v351 = vadd.f32 %v276, %v350
      %352 = vmatmul.f32.gmra.mxu0 %v270
      %v353 = vpop.f32.mrf.mxu0
      %v354 = vadd.f32 %v276, %v353
      %355 = vmatmul.f32.gmra.mxu0 %v271
      %v356 = vpop.f32.mrf.mxu0
      %v357 = vadd.f32 %v276, %v356
      %358 = vmatmul.f32.gmra.mxu0 %v272
      %v359 = vpop.f32.mrf.mxu0
      %v360 = vadd.f32 %v276, %v359
      %361 = vmatmul.f32.gmra.mxu0 %v273
      %v362 = vpop.f32.mrf.mxu0
      %v363 = vadd.f32 %v276, %v362
      %364 = vdwg.mxu0
      %365 = vmatpush.msra.mxu0 %v199
      %366 = vmatpush.msra.mxu0 %v195
      %367 = vmatpush.msra.mxu0 %v191
      %368 = vmatpush.msra.mxu0 %v187
      %369 = vmatpush.msra.mxu0 %v183
      %370 = vmatpush.msra.mxu0 %v179
      %371 = vmatpush.msra.mxu0 %v175
      %372 = vmatpush.msra.mxu0 %v171
      %373 = vmatpush.msra.mxu0 %v167
      %374 = vmatpush.msra.mxu0 %v163
      %375 = vmatpush.msra.mxu0 %v159
      %376 = vmatpush.msra.mxu0 %v155
      %377 = vmatpush.msra.mxu0 %v151
      %378 = vmatpush.msra.mxu0 %v147
      %379 = vmatpush.msra.mxu0 %v143
      %380 = vmatpush.msra.mxu0 %v139
      %381 = vmatmul.f32.gmra.mxu0 %v266
      %v382 = vpop.f32.mrf.mxu0
      %v383 = vadd.f32 %v277, %v382
      %384 = vmatmul.f32.gmra.mxu0 %v267
      %v385 = vpop.f32.mrf.mxu0
      %v386 = vadd.f32 %v277, %v385
      %387 = vmatmul.f32.gmra.mxu0 %v268
      %v388 = vpop.f32.mrf.mxu0
      %v389 = vadd.f32 %v277, %v388
      %390 = vmatmul.f32.gmra.mxu0 %v269
      %v391 = vpop.f32.mrf.mxu0
      %v392 = vadd.f32 %v277, %v391
      %393 = vmatmul.f32.gmra.mxu0 %v270
      %v394 = vpop.f32.mrf.mxu0
      %v395 = vadd.f32 %v277, %v394
      %396 = vmatmul.f32.gmra.mxu0 %v271
      %v397 = vpop.f32.mrf.mxu0
      %v398 = vadd.f32 %v277, %v397
      %399 = vmatmul.f32.gmra.mxu0 %v272
      %v400 = vpop.f32.mrf.mxu0
      %v401 = vadd.f32 %v277, %v400
      %402 = vmatmul.f32.gmra.mxu0 %v273
      %v403 = vpop.f32.mrf.mxu0
      %v404 = vadd.f32 %v277, %v403
      %405 = vdwg.mxu0
      %406 = vmatpush.msra.mxu0 %v200
      %407 = vmatpush.msra.mxu0 %v196
      %408 = vmatpush.msra.mxu0 %v192
      %409 = vmatpush.msra.mxu0 %v188
      %410 = vmatpush.msra.mxu0 %v184
      %411 = vmatpush.msra.mxu0 %v180
      %412 = vmatpush.msra.mxu0 %v176
      %413 = vmatpush.msra.mxu0 %v172
      %414 = vmatpush.msra.mxu0 %v168
      %415 = vmatpush.msra.mxu0 %v164
      %416 = vmatpush.msra.mxu0 %v160
      %417 = vmatpush.msra.mxu0 %v156
      %418 = vmatpush.msra.mxu0 %v152
      %419 = vmatpush.msra.mxu0 %v148
      %420 = vmatpush.msra.mxu0 %v144
      %421 = vmatpush.msra.mxu0 %v140
      %422 = vmatmul.f32.gmra.mxu0 %v266
      %v423 = vpop.f32.mrf.mxu0
      %v424 = vadd.f32 %v278, %v423
      %425 = vmatmul.f32.gmra.mxu0 %v267
      %v426 = vpop.f32.mrf.mxu0
      %v427 = vadd.f32 %v278, %v426
      %428 = vmatmul.f32.gmra.mxu0 %v268
      %v429 = vpop.f32.mrf.mxu0
      %v430 = vadd.f32 %v278, %v429
      %431 = vmatmul.f32.gmra.mxu0 %v269
      %v432 = vpop.f32.mrf.mxu0
      %v433 = vadd.f32 %v278, %v432
      %434 = vmatmul.f32.gmra.mxu0 %v270
      %v435 = vpop.f32.mrf.mxu0
      %v436 = vadd.f32 %v278, %v435
      %437 = vmatmul.f32.gmra.mxu0 %v271
      %v438 = vpop.f32.mrf.mxu0
      %v439 = vadd.f32 %v278, %v438
      %440 = vmatmul.f32.gmra.mxu0 %v272
      %v441 = vpop.f32.mrf.mxu0
      %v442 = vadd.f32 %v278, %v441
      %443 = vmatmul.f32.gmra.mxu0 %v273
      %v444 = vpop.f32.mrf.mxu0
      %v445 = vadd.f32 %v278, %v444
      %446 = vdwg.mxu0
      %v447 = vld [vmem:[#allocation2] sm:$0xff]
      %v448 = vld [vmem:[#allocation3] sm:$0xff]
      %449 = vmatpush.msra.mxu0 %v261
      %450 = vmatpush.msra.mxu0 %v257
      %451 = vmatpush.msra.mxu0 %v253
      %452 = vmatpush.msra.mxu0 %v249
      %453 = vmatpush.msra.mxu0 %v245
      %454 = vmatpush.msra.mxu0 %v241
      %455 = vmatpush.msra.mxu0 %v237
      %456 = vmatpush.msra.mxu0 %v233
      %457 = vmatpush.msra.mxu0 %v229
      %458 = vmatpush.msra.mxu0 %v225
      %459 = vmatpush.msra.mxu0 %v221
      %460 = vmatpush.msra.mxu0 %v217
      %461 = vmatpush.msra.mxu0 %v213
      %462 = vmatpush.msra.mxu0 %v209
      %463 = vmatpush.msra.mxu0 %v205
      %464 = vmatpush.msra.mxu0 %v201
      %465 = vmatmul.f32.gmra.mxu0 %v447
      %v466 = vpop.f32.mrf.mxu0
      %v467 = vadd.f32 0.0, %v466
      %468 = vdwg.mxu0
      %469 = vmatpush.msra.mxu0 %v262
      %470 = vmatpush.msra.mxu0 %v258
      %471 = vmatpush.msra.mxu0 %v254
      %472 = vmatpush.msra.mxu0 %v250
      %473 = vmatpush.msra.mxu0 %v246
      %474 = vmatpush.msra.mxu0 %v242
      %475 = vmatpush.msra.mxu0 %v238
      %476 = vmatpush.msra.mxu0 %v234
      %477 = vmatpush.msra.mxu0 %v230
      %478 = vmatpush.msra.mxu0 %v226
      %479 = vmatpush.msra.mxu0 %v222
      %480 = vmatpush.msra.mxu0 %v218
      %481 = vmatpush.msra.mxu0 %v214
      %482 = vmatpush.msra.mxu0 %v210
      %483 = vmatpush.msra.mxu0 %v206
      %484 = vmatpush.msra.mxu0 %v202
      %485 = vmatmul.f32.gmra.mxu0 %v447
      %v486 = vpop.f32.mrf.mxu0
      %v487 = vadd.f32 0.0, %v486
      %488 = vdwg.mxu0
      %489 = vmatpush.msra.mxu0 %v263
      %490 = vmatpush.msra.mxu0 %v259
      %491 = vmatpush.msra.mxu0 %v255
      %492 = vmatpush.msra.mxu0 %v251
      %493 = vmatpush.msra.mxu0 %v247
      %494 = vmatpush.msra.mxu0 %v243
      %495 = vmatpush.msra.mxu0 %v239
      %496 = vmatpush.msra.mxu0 %v235
      %497 = vmatpush.msra.mxu0 %v231
      %498 = vmatpush.msra.mxu0 %v227
      %499 = vmatpush.msra.mxu0 %v223
      %500 = vmatpush.msra.mxu0 %v219
      %501 = vmatpush.msra.mxu0 %v215
      %502 = vmatpush.msra.mxu0 %v211
      %503 = vmatpush.msra.mxu0 %v207
      %504 = vmatpush.msra.mxu0 %v203
      %505 = vmatmul.f32.gmra.mxu0 %v447
      %v506 = vpop.f32.mrf.mxu0
      %v507 = vadd.f32 0.0, %v506
      %508 = vdwg.mxu0
      %509 = vmatpush.msra.mxu0 %v264
      %510 = vmatpush.msra.mxu0 %v260
      %511 = vmatpush.msra.mxu0 %v256
      %512 = vmatpush.msra.mxu0 %v252
      %513 = vmatpush.msra.mxu0 %v248
      %514 = vmatpush.msra.mxu0 %v244
      %515 = vmatpush.msra.mxu0 %v240
      %516 = vmatpush.msra.mxu0 %v236
      %517 = vmatpush.msra.mxu0 %v232
      %518 = vmatpush.msra.mxu0 %v228
      %519 = vmatpush.msra.mxu0 %v224
      %520 = vmatpush.msra.mxu0 %v220
      %521 = vmatpush.msra.mxu0 %v216
      %522 = vmatpush.msra.mxu0 %v212
      %523 = vmatpush.msra.mxu0 %v208
      %524 = vmatpush.msra.mxu0 %v204
      %525 = vmatmul.f32.gmra.mxu0 %v447
      %v526 = vpop.f32.mrf.mxu0
      %v527 = vadd.f32 0.0, %v526
      %528 = vdwg.mxu0
      %v529 = vadd.f32 %v301, %v467
      %v530 = vadd.f32 %v342, %v487
      %v531 = vadd.f32 %v383, %v507
      %v532 = vadd.f32 %v424, %v527
      %v533 = vmul.f32 %v529, 0.5
      %v534 = vtanh.pop %v533
      %v535 = vadd.f32 %v534, 1.0
      %v536 = vmul.f32 %v535, 0.5
      %v537 = vmul.f32 %v530, 0.5
      %v538 = vtanh.pop %v537
      %v539 = vadd.f32 %v538, 1.0
      %v540 = vmul.f32 %v539, 0.5
      %v541 = vtanh.pop %v531
      %v542 = vmul.f32 %v532, 0.5
      %v543 = vtanh.pop %v542
      %v544 = vadd.f32 %v543, 1.0
      %v545 = vmul.f32 %v544, 0.5
      %v546 = vmul.f32 %v540, %v448
      %v547 = vmul.f32 %v536, %v541
      %v548 = vadd.f32 %v546, %v547
      %v549 = vtanh.pop %v548
      %v550 = vmul.f32 %v545, %v549
      %551 = vst [vmem:[#allocation4] sm:$0xff] %v550
      %552 = vmatpush.msra.mxu0 %v261
      %553 = vmatpush.msra.mxu0 %v257
      %554 = vmatpush.msra.mxu0 %v253
      %555 = vmatpush.msra.mxu0 %v249
      %556 = vmatpush.msra.mxu0 %v245
      %557 = vmatpush.msra.mxu0 %v241
      %558 = vmatpush.msra.mxu0 %v237
      %559 = vmatpush.msra.mxu0 %v233
      %560 = vmatpush.msra.mxu0 %v229
      %561 = vmatpush.msra.mxu0 %v225
      %562 = vmatpush.msra.mxu0 %v221
      %563 = vmatpush.msra.mxu0 %v217
      %564 = vmatpush.msra.mxu0 %v213
      %565 = vmatpush.msra.mxu0 %v209
      %566 = vmatpush.msra.mxu0 %v205
      %567 = vmatpush.msra.mxu0 %v201
      %568 = vmatmul.f32.gmra.mxu0 %v550
      %v569 = vpop.f32.mrf.mxu0
      %v570 = vadd.f32 0.0, %v569
      %571 = vdwg.mxu0
      %572 = vmatpush.msra.mxu0 %v262
      %573 = vmatpush.msra.mxu0 %v258
      %574 = vmatpush.msra.mxu0 %v254
      %575 = vmatpush.msra.mxu0 %v250
      %576 = vmatpush.msra.mxu0 %v246
      %577 = vmatpush.msra.mxu0 %v242
      %578 = vmatpush.msra.mxu0 %v238
      %579 = vmatpush.msra.mxu0 %v234
      %580 = vmatpush.msra.mxu0 %v230
      %581 = vmatpush.msra.mxu0 %v226
      %582 = vmatpush.msra.mxu0 %v222
      %583 = vmatpush.msra.mxu0 %v218
      %584 = vmatpush.msra.mxu0 %v214
      %585 = vmatpush.msra.mxu0 %v210
      %586 = vmatpush.msra.mxu0 %v206
      %587 = vmatpush.msra.mxu0 %v202
      %588 = vmatmul.f32.gmra.mxu0 %v550
      %v589 = vpop.f32.mrf.mxu0
      %v590 = vadd.f32 0.0, %v589
      %591 = vdwg.mxu0
      %592 = vmatpush.msra.mxu0 %v263
      %593 = vmatpush.msra.mxu0 %v259
      %594 = vmatpush.msra.mxu0 %v255
      %595 = vmatpush.msra.mxu0 %v251
      %596 = vmatpush.msra.mxu0 %v247
      %597 = vmatpush.msra.mxu0 %v243
      %598 = vmatpush.msra.mxu0 %v239
      %599 = vmatpush.msra.mxu0 %v235
      %600 = vmatpush.msra.mxu0 %v231
      %601 = vmatpush.msra.mxu0 %v227
      %602 = vmatpush.msra.mxu0 %v223
      %603 = vmatpush.msra.mxu0 %v219
      %604 = vmatpush.msra.mxu0 %v215
      %605 = vmatpush.msra.mxu0 %v211
      %606 = vmatpush.msra.mxu0 %v207
      %607 = vmatpush.msra.mxu0 %v203
      %608 = vmatmul.f32.gmra.mxu0 %v550
      %v609 = vpop.f32.mrf.mxu0
      %v610 = vadd.f32 0.0, %v609
      %611 = vdwg.mxu0
      %612 = vmatpush.msra.mxu0 %v264
      %613 = vmatpush.msra.mxu0 %v260
      %614 = vmatpush.msra.mxu0 %v256
      %615 = vmatpush.msra.mxu0 %v252
      %616 = vmatpush.msra.mxu0 %v248
      %617 = vmatpush.msra.mxu0 %v244
      %618 = vmatpush.msra.mxu0 %v240
      %619 = vmatpush.msra.mxu0 %v236
      %620 = vmatpush.msra.mxu0 %v232
      %621 = vmatpush.msra.mxu0 %v228
      %622 = vmatpush.msra.mxu0 %v224
      %623 = vmatpush.msra.mxu0 %v220
      %624 = vmatpush.msra.mxu0 %v216
      %625 = vmatpush.msra.mxu0 %v212
      %626 = vmatpush.msra.mxu0 %v208
      %627 = vmatpush.msra.mxu0 %v204
      %628 = vmatmul.f32.gmra.mxu0 %v550
      %v629 = vpop.f32.mrf.mxu0
      %v630 = vadd.f32 0.0, %v629
      %631 = vdwg.mxu0
      %v632 = vadd.f32 %v304, %v570
      %v633 = vadd.f32 %v345, %v590
      %v634 = vadd.f32 %v386, %v610
      %v635 = vadd.f32 %v427, %v630
      %v636 = vmul.f32 %v632, 0.5
      %v637 = vtanh.pop %v636
      %v638 = vadd.f32 %v637, 1.0
      %v639 = vmul.f32 %v638, 0.5
      %v640 = vmul.f32 %v633, 0.5
      %v641 = vtanh.pop %v640
      %v642 = vadd.f32 %v641, 1.0
      %v643 = vmul.f32 %v642, 0.5
      %v644 = vtanh.pop %v634
      %v645 = vmul.f32 %v635, 0.5
      %v646 = vtanh.pop %v645
      %v647 = vadd.f32 %v646, 1.0
      %v648 = vmul.f32 %v647, 0.5
      %v649 = vmul.f32 %v643, %v548
      %v650 = vmul.f32 %v639, %v644
      %v651 = vadd.f32 %v649, %v650
      %v652 = vtanh.pop %v651
      %v653 = vmul.f32 %v648, %v652
      %s654 = scalar_lea.vmem [#allocation4], 8
      %655 = vst [vmem:[%s654] sm:$0xff] %v653
      %656 = vmatpush.msra.mxu0 %v261
      %657 = vmatpush.msra.mxu0 %v257
      %658 = vmatpush.msra.mxu0 %v253
      %659 = vmatpush.msra.mxu0 %v249
      %660 = vmatpush.msra.mxu0 %v245
      %661 = vmatpush.msra.mxu0 %v241
      %662 = vmatpush.msra.mxu0 %v237
      %663 = vmatpush.msra.mxu0 %v233
      %664 = vmatpush.msra.mxu0 %v229
      %665 = vmatpush.msra.mxu0 %v225
      %666 = vmatpush.msra.mxu0 %v221
      %667 = vmatpush.msra.mxu0 %v217
      %668 = vmatpush.msra.mxu0 %v213
      %669 = vmatpush.msra.mxu0 %v209
      %670 = vmatpush.msra.mxu0 %v205
      %671 = vmatpush.msra.mxu0 %v201
      %672 = vmatmul.f32.gmra.mxu0 %v653
      %v673 = vpop.f32.mrf.mxu0
      %v674 = vadd.f32 0.0, %v673
      %675 = vdwg.mxu0
      %676 = vmatpush.msra.mxu0 %v262
      %677 = vmatpush.msra.mxu0 %v258
      %678 = vmatpush.msra.mxu0 %v254
      %679 = vmatpush.msra.mxu0 %v250
      %680 = vmatpush.msra.mxu0 %v246
      %681 = vmatpush.msra.mxu0 %v242
      %682 = vmatpush.msra.mxu0 %v238
      %683 = vmatpush.msra.mxu0 %v234
      %684 = vmatpush.msra.mxu0 %v230
      %685 = vmatpush.msra.mxu0 %v226
      %686 = vmatpush.msra.mxu0 %v222
      %687 = vmatpush.msra.mxu0 %v218
      %688 = vmatpush.msra.mxu0 %v214
      %689 = vmatpush.msra.mxu0 %v210
      %690 = vmatpush.msra.mxu0 %v206
      %691 = vmatpush.msra.mxu0 %v202
      %692 = vmatmul.f32.gmra.mxu0 %v653
      %v693 = vpop.f32.mrf.mxu0
      %v694 = vadd.f32 0.0, %v693
      %695 = vdwg.mxu0
      %696 = vmatpush.msra.mxu0 %v263
      %697 = vmatpush.msra.mxu0 %v259
      %698 = vmatpush.msra.mxu0 %v255
      %699 = vmatpush.msra.mxu0 %v251
      %700 = vmatpush.msra.mxu0 %v247
      %701 = vmatpush.msra.mxu0 %v243
      %702 = vmatpush.msra.mxu0 %v239
      %703 = vmatpush.msra.mxu0 %v235
      %704 = vmatpush.msra.mxu0 %v231
      %705 = vmatpush.msra.mxu0 %v227
      %706 = vmatpush.msra.mxu0 %v223
      %707 = vmatpush.msra.mxu0 %v219
      %708 = vmatpush.msra.mxu0 %v215
      %709 = vmatpush.msra.mxu0 %v211
      %710 = vmatpush.msra.mxu0 %v207
      %711 = vmatpush.msra.mxu0 %v203
      %712 = vmatmul.f32.gmra.mxu0 %v653
      %v713 = vpop.f32.mrf.mxu0
      %v714 = vadd.f32 0.0, %v713
      %715 = vdwg.mxu0
      %716 = vmatpush.msra.mxu0 %v264
      %717 = vmatpush.msra.mxu0 %v260
      %718 = vmatpush.msra.mxu0 %v256
      %719 = vmatpush.msra.mxu0 %v252
      %720 = vmatpush.msra.mxu0 %v248
      %721 = vmatpush.msra.mxu0 %v244
      %722 = vmatpush.msra.mxu0 %v240
      %723 = vmatpush.msra.mxu0 %v236
      %724 = vmatpush.msra.mxu0 %v232
      %725 = vmatpush.msra.mxu0 %v228
      %726 = vmatpush.msra.mxu0 %v224
      %727 = vmatpush.msra.mxu0 %v220
      %728 = vmatpush.msra.mxu0 %v216
      %729 = vmatpush.msra.mxu0 %v212
      %730 = vmatpush.msra.mxu0 %v208
      %731 = vmatpush.msra.mxu0 %v204
      %732 = vmatmul.f32.gmra.mxu0 %v653
      %v733 = vpop.f32.mrf.mxu0
      %v734 = vadd.f32 0.0, %v733
      %735 = vdwg.mxu0
      %v736 = vadd.f32 %v307, %v674
      %v737 = vadd.f32 %v348, %v694
      %v738 = vadd.f32 %v389, %v714
      %v739 = vadd.f32 %v430, %v734
      %v740 = vmul.f32 %v736, 0.5
      %v741 = vtanh.pop %v740
      %v742 = vadd.f32 %v741, 1.0
      %v743 = vmul.f32 %v742, 0.5
      %v744 = vmul.f32 %v737, 0.5
      %v745 = vtanh.pop %v744
      %v746 = vadd.f32 %v745, 1.0
      %v747 = vmul.f32 %v746, 0.5
      %v748 = vtanh.pop %v738
      %v749 = vmul.f32 %v739, 0.5
      %v750 = vtanh.pop %v749
      %v751 = vadd.f32 %v750, 1.0
      %v752 = vmul.f32 %v751, 0.5
      %v753 = vmul.f32 %v747, %v651
      %v754 = vmul.f32 %v743, %v748
      %v755 = vadd.f32 %v753, %v754
      %v756 = vtanh.pop %v755
      %v757 = vmul.f32 %v752, %v756
      %s758 = scalar_lea.vmem [#allocation4], 16
      %759 = vst [vmem:[%s758] sm:$0xff] %v757
      %760 = vmatpush.msra.mxu0 %v261
      %761 = vmatpush.msra.mxu0 %v257
      %762 = vmatpush.msra.mxu0 %v253
      %763 = vmatpush.msra.mxu0 %v249
      %764 = vmatpush.msra.mxu0 %v245
      %765 = vmatpush.msra.mxu0 %v241
      %766 = vmatpush.msra.mxu0 %v237
      %767 = vmatpush.msra.mxu0 %v233
      %768 = vmatpush.msra.mxu0 %v229
      %769 = vmatpush.msra.mxu0 %v225
      %770 = vmatpush.msra.mxu0 %v221
      %771 = vmatpush.msra.mxu0 %v217
      %772 = vmatpush.msra.mxu0 %v213
      %773 = vmatpush.msra.mxu0 %v209
      %774 = vmatpush.msra.mxu0 %v205
      %775 = vmatpush.msra.mxu0 %v201
      %776 = vmatmul.f32.gmra.mxu0 %v757
      %v777 = vpop.f32.mrf.mxu0
      %v778 = vadd.f32 0.0, %v777
      %779 = vdwg.mxu0
      %780 = vmatpush.msra.mxu0 %v262
      %781 = vmatpush.msra.mxu0 %v258
      %782 = vmatpush.msra.mxu0 %v254
      %783 = vmatpush.msra.mxu0 %v250
      %784 = vmatpush.msra.mxu0 %v246
      %785 = vmatpush.msra.mxu0 %v242
      %786 = vmatpush.msra.mxu0 %v238
      %787 = vmatpush.msra.mxu0 %v234
      %788 = vmatpush.msra.mxu0 %v230
      %789 = vmatpush.msra.mxu0 %v226
      %790 = vmatpush.msra.mxu0 %v222
      %791 = vmatpush.msra.mxu0 %v218
      %792 = vmatpush.msra.mxu0 %v214
      %793 = vmatpush.msra.mxu0 %v210
      %794 = vmatpush.msra.mxu0 %v206
      %795 = vmatpush.msra.mxu0 %v202
      %796 = vmatmul.f32.gmra.mxu0 %v757
      %v797 = vpop.f32.mrf.mxu0
      %v798 = vadd.f32 0.0, %v797
      %799 = vdwg.mxu0
      %800 = vmatpush.msra.mxu0 %v263
      %801 = vmatpush.msra.mxu0 %v259
      %802 = vmatpush.msra.mxu0 %v255
      %803 = vmatpush.msra.mxu0 %v251
      %804 = vmatpush.msra.mxu0 %v247
      %805 = vmatpush.msra.mxu0 %v243
      %806 = vmatpush.msra.mxu0 %v239
      %807 = vmatpush.msra.mxu0 %v235
      %808 = vmatpush.msra.mxu0 %v231
      %809 = vmatpush.msra.mxu0 %v227
      %810 = vmatpush.msra.mxu0 %v223
      %811 = vmatpush.msra.mxu0 %v219
      %812 = vmatpush.msra.mxu0 %v215
      %813 = vmatpush.msra.mxu0 %v211
      %814 = vmatpush.msra.mxu0 %v207
      %815 = vmatpush.msra.mxu0 %v203
      %816 = vmatmul.f32.gmra.mxu0 %v757
      %v817 = vpop.f32.mrf.mxu0
      %v818 = vadd.f32 0.0, %v817
      %819 = vdwg.mxu0
      %820 = vmatpush.msra.mxu0 %v264
      %821 = vmatpush.msra.mxu0 %v260
      %822 = vmatpush.msra.mxu0 %v256
      %823 = vmatpush.msra.mxu0 %v252
      %824 = vmatpush.msra.mxu0 %v248
      %825 = vmatpush.msra.mxu0 %v244
      %826 = vmatpush.msra.mxu0 %v240
      %827 = vmatpush.msra.mxu0 %v236
      %828 = vmatpush.msra.mxu0 %v232
      %829 = vmatpush.msra.mxu0 %v228
      %830 = vmatpush.msra.mxu0 %v224
      %831 = vmatpush.msra.mxu0 %v220
      %832 = vmatpush.msra.mxu0 %v216
      %833 = vmatpush.msra.mxu0 %v212
      %834 = vmatpush.msra.mxu0 %v208
      %835 = vmatpush.msra.mxu0 %v204
      %836 = vmatmul.f32.gmra.mxu0 %v757
      %v837 = vpop.f32.mrf.mxu0
      %v838 = vadd.f32 0.0, %v837
      %839 = vdwg.mxu0
      %v840 = vadd.f32 %v310, %v778
      %v841 = vadd.f32 %v351, %v798
      %v842 = vadd.f32 %v392, %v818
      %v843 = vadd.f32 %v433, %v838
      %v844 = vmul.f32 %v840, 0.5
      %v845 = vtanh.pop %v844
      %v846 = vadd.f32 %v845, 1.0
      %v847 = vmul.f32 %v846, 0.5
      %v848 = vmul.f32 %v841, 0.5
      %v849 = vtanh.pop %v848
      %v850 = vadd.f32 %v849, 1.0
      %v851 = vmul.f32 %v850, 0.5
      %v852 = vtanh.pop %v842
      %v853 = vmul.f32 %v843, 0.5
      %v854 = vtanh.pop %v853
      %v855 = vadd.f32 %v854, 1.0
      %v856 = vmul.f32 %v855, 0.5
      %v857 = vmul.f32 %v851, %v755
      %v858 = vmul.f32 %v847, %v852
      %v859 = vadd.f32 %v857, %v858
      %v860 = vtanh.pop %v859
      %v861 = vmul.f32 %v856, %v860
      %s862 = scalar_lea.vmem [#allocation4], 24
      %863 = vst [vmem:[%s862] sm:$0xff] %v861
      %864 = vmatpush.msra.mxu0 %v261
      %865 = vmatpush.msra.mxu0 %v257
      %866 = vmatpush.msra.mxu0 %v253
      %867 = vmatpush.msra.mxu0 %v249
      %868 = vmatpush.msra.mxu0 %v245
      %869 = vmatpush.msra.mxu0 %v241
      %870 = vmatpush.msra.mxu0 %v237
      %871 = vmatpush.msra.mxu0 %v233
      %872 = vmatpush.msra.mxu0 %v229
      %873 = vmatpush.msra.mxu0 %v225
      %874 = vmatpush.msra.mxu0 %v221
      %875 = vmatpush.msra.mxu0 %v217
      %876 = vmatpush.msra.mxu0 %v213
      %877 = vmatpush.msra.mxu0 %v209
      %878 = vmatpush.msra.mxu0 %v205
      %879 = vmatpush.msra.mxu0 %v201
      %880 = vmatmul.f32.gmra.mxu0 %v861
      %v881 = vpop.f32.mrf.mxu0
      %v882 = vadd.f32 0.0, %v881
      %883 = vdwg.mxu0
      %884 = vmatpush.msra.mxu0 %v262
      %885 = vmatpush.msra.mxu0 %v258
      %886 = vmatpush.msra.mxu0 %v254
      %887 = vmatpush.msra.mxu0 %v250
      %888 = vmatpush.msra.mxu0 %v246
      %889 = vmatpush.msra.mxu0 %v242
      %890 = vmatpush.msra.mxu0 %v238
      %891 = vmatpush.msra.mxu0 %v234
      %892 = vmatpush.msra.mxu0 %v230
      %893 = vmatpush.msra.mxu0 %v226
      %894 = vmatpush.msra.mxu0 %v222
      %895 = vmatpush.msra.mxu0 %v218
      %896 = vmatpush.msra.mxu0 %v214
      %897 = vmatpush.msra.mxu0 %v210
      %898 = vmatpush.msra.mxu0 %v206
      %899 = vmatpush.msra.mxu0 %v202
      %900 = vmatmul.f32.gmra.mxu0 %v861
      %v901 = vpop.f32.mrf.mxu0
      %v902 = vadd.f32 0.0, %v901
      %903 = vdwg.mxu0
      %904 = vmatpush.msra.mxu0 %v263
      %905 = vmatpush.msra.mxu0 %v259
      %906 = vmatpush.msra.mxu0 %v255
      %907 = vmatpush.msra.mxu0 %v251
      %908 = vmatpush.msra.mxu0 %v247
      %909 = vmatpush.msra.mxu0 %v243
      %910 = vmatpush.msra.mxu0 %v239
      %911 = vmatpush.msra.mxu0 %v235
      %912 = vmatpush.msra.mxu0 %v231
      %913 = vmatpush.msra.mxu0 %v227
      %914 = vmatpush.msra.mxu0 %v223
      %915 = vmatpush.msra.mxu0 %v219
      %916 = vmatpush.msra.mxu0 %v215
      %917 = vmatpush.msra.mxu0 %v211
      %918 = vmatpush.msra.mxu0 %v207
      %919 = vmatpush.msra.mxu0 %v203
      %920 = vmatmul.f32.gmra.mxu0 %v861
      %v921 = vpop.f32.mrf.mxu0
      %v922 = vadd.f32 0.0, %v921
      %923 = vdwg.mxu0
      %924 = vmatpush.msra.mxu0 %v264
      %925 = vmatpush.msra.mxu0 %v260
      %926 = vmatpush.msra.mxu0 %v256
      %927 = vmatpush.msra.mxu0 %v252
      %928 = vmatpush.msra.mxu0 %v248
      %929 = vmatpush.msra.mxu0 %v244
      %930 = vmatpush.msra.mxu0 %v240
      %931 = vmatpush.msra.mxu0 %v236
      %932 = vmatpush.msra.mxu0 %v232
      %933 = vmatpush.msra.mxu0 %v228
      %934 = vmatpush.msra.mxu0 %v224
      %935 = vmatpush.msra.mxu0 %v220
      %936 = vmatpush.msra.mxu0 %v216
      %937 = vmatpush.msra.mxu0 %v212
      %938 = vmatpush.msra.mxu0 %v208
      %939 = vmatpush.msra.mxu0 %v204
      %940 = vmatmul.f32.gmra.mxu0 %v861
      %v941 = vpop.f32.mrf.mxu0
      %v942 = vadd.f32 0.0, %v941
      %943 = vdwg.mxu0
      %v944 = vadd.f32 %v313, %v882
      %v945 = vadd.f32 %v354, %v902
      %v946 = vadd.f32 %v395, %v922
      %v947 = vadd.f32 %v436, %v942
      %v948 = vmul.f32 %v944, 0.5
      %v949 = vtanh.pop %v948
      %v950 = vadd.f32 %v949, 1.0
      %v951 = vmul.f32 %v950, 0.5
      %v952 = vmul.f32 %v945, 0.5
      %v953 = vtanh.pop %v952
      %v954 = vadd.f32 %v953, 1.0
      %v955 = vmul.f32 %v954, 0.5
      %v956 = vtanh.pop %v946
      %v957 = vmul.f32 %v947, 0.5
      %v958 = vtanh.pop %v957
      %v959 = vadd.f32 %v958, 1.0
      %v960 = vmul.f32 %v959, 0.5
      %v961 = vmul.f32 %v955, %v859
      %v962 = vmul.f32 %v951, %v956
      %v963 = vadd.f32 %v961, %v962
      %v964 = vtanh.pop %v963
      %v965 = vmul.f32 %v960, %v964
      %s966 = scalar_lea.vmem [#allocation4], 32
      %967 = vst [vmem:[%s966] sm:$0xff] %v965
      %968 = vmatpush.msra.mxu0 %v261
      %969 = vmatpush.msra.mxu0 %v257
      %970 = vmatpush.msra.mxu0 %v253
      %971 = vmatpush.msra.mxu0 %v249
      %972 = vmatpush.msra.mxu0 %v245
      %973 = vmatpush.msra.mxu0 %v241
      %974 = vmatpush.msra.mxu0 %v237
      %975 = vmatpush.msra.mxu0 %v233
      %976 = vmatpush.msra.mxu0 %v229
      %977 = vmatpush.msra.mxu0 %v225
      %978 = vmatpush.msra.mxu0 %v221
      %979 = vmatpush.msra.mxu0 %v217
      %980 = vmatpush.msra.mxu0 %v213
      %981 = vmatpush.msra.mxu0 %v209
      %982 = vmatpush.msra.mxu0 %v205
      %983 = vmatpush.msra.mxu0 %v201
      %984 = vmatmul.f32.gmra.mxu0 %v965
      %v985 = vpop.f32.mrf.mxu0
      %v986 = vadd.f32 0.0, %v985
      %987 = vdwg.mxu0
      %988 = vmatpush.msra.mxu0 %v262
      %989 = vmatpush.msra.mxu0 %v258
      %990 = vmatpush.msra.mxu0 %v254
      %991 = vmatpush.msra.mxu0 %v250
      %992 = vmatpush.msra.mxu0 %v246
      %993 = vmatpush.msra.mxu0 %v242
      %994 = vmatpush.msra.mxu0 %v238
      %995 = vmatpush.msra.mxu0 %v234
      %996 = vmatpush.msra.mxu0 %v230
      %997 = vmatpush.msra.mxu0 %v226
      %998 = vmatpush.msra.mxu0 %v222
      %999 = vmatpush.msra.mxu0 %v218
      %1000 = vmatpush.msra.mxu0 %v214
      %1001 = vmatpush.msra.mxu0 %v210
      %1002 = vmatpush.msra.mxu0 %v206
      %1003 = vmatpush.msra.mxu0 %v202
      %1004 = vmatmul.f32.gmra.mxu0 %v965
      %v1005 = vpop.f32.mrf.mxu0
      %v1006 = vadd.f32 0.0, %v1005
      %1007 = vdwg.mxu0
      %1008 = vmatpush.msra.mxu0 %v263
      %1009 = vmatpush.msra.mxu0 %v259
      %1010 = vmatpush.msra.mxu0 %v255
      %1011 = vmatpush.msra.mxu0 %v251
      %1012 = vmatpush.msra.mxu0 %v247
      %1013 = vmatpush.msra.mxu0 %v243
      %1014 = vmatpush.msra.mxu0 %v239
      %1015 = vmatpush.msra.mxu0 %v235
      %1016 = vmatpush.msra.mxu0 %v231
      %1017 = vmatpush.msra.mxu0 %v227
      %1018 = vmatpush.msra.mxu0 %v223
      %1019 = vmatpush.msra.mxu0 %v219
      %1020 = vmatpush.msra.mxu0 %v215
      %1021 = vmatpush.msra.mxu0 %v211
      %1022 = vmatpush.msra.mxu0 %v207
      %1023 = vmatpush.msra.mxu0 %v203
      %1024 = vmatmul.f32.gmra.mxu0 %v965
      %v1025 = vpop.f32.mrf.mxu0
      %v1026 = vadd.f32 0.0, %v1025
      %1027 = vdwg.mxu0
      %1028 = vmatpush.msra.mxu0 %v264
      %1029 = vmatpush.msra.mxu0 %v260
      %1030 = vmatpush.msra.mxu0 %v256
      %1031 = vmatpush.msra.mxu0 %v252
      %1032 = vmatpush.msra.mxu0 %v248
      %1033 = vmatpush.msra.mxu0 %v244
      %1034 = vmatpush.msra.mxu0 %v240
      %1035 = vmatpush.msra.mxu0 %v236
      %1036 = vmatpush.msra.mxu0 %v232
      %1037 = vmatpush.msra.mxu0 %v228
      %1038 = vmatpush.msra.mxu0 %v224
      %1039 = vmatpush.msra.mxu0 %v220
      %1040 = vmatpush.msra.mxu0 %v216
      %1041 = vmatpush.msra.mxu0 %v212
      %1042 = vmatpush.msra.mxu0 %v208
      %1043 = vmatpush.msra.mxu0 %v204
      %1044 = vmatmul.f32.gmra.mxu0 %v965
      %v1045 = vpop.f32.mrf.mxu0
      %v1046 = vadd.f32 0.0, %v1045
      %1047 = vdwg.mxu0
      %v1048 = vadd.f32 %v316, %v986
      %v1049 = vadd.f32 %v357, %v1006
      %v1050 = vadd.f32 %v398, %v1026
      %v1051 = vadd.f32 %v439, %v1046
      %v1052 = vmul.f32 %v1048, 0.5
      %v1053 = vtanh.pop %v1052
      %v1054 = vadd.f32 %v1053, 1.0
      %v1055 = vmul.f32 %v1054, 0.5
      %v1056 = vmul.f32 %v1049, 0.5
      %v1057 = vtanh.pop %v1056
      %v1058 = vadd.f32 %v1057, 1.0
      %v1059 = vmul.f32 %v1058, 0.5
      %v1060 = vtanh.pop %v1050
      %v1061 = vmul.f32 %v1051, 0.5
      %v1062 = vtanh.pop %v1061
      %v1063 = vadd.f32 %v1062, 1.0
      %v1064 = vmul.f32 %v1063, 0.5
      %v1065 = vmul.f32 %v1059, %v963
      %v1066 = vmul.f32 %v1055, %v1060
      %v1067 = vadd.f32 %v1065, %v1066
      %v1068 = vtanh.pop %v1067
      %v1069 = vmul.f32 %v1064, %v1068
      %s1070 = scalar_lea.vmem [#allocation4], 40
      %1071 = vst [vmem:[%s1070] sm:$0xff] %v1069
      %1072 = vmatpush.msra.mxu0 %v261
      %1073 = vmatpush.msra.mxu0 %v257
      %1074 = vmatpush.msra.mxu0 %v253
      %1075 = vmatpush.msra.mxu0 %v249
      %1076 = vmatpush.msra.mxu0 %v245
      %1077 = vmatpush.msra.mxu0 %v241
      %1078 = vmatpush.msra.mxu0 %v237
      %1079 = vmatpush.msra.mxu0 %v233
      %1080 = vmatpush.msra.mxu0 %v229
      %1081 = vmatpush.msra.mxu0 %v225
      %1082 = vmatpush.msra.mxu0 %v221
      %1083 = vmatpush.msra.mxu0 %v217
      %1084 = vmatpush.msra.mxu0 %v213
      %1085 = vmatpush.msra.mxu0 %v209
      %1086 = vmatpush.msra.mxu0 %v205
      %1087 = vmatpush.msra.mxu0 %v201
      %1088 = vmatmul.f32.gmra.mxu0 %v1069
      %v1089 = vpop.f32.mrf.mxu0
      %v1090 = vadd.f32 0.0, %v1089
      %1091 = vdwg.mxu0
      %1092 = vmatpush.msra.mxu0 %v262
      %1093 = vmatpush.msra.mxu0 %v258
      %1094 = vmatpush.msra.mxu0 %v254
      %1095 = vmatpush.msra.mxu0 %v250
      %1096 = vmatpush.msra.mxu0 %v246
      %1097 = vmatpush.msra.mxu0 %v242
      %1098 = vmatpush.msra.mxu0 %v238
      %1099 = vmatpush.msra.mxu0 %v234
      %1100 = vmatpush.msra.mxu0 %v230
      %1101 = vmatpush.msra.mxu0 %v226
      %1102 = vmatpush.msra.mxu0 %v222
      %1103 = vmatpush.msra.mxu0 %v218
      %1104 = vmatpush.msra.mxu0 %v214
      %1105 = vmatpush.msra.mxu0 %v210
      %1106 = vmatpush.msra.mxu0 %v206
      %1107 = vmatpush.msra.mxu0 %v202
      %1108 = vmatmul.f32.gmra.mxu0 %v1069
      %v1109 = vpop.f32.mrf.mxu0
      %v1110 = vadd.f32 0.0, %v1109
      %1111 = vdwg.mxu0
      %1112 = vmatpush.msra.mxu0 %v263
      %1113 = vmatpush.msra.mxu0 %v259
      %1114 = vmatpush.msra.mxu0 %v255
      %1115 = vmatpush.msra.mxu0 %v251
      %1116 = vmatpush.msra.mxu0 %v247
      %1117 = vmatpush.msra.mxu0 %v243
      %1118 = vmatpush.msra.mxu0 %v239
      %1119 = vmatpush.msra.mxu0 %v235
      %1120 = vmatpush.msra.mxu0 %v231
      %1121 = vmatpush.msra.mxu0 %v227
      %1122 = vmatpush.msra.mxu0 %v223
      %1123 = vmatpush.msra.mxu0 %v219
      %1124 = vmatpush.msra.mxu0 %v215
      %1125 = vmatpush.msra.mxu0 %v211
      %1126 = vmatpush.msra.mxu0 %v207
      %1127 = vmatpush.msra.mxu0 %v203
      %1128 = vmatmul.f32.gmra.mxu0 %v1069
      %v1129 = vpop.f32.mrf.mxu0
      %v1130 = vadd.f32 0.0, %v1129
      %1131 = vdwg.mxu0
      %1132 = vmatpush.msra.mxu0 %v264
      %1133 = vmatpush.msra.mxu0 %v260
      %1134 = vmatpush.msra.mxu0 %v256
      %1135 = vmatpush.msra.mxu0 %v252
      %1136 = vmatpush.msra.mxu0 %v248
      %1137 = vmatpush.msra.mxu0 %v244
      %1138 = vmatpush.msra.mxu0 %v240
      %1139 = vmatpush.msra.mxu0 %v236
      %1140 = vmatpush.msra.mxu0 %v232
      %1141 = vmatpush.msra.mxu0 %v228
      %1142 = vmatpush.msra.mxu0 %v224
      %1143 = vmatpush.msra.mxu0 %v220
      %1144 = vmatpush.msra.mxu0 %v216
      %1145 = vmatpush.msra.mxu0 %v212
      %1146 = vmatpush.msra.mxu0 %v208
      %1147 = vmatpush.msra.mxu0 %v204
      %1148 = vmatmul.f32.gmra.mxu0 %v1069
      %v1149 = vpop.f32.mrf.mxu0
      %v1150 = vadd.f32 0.0, %v1149
      %1151 = vdwg.mxu0
      %v1152 = vadd.f32 %v319, %v1090
      %v1153 = vadd.f32 %v360, %v1110
      %v1154 = vadd.f32 %v401, %v1130
      %v1155 = vadd.f32 %v442, %v1150
      %v1156 = vmul.f32 %v1152, 0.5
      %v1157 = vtanh.pop %v1156
      %v1158 = vadd.f32 %v1157, 1.0
      %v1159 = vmul.f32 %v1158, 0.5
      %v1160 = vmul.f32 %v1153, 0.5
      %v1161 = vtanh.pop %v1160
      %v1162 = vadd.f32 %v1161, 1.0
      %v1163 = vmul.f32 %v1162, 0.5
      %v1164 = vtanh.pop %v1154
      %v1165 = vmul.f32 %v1155, 0.5
      %v1166 = vtanh.pop %v1165
      %v1167 = vadd.f32 %v1166, 1.0
      %v1168 = vmul.f32 %v1167, 0.5
      %v1169 = vmul.f32 %v1163, %v1067
      %v1170 = vmul.f32 %v1159, %v1164
      %v1171 = vadd.f32 %v1169, %v1170
      %v1172 = vtanh.pop %v1171
      %v1173 = vmul.f32 %v1168, %v1172
      %s1174 = scalar_lea.vmem [#allocation4], 48
      %1175 = vst [vmem:[%s1174] sm:$0xff] %v1173
      %1176 = vmatpush.msra.mxu0 %v261
      %1177 = vmatpush.msra.mxu0 %v257
      %1178 = vmatpush.msra.mxu0 %v253
      %1179 = vmatpush.msra.mxu0 %v249
      %1180 = vmatpush.msra.mxu0 %v245
      %1181 = vmatpush.msra.mxu0 %v241
      %1182 = vmatpush.msra.mxu0 %v237
      %1183 = vmatpush.msra.mxu0 %v233
      %1184 = vmatpush.msra.mxu0 %v229
      %1185 = vmatpush.msra.mxu0 %v225
      %1186 = vmatpush.msra.mxu0 %v221
      %1187 = vmatpush.msra.mxu0 %v217
      %1188 = vmatpush.msra.mxu0 %v213
      %1189 = vmatpush.msra.mxu0 %v209
      %1190 = vmatpush.msra.mxu0 %v205
      %1191 = vmatpush.msra.mxu0 %v201
      %1192 = vmatmul.f32.gmra.mxu0 %v1173
      %v1193 = vpop.f32.mrf.mxu0
      %v1194 = vadd.f32 0.0, %v1193
      %1195 = vdwg.mxu0
      %1196 = vmatpush.msra.mxu0 %v262
      %1197 = vmatpush.msra.mxu0 %v258
      %1198 = vmatpush.msra.mxu0 %v254
      %1199 = vmatpush.msra.mxu0 %v250
      %1200 = vmatpush.msra.mxu0 %v246
      %1201 = vmatpush.msra.mxu0 %v242
      %1202 = vmatpush.msra.mxu0 %v238
      %1203 = vmatpush.msra.mxu0 %v234
      %1204 = vmatpush.msra.mxu0 %v230
      %1205 = vmatpush.msra.mxu0 %v226
      %1206 = vmatpush.msra.mxu0 %v222
      %1207 = vmatpush.msra.mxu0 %v218
      %1208 = vmatpush.msra.mxu0 %v214
      %1209 = vmatpush.msra.mxu0 %v210
      %1210 = vmatpush.msra.mxu0 %v206
      %1211 = vmatpush.msra.mxu0 %v202
      %1212 = vmatmul.f32.gmra.mxu0 %v1173
      %v1213 = vpop.f32.mrf.mxu0
      %v1214 = vadd.f32 0.0, %v1213
      %1215 = vdwg.mxu0
      %1216 = vmatpush.msra.mxu0 %v263
      %1217 = vmatpush.msra.mxu0 %v259
      %1218 = vmatpush.msra.mxu0 %v255
      %1219 = vmatpush.msra.mxu0 %v251
      %1220 = vmatpush.msra.mxu0 %v247
      %1221 = vmatpush.msra.mxu0 %v243
      %1222 = vmatpush.msra.mxu0 %v239
      %1223 = vmatpush.msra.mxu0 %v235
      %1224 = vmatpush.msra.mxu0 %v231
      %1225 = vmatpush.msra.mxu0 %v227
      %1226 = vmatpush.msra.mxu0 %v223
      %1227 = vmatpush.msra.mxu0 %v219
      %1228 = vmatpush.msra.mxu0 %v215
      %1229 = vmatpush.msra.mxu0 %v211
      %1230 = vmatpush.msra.mxu0 %v207
      %1231 = vmatpush.msra.mxu0 %v203
      %1232 = vmatmul.f32.gmra.mxu0 %v1173
      %v1233 = vpop.f32.mrf.mxu0
      %v1234 = vadd.f32 0.0, %v1233
      %1235 = vdwg.mxu0
      %1236 = vmatpush.msra.mxu0 %v264
      %1237 = vmatpush.msra.mxu0 %v260
      %1238 = vmatpush.msra.mxu0 %v256
      %1239 = vmatpush.msra.mxu0 %v252
      %1240 = vmatpush.msra.mxu0 %v248
      %1241 = vmatpush.msra.mxu0 %v244
      %1242 = vmatpush.msra.mxu0 %v240
      %1243 = vmatpush.msra.mxu0 %v236
      %1244 = vmatpush.msra.mxu0 %v232
      %1245 = vmatpush.msra.mxu0 %v228
      %1246 = vmatpush.msra.mxu0 %v224
      %1247 = vmatpush.msra.mxu0 %v220
      %1248 = vmatpush.msra.mxu0 %v216
      %1249 = vmatpush.msra.mxu0 %v212
      %1250 = vmatpush.msra.mxu0 %v208
      %1251 = vmatpush.msra.mxu0 %v204
      %1252 = vmatmul.f32.gmra.mxu0 %v1173
      %v1253 = vpop.f32.mrf.mxu0
      %v1254 = vadd.f32 0.0, %v1253
      %1255 = vdwg.mxu0
      %v1256 = vadd.f32 %v322, %v1194
      %v1257 = vadd.f32 %v363, %v1214
      %v1258 = vadd.f32 %v404, %v1234
      %v1259 = vadd.f32 %v445, %v1254
      %v1260 = vmul.f32 %v1256, 0.5
      %v1261 = vtanh.pop %v1260
      %v1262 = vadd.f32 %v1261, 1.0
      %v1263 = vmul.f32 %v1262, 0.5
      %v1264 = vmul.f32 %v1257, 0.5
      %v1265 = vtanh.pop %v1264
      %v1266 = vadd.f32 %v1265, 1.0
      %v1267 = vmul.f32 %v1266, 0.5
      %v1268 = vtanh.pop %v1258
      %v1269 = vmul.f32 %v1259, 0.5
      %v1270 = vtanh.pop %v1269
      %v1271 = vadd.f32 %v1270, 1.0
      %v1272 = vmul.f32 %v1271, 0.5
      %v1273 = vmul.f32 %v1267, %v1171
      %v1274 = vmul.f32 %v1263, %v1268
      %v1275 = vadd.f32 %v1273, %v1274
      %v1276 = vtanh.pop %v1275
      %v1277 = vmul.f32 %v1272, %v1276
      %s1278 = scalar_lea.vmem [#allocation4], 56
      %1279 = vst [vmem:[%s1278] sm:$0xff] %v1277
      %1280 = vst [vmem:[#allocation2] sm:$0xff] %v1277
      %1281 = vst [vmem:[#allocation3] sm:$0xff] %v1275
    $region65: #{tpu_custom_call.1} parent=1 // pred_fallthru
      _
    // Predicated region
    $region66: #{tpu_custom_call.1} parent=1 // pred_check
      _
    $region67: #{tpu_custom_call.1} parent=1 // pred_check_branch
      %1283 = sbr.rel (%p126) target = $region69
    $region68: #{tpu_custom_call.1} parent=1 // pred_region
      %v1284 = vld [vmem:[#allocation2] sm:$0xff]
      %1285 = vst [vmem:[#allocation17] sm:$0xff] %v1284
      %v1286 = vld [vmem:[#allocation3] sm:$0xff]
      %1287 = vst [vmem:[#allocation19] sm:$0xff] %v1286
    $region69: #{tpu_custom_call.1} parent=1 // pred_fallthru
      _
    %v1288 = vld [vmem:[#allocation4] sm:$0xff]
    %v1289 = vld [vmem:[#allocation4 + $0x8] sm:$0xff]
    %v1290 = vld [vmem:[#allocation4 + $0x10] sm:$0xff]
    %v1291 = vld [vmem:[#allocation4 + $0x18] sm:$0xff]
    %v1292 = vld [vmem:[#allocation4 + $0x20] sm:$0xff]
    %v1293 = vld [vmem:[#allocation4 + $0x28] sm:$0xff]
    %v1294 = vld [vmem:[#allocation4 + $0x30] sm:$0xff]
    %v1295 = vld [vmem:[#allocation4 + $0x38] sm:$0xff]
    %v1296 = vld [vmem:[#allocation14] sm:$0xff]
    %v1297 = vld [vmem:[#allocation14 + $0x8] sm:$0xff]
    %v1298 = vld [vmem:[#allocation14 + $0x10] sm:$0xff]
    %v1299 = vld [vmem:[#allocation14 + $0x18] sm:$0xff]
    %v1300 = vld [vmem:[#allocation14 + $0x20] sm:$0xff]
    %v1301 = vld [vmem:[#allocation14 + $0x28] sm:$0xff]
    %v1302 = vld [vmem:[#allocation14 + $0x30] sm:$0xff]
    %v1303 = vld [vmem:[#allocation14 + $0x38] sm:$0xff]
    %v1304 = vld [vmem:[#allocation14 + $0x40] sm:$0xff]
    %v1305 = vld [vmem:[#allocation14 + $0x48] sm:$0xff]
    %v1306 = vld [vmem:[#allocation14 + $0x50] sm:$0xff]
    %v1307 = vld [vmem:[#allocation14 + $0x58] sm:$0xff]
    %v1308 = vld [vmem:[#allocation14 + $0x60] sm:$0xff]
    %v1309 = vld [vmem:[#allocation14 + $0x68] sm:$0xff]
    %v1310 = vld [vmem:[#allocation14 + $0x70] sm:$0xff]
    %v1311 = vld [vmem:[#allocation14 + $0x78] sm:$0xff]
    %v1312 = vld [vmem:[%s7] sm:$0x1]
    %v1314 = vperm.slane %v1312, 0
    %1316 = vmatpush.msra.mxu0 %v1311
    %1317 = vmatpush.msra.mxu0 %v1310
    %1318 = vmatpush.msra.mxu0 %v1309
    %1319 = vmatpush.msra.mxu0 %v1308
    %1320 = vmatpush.msra.mxu0 %v1307
    %1321 = vmatpush.msra.mxu0 %v1306
    %1322 = vmatpush.msra.mxu0 %v1305
    %1323 = vmatpush.msra.mxu0 %v1304
    %1324 = vmatpush.msra.mxu0 %v1303
    %1325 = vmatpush.msra.mxu0 %v1302
    %1326 = vmatpush.msra.mxu0 %v1301
    %1327 = vmatpush.msra.mxu0 %v1300
    %1328 = vmatpush.msra.mxu0 %v1299
    %1329 = vmatpush.msra.mxu0 %v1298
    %1330 = vmatpush.msra.mxu0 %v1297
    %1331 = vmatpush.msra.mxu0 %v1296
    %1332 = vmatmul.f32.gmra.mxu0 %v1288
    %v1333 = vpop.f32.mrf.mxu0
    %v1334 = vadd.f32 %v1314, %v1333
    %1335 = vmatmul.f32.gmra.mxu0 %v1289
    %v1336 = vpop.f32.mrf.mxu0
    %v1337 = vadd.f32 %v1314, %v1336
    %1338 = vmatmul.f32.gmra.mxu0 %v1290
    %v1339 = vpop.f32.mrf.mxu0
    %v1340 = vadd.f32 %v1314, %v1339
    %1341 = vmatmul.f32.gmra.mxu0 %v1291
    %v1342 = vpop.f32.mrf.mxu0
    %v1343 = vadd.f32 %v1314, %v1342
    %1344 = vmatmul.f32.gmra.mxu0 %v1292
    %v1345 = vpop.f32.mrf.mxu0
    %v1346 = vadd.f32 %v1314, %v1345
    %1347 = vmatmul.f32.gmra.mxu0 %v1293
    %v1348 = vpop.f32.mrf.mxu0
    %v1349 = vadd.f32 %v1314, %v1348
    %1350 = vmatmul.f32.gmra.mxu0 %v1294
    %v1351 = vpop.f32.mrf.mxu0
    %v1352 = vadd.f32 %v1314, %v1351
    %1353 = vmatmul.f32.gmra.mxu0 %v1295
    %v1354 = vpop.f32.mrf.mxu0
    %v1355 = vadd.f32 %v1314, %v1354
    %1356 = vdwg.mxu0
    %1357 = vst [vmem:[#allocation16] sm:$0xff] %v1334
    %1358 = vst [vmem:[#allocation16 + $0x8] sm:$0xff] %v1337
    %1359 = vst [vmem:[#allocation16 + $0x10] sm:$0xff] %v1340
    %1360 = vst [vmem:[#allocation16 + $0x18] sm:$0xff] %v1343
    %1361 = vst [vmem:[#allocation16 + $0x20] sm:$0xff] %v1346
    %1362 = vst [vmem:[#allocation16 + $0x28] sm:$0xff] %v1349
    %1363 = vst [vmem:[#allocation16 + $0x30] sm:$0xff] %v1352
    %1364 = vst [vmem:[#allocation16 + $0x38] sm:$0xff] %v1355
    // Predicated region
    $region70: #{tpu_custom_call.1} parent=1 // pred_check
      _
    $region71: #{tpu_custom_call.1} parent=1 // pred_check_branch
      %1366 = sbr.rel (0) target = $region73
    $region72: #{tpu_custom_call.1} parent=1 // pred_region
      %1368 = vsyncadd [#allocation7], 0
      %s1369 = sshll.u32 [#allocation16], 4
      %s1370 = int_to_ptr.vmem [resolvable:$true] %s1369
      %s1371 = sshll.u32 %s8, 4
      %s1372 = int_to_ptr.hbm [resolvable:$true] %s1371
      %1377 = dma.vmem_to_hbm [thread:$0]  %s1370, 1024, %s1372, [#allocation7], 128, 128, 8
    $region73: #{tpu_custom_call.1} parent=1 // pred_fallthru
      _
    // Predicated region
    $region74: #{tpu_custom_call.1} parent=1 // pred_check
      _
    $region75: #{tpu_custom_call.1} parent=1 // pred_check_branch
      %1379 = sbr.rel (0) target = $region77
    $region76: #{tpu_custom_call.1} parent=1 // pred_region
      %1381 = vsyncadd [#allocation18], 0
      %s1383 = sshll.u32 [#allocation17], 4
      %s1384 = int_to_ptr.vmem [resolvable:$true] %s1383
      %s1385 = sshll.u32 %s9, 4
      %s1386 = int_to_ptr.hbm [resolvable:$true] %s1385
      %1388 = dma.vmem_to_hbm [thread:$0]  %s1384, 128, %s1386, [#allocation18]
    $region77: #{tpu_custom_call.1} parent=1 // pred_fallthru
      _
    // Predicated region
    $region78: #{tpu_custom_call.1} parent=1 // pred_check
      _
    $region79: #{tpu_custom_call.1} parent=1 // pred_check_branch
      %1390 = sbr.rel (0) target = $region81
    $region80: #{tpu_custom_call.1} parent=1 // pred_region
      %1392 = vsyncadd [#allocation18], 0
      %s1394 = sshll.u32 [#allocation19], 4
      %s1395 = int_to_ptr.vmem [resolvable:$true] %s1394
      %s1396 = sshll.u32 %s10, 4
      %s1397 = int_to_ptr.hbm [resolvable:$true] %s1396
      %1399 = dma.vmem_to_hbm [thread:$0]  %s1395, 128, %s1397, [#allocation18]
    $region81: #{tpu_custom_call.1} parent=1 // pred_fallthru
      _
    // Predicated region
    $region82: #{tpu_custom_call.1} parent=1 // pred_check
      _
    $region83: #{tpu_custom_call.1} parent=1 // pred_check_branch
      %1401 = sbr.rel (0) target = $region85
    $region84: #{tpu_custom_call.1} parent=1 // pred_region
      %1403 = dma.done [#allocation7], 1024
    $region85: #{tpu_custom_call.1} parent=1 // pred_fallthru
      _
    // Predicated region
    $region86: #{tpu_custom_call.1} parent=1 // pred_check
      _
    $region87: #{tpu_custom_call.1} parent=1 // pred_check_branch
      %1405 = sbr.rel (0) target = $region89
    $region88: #{tpu_custom_call.1} parent=1 // pred_region
      %1407 = dma.done [#allocation18], 128
    $region89: #{tpu_custom_call.1} parent=1 // pred_fallthru
      _
    // Predicated region
    $region90: #{tpu_custom_call.1} parent=1 // pred_check
      _
    $region91: #{tpu_custom_call.1} parent=1 // pred_check_branch
      %1409 = sbr.rel (0) target = $region93
    $region92: #{tpu_custom_call.1} parent=1 // pred_region
      %1411 = dma.done [#allocation18], 128
    $region93: #{tpu_custom_call.1} parent=1 // pred_fallthru
      _
    %1412 = vsyncpa [#allocation6], 1
    %1413 = vsyncpa [#allocation9], 1
    %1414 = vsyncpa [#allocation12], 1
    %1415 = vsyncpa [#allocation15], 1
    %1416 = vsyncpa [#allocation7], 1
    %1417 = vsyncpa [#allocation18], 1

</llo_original>
